<compile_context>
chip_gen: v7x
topology: tpu7x:2x2x1
jax: 0.10.0
libtpu: 0.0.40
codegen_flags: <defaults>
</compile_context>

<pallas_src>
import functools

import jax
import jax.numpy as jnp
from jax.experimental import pallas as pl
from jax.experimental.pallas import tpu as pltpu


_SQRT_HALF = 0.7071067811865476


def _erf_approx(x, approx_recip):
    # Abramowitz & Stegun 7.1.26 rational approximation, |err| <= 1.5e-7.
    # Only abs/mul/exp/where (+ one reciprocal) so no reliance on an erf lowering.
    p = 0.3275911
    a1, a2, a3, a4, a5 = (0.254829592, -0.284496736, 1.421413741,
                          -1.453152027, 1.061405429)
    ax = jnp.abs(x)
    den = 1.0 + p * ax
    if approx_recip:
        t = pl.reciprocal(den, approx=True)   # EUP slot, off the VPU critical path
    else:
        t = 1.0 / den                         # exact divide for the f32-strict path
    poly = ((((a5 * t + a4) * t + a3) * t + a2) * t + a1) * t
    e = 1.0 - poly * jnp.exp(-ax * ax)
    return jnp.where(x >= 0, e, -e)


def _gelu_exact(x, approx_recip):
    # PyTorch nn.GELU() default (erf form), not the tanh approximation.
    return 0.5 * x * (1.0 + _erf_approx(x * _SQRT_HALF, approx_recip))


def _mlp_fused_kernel(x_ref, w1_ref, w2_ref, p_ref, b2_ref, o_ref,
                      h_ref, a_ref, *, H, W, approx_recip):
    # x_ref : (bb, H*W, Cin)   unpadded pixels, channels-last, input dtype (f32)
    # w1_ref: (Cin, Chid)      fc1 weight, compute dtype
    # w2_ref: (Chid, Cout)     fc2 weight, compute dtype
    # p_ref : (11, Chid)       row0=fc1 bias, rows1..9=dw taps (kh*3+kw), row10=dw bias
    # b2_ref: (1, Cout)        fc2 bias, f32
    # o_ref : (bb, H*W, Cout)  output, f32 (exact size: no channel/column padding)
    # h_ref : (H+2, Wq, Chid)  zero-haloed fc1 activation slab (f32 scratch), Wq>=W+2
    # a_ref : (H*W, Chid)      GELU(dwconv) activation scratch, compute dtype
    bb = x_ref.shape[0]
    Chid = w1_ref.shape[1]
    cdt = w1_ref.dtype

    w1 = w1_ref[...]
    w2 = w2_ref[...]
    b2 = b2_ref[...]
    params = p_ref[...]                                      # (11, Chid) f32
    b1 = params[0:1, :]
    # Hoisted sublane splats of the 9 per-channel taps and the dw bias
    # (broadcasts are not CSE'd by JAX, so keep them out of the row loop).
    taps = [jnp.broadcast_to(params[1 + k:2 + k, :], (W, Chid)) for k in range(9)]
    bdw = jnp.broadcast_to(params[10:11, :], (W, Chid))

    # Zero the slab once per grid step; the interior is fully overwritten per
    # image below, so only the 1-pixel halo actually relies on this.
    h_ref[...] = jnp.zeros(h_ref.shape, h_ref.dtype)

    for img in range(bb):
        # ---- fc1: 1x1 conv == one (H*W, Cin) @ (Cin, Chid) MXU matmul over
        # real pixels only; bias added here (the halo stays exactly zero, which
        # is the depthwise conv's zero padding). ----
        h = jnp.dot(x_ref[img].astype(cdt), w1,
                    preferred_element_type=jnp.float32) + b1       # (H*W, Chid) f32
        # In-kernel padding: scatter rows into the interior of the haloed slab.
        for r in range(H):
            h_ref[r + 1, 1:1 + W, :] = h[r * W:(r + 1) * W, :]

        # ---- depthwise 3x3 conv + exact GELU, banded one image row at a time.
        # 3 aligned whole-page reads per band; column shifts are in-register
        # value slices; accumulator + temps stay within the vreg file. ----
        for r in range(H):
            acc = bdw
            for kh in range(3):
                page = h_ref[r + kh]                      # (Wq, Chid), aligned read
                for kw in range(3):
                    acc = acc + page[kw:kw + W, :] * taps[kh * 3 + kw]
            a_row = _gelu_exact(acc, approx_recip)
            a_ref[r * W:(r + 1) * W, :] = a_row.astype(cdt)   # aligned compact store

        # ---- fc2: 1x1 conv == one (H*W, Chid) @ (Chid, Cout) MXU matmul ----
        y = jnp.dot(a_ref[...], w2, preferred_element_type=jnp.float32)
        o_ref[img] = (y + b2).astype(o_ref.dtype)


def mlp_forward(x, w_fc1, b_fc1, w_dw, b_dw, w_fc2, b_fc2,
                *, compute_dtype=jnp.bfloat16):
    """Forward of Mlp: fc1 -> DWConv(3x3 depthwise) -> GELU -> fc2.

    x: [B, Cin, H, W] float32 (NCHW, as in the PyTorch module).
    Returns [B, Cout, H, W] float32.
    """
    B, Cin, H, W = x.shape
    Chid = w_fc1.shape[0]
    Cout = w_fc2.shape[0]
    assert w_fc1.shape == (Chid, Cin, 1, 1)
    assert w_dw.shape == (Chid, 1, 3, 3)
    assert w_fc2.shape == (Cout, Chid, 1, 1)

    HW = H * W
    Hp = H + 2
    Wq = ((W + 2 + 7) // 8) * 8        # haloed page width, sublane aligned

    # Batch blocking: keep >=2 "parallel" grid steps (both v7x TensorCores busy)
    # while larger B packs several images per step to amortize step overhead.
    bb = B // 2 if (B >= 2 and B % 2 == 0) else 1
    grid = (B // bb,)

    # NCHW -> channels-last flat pixels.  Single XLA transpose; no pad, no
    # slice, no dtype cast in the wrapper (padding and the bf16 cast live
    # in-kernel).  TODO(synk): a channels-last surrounding model would remove
    # this transpose and the one on the output entirely.
    x_cl = jnp.transpose(x, (0, 2, 3, 1)).reshape(B, HW, Cin)

    # 1x1 convs as matmuls; small per-hidden-channel params merged into one
    # (11, Chid) array -> a single resident DMA channel.
    w1 = w_fc1.reshape(Chid, Cin).T.astype(compute_dtype)          # (Cin, Chid)
    w2 = w_fc2.reshape(Cout, Chid).T.astype(compute_dtype)         # (Chid, Cout)
    p_hid = jnp.concatenate(
        [b_fc1.reshape(1, Chid),
         w_dw.reshape(Chid, 9).T,        # row k = kh*3 + kw
         b_dw.reshape(1, Chid)], axis=0).astype(jnp.float32)       # (11, Chid)
    b2 = b_fc2.astype(jnp.float32).reshape(1, Cout)

    approx_recip = bool(jnp.dtype(compute_dtype) != jnp.dtype(jnp.float32))

    itemsize = jnp.dtype(compute_dtype).itemsize
    flops = int(B * HW * (2 * Cin * Chid + 2 * 9 * Chid + 2 * Chid * Cout))
    bytes_accessed = int(B * HW * (Cin + Cout) * 4
                         + (Cin * Chid + Chid * Cout) * itemsize
                         + (11 * Chid + Cout) * 4)
    cost = pl.CostEstimate(flops=flops, transcendentals=int(B * HW * Chid),
                           bytes_accessed=bytes_accessed)

    out_flat = pl.pallas_call(
        functools.partial(_mlp_fused_kernel, H=H, W=W, approx_recip=approx_recip),
        out_shape=jax.ShapeDtypeStruct((B, HW, Cout), jnp.float32),
        grid_spec=pltpu.PrefetchScalarGridSpec(
            num_scalar_prefetch=0,
            grid=grid,
            in_specs=[
                pl.BlockSpec((bb, HW, Cin), lambda i: (i, 0, 0)),
                pl.BlockSpec((Cin, Chid), lambda i: (0, 0)),
                pl.BlockSpec((Chid, Cout), lambda i: (0, 0)),
                pl.BlockSpec((11, Chid), lambda i: (0, 0)),
                pl.BlockSpec((1, Cout), lambda i: (0, 0)),
            ],
            out_specs=pl.BlockSpec((bb, HW, Cout), lambda i: (i, 0, 0)),
            scratch_shapes=[
                pltpu.VMEM((Hp, Wq, Chid), jnp.float32),      # haloed fc1 slab
                pltpu.VMEM((HW, Chid), compute_dtype),        # GELU activation
            ],
        ),
        compiler_params=pltpu.CompilerParams(
            dimension_semantics=("parallel",),
            vmem_limit_bytes=32 * 1024 * 1024),
        cost_estimate=cost,
    )(x_cl, w1, w2, p_hid, b2)

    out = out_flat.reshape(B, H, W, Cout)
    return jnp.transpose(out, (0, 3, 1, 2))                       # back to NCHW


def _reference(x, w_fc1, b_fc1, w_dw, b_dw, w_fc2, b_fc2):
    """Pure-JAX reference of the Mlp forward (Dropout(0.0) == identity)."""
    dn = ("NCHW", "OIHW", "NCHW")
    hi = jax.lax.conv_general_dilated(
        x, w_fc1, (1, 1), ((0, 0), (0, 0)), dimension_numbers=dn,
        precision=jax.lax.Precision.HIGHEST) + b_fc1[None, :, None, None]
    hd = jax.lax.conv_general_dilated(
        hi, w_dw, (1, 1), ((1, 1), (1, 1)), dimension_numbers=dn,
        feature_group_count=hi.shape[1],
        precision=jax.lax.Precision.HIGHEST) + b_dw[None, :, None, None]
    ha = jax.nn.gelu(hd, approximate=False)
    y = jax.lax.conv_general_dilated(
        ha, w_fc2, (1, 1), ((0, 0), (0, 0)), dimension_numbers=dn,
        precision=jax.lax.Precision.HIGHEST) + b_fc2[None, :, None, None]
    return y


if __name__ == "__main__":
    # Small shapes consistent with the module: Mlp(in_features=32,
    # hidden_features=128) on a (2, 32, 16, 16) NCHW feature map.
    B, Cin, H, W = 2, 32, 16, 16
    Chid, Cout = 128, 32

    key = jax.random.PRNGKey(0)
    kx, k1, kb1, kd, kbd, k2, kb2 = jax.random.split(key, 7)

    x = jax.random.normal(kx, (B, Cin, H, W), dtype=jnp.float32)

    # Conv2d init per the module's _init_weights (fan_out rule); small non-zero
    # biases so every bias path is exercised.
    w_fc1 = jax.random.normal(k1, (Chid, Cin, 1, 1), jnp.float32) * jnp.sqrt(2.0 / Chid)
    b_fc1 = 0.05 * jax.random.normal(kb1, (Chid,), jnp.float32)
    w_dw = jax.random.normal(kd, (Chid, 1, 3, 3), jnp.float32) * jnp.sqrt(2.0 / 9.0)
    b_dw = 0.05 * jax.random.normal(kbd, (Chid,), jnp.float32)
    w_fc2 = jax.random.normal(k2, (Cout, Chid, 1, 1), jnp.float32) * jnp.sqrt(2.0 / Cout)
    b_fc2 = 0.05 * jax.random.normal(kb2, (Cout,), jnp.float32)

    ref = _reference(x, w_fc1, b_fc1, w_dw, b_dw, w_fc2, b_fc2)

    # Strict check: f32 matmul inputs, exact divide in the erf.
    out_f32 = jax.block_until_ready(
        mlp_forward(x, w_fc1, b_fc1, w_dw, b_dw, w_fc2, b_fc2,
                    compute_dtype=jnp.float32))
    assert out_f32.shape == (B, Cout, H, W)
    assert jnp.allclose(out_f32, ref, atol=2e-4, rtol=2e-4), \
        "f32 kernel mismatch vs JAX reference"

    # Fast path: bf16 matmul inputs (MXU-native), f32 accumulation, approx
    # reciprocal in the erf.  Error budget dominated by the bf16 casts.
    out_bf16 = jax.block_until_ready(
        mlp_forward(x, w_fc1, b_fc1, w_dw, b_dw, w_fc2, b_fc2,
                    compute_dtype=jnp.bfloat16))
    assert out_bf16.shape == (B, Cout, H, W)
    max_err = float(jnp.max(jnp.abs(out_bf16 - ref)))
    assert max_err < 1e-1, \
        f"bf16 kernel mismatch vs JAX reference (max abs err {max_err})"

    print("KERNEL_OK")
</pallas_src>

<mosaic_0001>
module attributes {stable_mosaic.version = 11 : i64} {
  func.func @_mlp_fused_kernel(%arg0: i32, %arg1: memref<1x256x32xf32, #tpu.memory_space<vmem>>, %arg2: memref<32x128xf32, #tpu.memory_space<vmem>>, %arg3: memref<128x32xf32, #tpu.memory_space<vmem>>, %arg4: memref<11x128xf32, #tpu.memory_space<vmem>>, %arg5: memref<1x32xf32, #tpu.memory_space<vmem>>, %arg6: memref<1x256x32xf32, #tpu.memory_space<vmem>>, %arg7: memref<18x24x128xf32, #tpu.memory_space<vmem>>, %arg8: memref<256x128xf32, #tpu.memory_space<vmem>>) attributes {dimension_semantics = [#tpu.dimension_semantics<parallel>], iteration_bounds = array<i64: 2>, scalar_prefetch = 0 : i64, scratch_operands = 2 : i64, tpu.core_type = #tpu.core_type<tc>, window_params = [{transform_indices = @transform_0, window_bounds = array<i64: 1, 256, 32>}, {pipeline_mode = #tpu.pipeline_mode<synchronous>, transform_indices = @transform_1, window_bounds = array<i64: 32, 128>}, {pipeline_mode = #tpu.pipeline_mode<synchronous>, transform_indices = @transform_2, window_bounds = array<i64: 128, 32>}, {pipeline_mode = #tpu.pipeline_mode<synchronous>, transform_indices = @transform_3, window_bounds = array<i64: 11, 128>}, {pipeline_mode = #tpu.pipeline_mode<synchronous>, transform_indices = @transform_4, window_bounds = array<i64: 1, 32>}, {transform_indices = @transform_5, window_bounds = array<i64: 1, 256, 32>}]} {
    %c0 = arith.constant 0 : index
    %c0_0 = arith.constant 0 : index
    %0 = vector.load %arg2[%c0, %c0_0] : memref<32x128xf32, #tpu.memory_space<vmem>>, vector<32x128xf32>
    %c0_1 = arith.constant 0 : index
    %c0_2 = arith.constant 0 : index
    %1 = vector.load %arg3[%c0_1, %c0_2] : memref<128x32xf32, #tpu.memory_space<vmem>>, vector<128x32xf32>
    %c0_3 = arith.constant 0 : index
    %c0_4 = arith.constant 0 : index
    %2 = vector.load %arg5[%c0_3, %c0_4] : memref<1x32xf32, #tpu.memory_space<vmem>>, vector<1x32xf32>
    %c0_5 = arith.constant 0 : index
    %c0_6 = arith.constant 0 : index
    %3 = vector.load %arg4[%c0_5, %c0_6] : memref<11x128xf32, #tpu.memory_space<vmem>>, vector<11x128xf32>
    %4 = vector.extract_strided_slice %3 {offsets = [0, 0], sizes = [1, 128], strides = [1, 1]} : vector<11x128xf32> to vector<1x128xf32>
    %5 = vector.extract_strided_slice %3 {offsets = [1, 0], sizes = [1, 128], strides = [1, 1]} : vector<11x128xf32> to vector<1x128xf32>
    %6 = vector.shape_cast %5 : vector<1x128xf32> to vector<1x128xf32>
    %7 = vector.broadcast %6 : vector<1x128xf32> to vector<16x128xf32>
    %8 = vector.extract_strided_slice %3 {offsets = [2, 0], sizes = [1, 128], strides = [1, 1]} : vector<11x128xf32> to vector<1x128xf32>
    %9 = vector.shape_cast %8 : vector<1x128xf32> to vector<1x128xf32>
    %10 = vector.broadcast %9 : vector<1x128xf32> to vector<16x128xf32>
    %11 = vector.extract_strided_slice %3 {offsets = [3, 0], sizes = [1, 128], strides = [1, 1]} : vector<11x128xf32> to vector<1x128xf32>
    %12 = vector.shape_cast %11 : vector<1x128xf32> to vector<1x128xf32>
    %13 = vector.broadcast %12 : vector<1x128xf32> to vector<16x128xf32>
    %14 = vector.extract_strided_slice %3 {offsets = [4, 0], sizes = [1, 128], strides = [1, 1]} : vector<11x128xf32> to vector<1x128xf32>
    %15 = vector.shape_cast %14 : vector<1x128xf32> to vector<1x128xf32>
    %16 = vector.broadcast %15 : vector<1x128xf32> to vector<16x128xf32>
    %17 = vector.extract_strided_slice %3 {offsets = [5, 0], sizes = [1, 128], strides = [1, 1]} : vector<11x128xf32> to vector<1x128xf32>
    %18 = vector.shape_cast %17 : vector<1x128xf32> to vector<1x128xf32>
    %19 = vector.broadcast %18 : vector<1x128xf32> to vector<16x128xf32>
    %20 = vector.extract_strided_slice %3 {offsets = [6, 0], sizes = [1, 128], strides = [1, 1]} : vector<11x128xf32> to vector<1x128xf32>
    %21 = vector.shape_cast %20 : vector<1x128xf32> to vector<1x128xf32>
    %22 = vector.broadcast %21 : vector<1x128xf32> to vector<16x128xf32>
    %23 = vector.extract_strided_slice %3 {offsets = [7, 0], sizes = [1, 128], strides = [1, 1]} : vector<11x128xf32> to vector<1x128xf32>
    %24 = vector.shape_cast %23 : vector<1x128xf32> to vector<1x128xf32>
    %25 = vector.broadcast %24 : vector<1x128xf32> to vector<16x128xf32>
    %26 = vector.extract_strided_slice %3 {offsets = [8, 0], sizes = [1, 128], strides = [1, 1]} : vector<11x128xf32> to vector<1x128xf32>
    %27 = vector.shape_cast %26 : vector<1x128xf32> to vector<1x128xf32>
    %28 = vector.broadcast %27 : vector<1x128xf32> to vector<16x128xf32>
    %29 = vector.extract_strided_slice %3 {offsets = [9, 0], sizes = [1, 128], strides = [1, 1]} : vector<11x128xf32> to vector<1x128xf32>
    %30 = vector.shape_cast %29 : vector<1x128xf32> to vector<1x128xf32>
    %31 = vector.broadcast %30 : vector<1x128xf32> to vector<16x128xf32>
    %32 = vector.extract_strided_slice %3 {offsets = [10, 0], sizes = [1, 128], strides = [1, 1]} : vector<11x128xf32> to vector<1x128xf32>
    %33 = vector.shape_cast %32 : vector<1x128xf32> to vector<1x128xf32>
    %34 = vector.broadcast %33 : vector<1x128xf32> to vector<16x128xf32>
    %cst = arith.constant 0.000000e+00 : f32
    %35 = vector.broadcast %cst : f32 to vector<18x24x128xf32>
    %c0_7 = arith.constant 0 : index
    %c0_8 = arith.constant 0 : index
    %c0_9 = arith.constant 0 : index
    %36 = vector.load %arg7[%c0_7, %c0_8, %c0_9] : memref<18x24x128xf32, #tpu.memory_space<vmem>>, vector<18x24x128xf32>
    tpu.vector_store %arg7[%c0_7, %c0_8, %c0_9], %35 {strides = array<i32>} : memref<18x24x128xf32, #tpu.memory_space<vmem>>, vector<18x24x128xf32>,
    %c0_10 = arith.constant 0 : index
    %c0_11 = arith.constant 0 : index
    %c0_12 = arith.constant 0 : index
    %37 = vector.load %arg1[%c0_10, %c0_11, %c0_12] : memref<1x256x32xf32, #tpu.memory_space<vmem>>, vector<1x256x32xf32>
    %38 = vector.shape_cast %37 : vector<1x256x32xf32> to vector<256x32xf32>
    %cst_13 = arith.constant dense<0.000000e+00> : vector<256x128xf32>
    %39 = tpu.matmul %38, %0, %cst_13 {dimension_numbers = #tpu.dot_dimension_numbers<[1], [0], [0], [1], [0, 0, 1, 1], [], []>} : vector<256x32xf32>, vector<32x128xf32>, vector<256x128xf32> -> vector<256x128xf32>
    %40 = vector.broadcast %4 : vector<1x128xf32> to vector<256x128xf32>
    %41 = arith.addf %39, %40 : vector<256x128xf32>
    %42 = vector.extract_strided_slice %41 {offsets = [0, 0], sizes = [16, 128], strides = [1, 1]} : vector<256x128xf32> to vector<16x128xf32>
    %c1 = arith.constant 1 : index
    %c1_14 = arith.constant 1 : index
    %c0_15 = arith.constant 0 : index
    %43 = vector.load %arg7[%c1, %c1_14, %c0_15] : memref<18x24x128xf32, #tpu.memory_space<vmem>>, vector<1x16x128xf32>
    %44 = vector.shape_cast %43 : vector<1x16x128xf32> to vector<16x128xf32>
    %45 = vector.shape_cast %42 : vector<16x128xf32> to vector<1x16x128xf32>
    tpu.vector_store %arg7[%c1, %c1_14, %c0_15], %45 {strides = array<i32>} : memref<18x24x128xf32, #tpu.memory_space<vmem>>, vector<1x16x128xf32>,
    %46 = vector.extract_strided_slice %41 {offsets = [16, 0], sizes = [16, 128], strides = [1, 1]} : vector<256x128xf32> to vector<16x128xf32>
    %c2 = arith.constant 2 : index
    %c1_16 = arith.constant 1 : index
    %c0_17 = arith.constant 0 : index
    %47 = vector.load %arg7[%c2, %c1_16, %c0_17] : memref<18x24x128xf32, #tpu.memory_space<vmem>>, vector<1x16x128xf32>
    %48 = vector.shape_cast %47 : vector<1x16x128xf32> to vector<16x128xf32>
    %49 = vector.shape_cast %46 : vector<16x128xf32> to vector<1x16x128xf32>
    tpu.vector_store %arg7[%c2, %c1_16, %c0_17], %49 {strides = array<i32>} : memref<18x24x128xf32, #tpu.memory_space<vmem>>, vector<1x16x128xf32>,
    %50 = vector.extract_strided_slice %41 {offsets = [32, 0], sizes = [16, 128], strides = [1, 1]} : vector<256x128xf32> to vector<16x128xf32>
    %c3 = arith.constant 3 : index
    %c1_18 = arith.constant 1 : index
    %c0_19 = arith.constant 0 : index
    %51 = vector.load %arg7[%c3, %c1_18, %c0_19] : memref<18x24x128xf32, #tpu.memory_space<vmem>>, vector<1x16x128xf32>
    %52 = vector.shape_cast %51 : vector<1x16x128xf32> to vector<16x128xf32>
    %53 = vector.shape_cast %50 : vector<16x128xf32> to vector<1x16x128xf32>
    tpu.vector_store %arg7[%c3, %c1_18, %c0_19], %53 {strides = array<i32>} : memref<18x24x128xf32, #tpu.memory_space<vmem>>, vector<1x16x128xf32>,
    %54 = vector.extract_strided_slice %41 {offsets = [48, 0], sizes = [16, 128], strides = [1, 1]} : vector<256x128xf32> to vector<16x128xf32>
    %c4 = arith.constant 4 : index
    %c1_20 = arith.constant 1 : index
    %c0_21 = arith.constant 0 : index
    %55 = vector.load %arg7[%c4, %c1_20, %c0_21] : memref<18x24x128xf32, #tpu.memory_space<vmem>>, vector<1x16x128xf32>
    %56 = vector.shape_cast %55 : vector<1x16x128xf32> to vector<16x128xf32>
    %57 = vector.shape_cast %54 : vector<16x128xf32> to vector<1x16x128xf32>
    tpu.vector_store %arg7[%c4, %c1_20, %c0_21], %57 {strides = array<i32>} : memref<18x24x128xf32, #tpu.memory_space<vmem>>, vector<1x16x128xf32>,
    %58 = vector.extract_strided_slice %41 {offsets = [64, 0], sizes = [16, 128], strides = [1, 1]} : vector<256x128xf32> to vector<16x128xf32>
    %c5 = arith.constant 5 : index
    %c1_22 = arith.constant 1 : index
    %c0_23 = arith.constant 0 : index
    %59 = vector.load %arg7[%c5, %c1_22, %c0_23] : memref<18x24x128xf32, #tpu.memory_space<vmem>>, vector<1x16x128xf32>
    %60 = vector.shape_cast %59 : vector<1x16x128xf32> to vector<16x128xf32>
    %61 = vector.shape_cast %58 : vector<16x128xf32> to vector<1x16x128xf32>
    tpu.vector_store %arg7[%c5, %c1_22, %c0_23], %61 {strides = array<i32>} : memref<18x24x128xf32, #tpu.memory_space<vmem>>, vector<1x16x128xf32>,
    %62 = vector.extract_strided_slice %41 {offsets = [80, 0], sizes = [16, 128], strides = [1, 1]} : vector<256x128xf32> to vector<16x128xf32>
    %c6 = arith.constant 6 : index
    %c1_24 = arith.constant 1 : index
    %c0_25 = arith.constant 0 : index
    %63 = vector.load %arg7[%c6, %c1_24, %c0_25] : memref<18x24x128xf32, #tpu.memory_space<vmem>>, vector<1x16x128xf32>
    %64 = vector.shape_cast %63 : vector<1x16x128xf32> to vector<16x128xf32>
    %65 = vector.shape_cast %62 : vector<16x128xf32> to vector<1x16x128xf32>
    tpu.vector_store %arg7[%c6, %c1_24, %c0_25], %65 {strides = array<i32>} : memref<18x24x128xf32, #tpu.memory_space<vmem>>, vector<1x16x128xf32>,
    %66 = vector.extract_strided_slice %41 {offsets = [96, 0], sizes = [16, 128], strides = [1, 1]} : vector<256x128xf32> to vector<16x128xf32>
    %c7 = arith.constant 7 : index
    %c1_26 = arith.constant 1 : index
    %c0_27 = arith.constant 0 : index
    %67 = vector.load %arg7[%c7, %c1_26, %c0_27] : memref<18x24x128xf32, #tpu.memory_space<vmem>>, vector<1x16x128xf32>
    %68 = vector.shape_cast %67 : vector<1x16x128xf32> to vector<16x128xf32>
    %69 = vector.shape_cast %66 : vector<16x128xf32> to vector<1x16x128xf32>
    tpu.vector_store %arg7[%c7, %c1_26, %c0_27], %69 {strides = array<i32>} : memref<18x24x128xf32, #tpu.memory_space<vmem>>, vector<1x16x128xf32>,
    %70 = vector.extract_strided_slice %41 {offsets = [112, 0], sizes = [16, 128], strides = [1, 1]} : vector<256x128xf32> to vector<16x128xf32>
    %c8 = arith.constant 8 : index
    %c1_28 = arith.constant 1 : index
    %c0_29 = arith.constant 0 : index
    %71 = vector.load %arg7[%c8, %c1_28, %c0_29] : memref<18x24x128xf32, #tpu.memory_space<vmem>>, vector<1x16x128xf32>
    %72 = vector.shape_cast %71 : vector<1x16x128xf32> to vector<16x128xf32>
    %73 = vector.shape_cast %70 : vector<16x128xf32> to vector<1x16x128xf32>
    tpu.vector_store %arg7[%c8, %c1_28, %c0_29], %73 {strides = array<i32>} : memref<18x24x128xf32, #tpu.memory_space<vmem>>, vector<1x16x128xf32>,
    %74 = vector.extract_strided_slice %41 {offsets = [128, 0], sizes = [16, 128], strides = [1, 1]} : vector<256x128xf32> to vector<16x128xf32>
    %c9 = arith.constant 9 : index
    %c1_30 = arith.constant 1 : index
    %c0_31 = arith.constant 0 : index
    %75 = vector.load %arg7[%c9, %c1_30, %c0_31] : memref<18x24x128xf32, #tpu.memory_space<vmem>>, vector<1x16x128xf32>
    %76 = vector.shape_cast %75 : vector<1x16x128xf32> to vector<16x128xf32>
    %77 = vector.shape_cast %74 : vector<16x128xf32> to vector<1x16x128xf32>
    tpu.vector_store %arg7[%c9, %c1_30, %c0_31], %77 {strides = array<i32>} : memref<18x24x128xf32, #tpu.memory_space<vmem>>, vector<1x16x128xf32>,
    %78 = vector.extract_strided_slice %41 {offsets = [144, 0], sizes = [16, 128], strides = [1, 1]} : vector<256x128xf32> to vector<16x128xf32>
    %c10 = arith.constant 10 : index
    %c1_32 = arith.constant 1 : index
    %c0_33 = arith.constant 0 : index
    %79 = vector.load %arg7[%c10, %c1_32, %c0_33] : memref<18x24x128xf32, #tpu.memory_space<vmem>>, vector<1x16x128xf32>
    %80 = vector.shape_cast %79 : vector<1x16x128xf32> to vector<16x128xf32>
    %81 = vector.shape_cast %78 : vector<16x128xf32> to vector<1x16x128xf32>
    tpu.vector_store %arg7[%c10, %c1_32, %c0_33], %81 {strides = array<i32>} : memref<18x24x128xf32, #tpu.memory_space<vmem>>, vector<1x16x128xf32>,
    %82 = vector.extract_strided_slice %41 {offsets = [160, 0], sizes = [16, 128], strides = [1, 1]} : vector<256x128xf32> to vector<16x128xf32>
    %c11 = arith.constant 11 : index
    %c1_34 = arith.constant 1 : index
    %c0_35 = arith.constant 0 : index
    %83 = vector.load %arg7[%c11, %c1_34, %c0_35] : memref<18x24x128xf32, #tpu.memory_space<vmem>>, vector<1x16x128xf32>
    %84 = vector.shape_cast %83 : vector<1x16x128xf32> to vector<16x128xf32>
    %85 = vector.shape_cast %82 : vector<16x128xf32> to vector<1x16x128xf32>
    tpu.vector_store %arg7[%c11, %c1_34, %c0_35], %85 {strides = array<i32>} : memref<18x24x128xf32, #tpu.memory_space<vmem>>, vector<1x16x128xf32>,
    %86 = vector.extract_strided_slice %41 {offsets = [176, 0], sizes = [16, 128], strides = [1, 1]} : vector<256x128xf32> to vector<16x128xf32>
    %c12 = arith.constant 12 : index
    %c1_36 = arith.constant 1 : index
    %c0_37 = arith.constant 0 : index
    %87 = vector.load %arg7[%c12, %c1_36, %c0_37] : memref<18x24x128xf32, #tpu.memory_space<vmem>>, vector<1x16x128xf32>
    %88 = vector.shape_cast %87 : vector<1x16x128xf32> to vector<16x128xf32>
    %89 = vector.shape_cast %86 : vector<16x128xf32> to vector<1x16x128xf32>
    tpu.vector_store %arg7[%c12, %c1_36, %c0_37], %89 {strides = array<i32>} : memref<18x24x128xf32, #tpu.memory_space<vmem>>, vector<1x16x128xf32>,
    %90 = vector.extract_strided_slice %41 {offsets = [192, 0], sizes = [16, 128], strides = [1, 1]} : vector<256x128xf32> to vector<16x128xf32>
    %c13 = arith.constant 13 : index
    %c1_38 = arith.constant 1 : index
    %c0_39 = arith.constant 0 : index
    %91 = vector.load %arg7[%c13, %c1_38, %c0_39] : memref<18x24x128xf32, #tpu.memory_space<vmem>>, vector<1x16x128xf32>
    %92 = vector.shape_cast %91 : vector<1x16x128xf32> to vector<16x128xf32>
    %93 = vector.shape_cast %90 : vector<16x128xf32> to vector<1x16x128xf32>
    tpu.vector_store %arg7[%c13, %c1_38, %c0_39], %93 {strides = array<i32>} : memref<18x24x128xf32, #tpu.memory_space<vmem>>, vector<1x16x128xf32>,
    %94 = vector.extract_strided_slice %41 {offsets = [208, 0], sizes = [16, 128], strides = [1, 1]} : vector<256x128xf32> to vector<16x128xf32>
    %c14 = arith.constant 14 : index
    %c1_40 = arith.constant 1 : index
    %c0_41 = arith.constant 0 : index
    %95 = vector.load %arg7[%c14, %c1_40, %c0_41] : memref<18x24x128xf32, #tpu.memory_space<vmem>>, vector<1x16x128xf32>
    %96 = vector.shape_cast %95 : vector<1x16x128xf32> to vector<16x128xf32>
    %97 = vector.shape_cast %94 : vector<16x128xf32> to vector<1x16x128xf32>
    tpu.vector_store %arg7[%c14, %c1_40, %c0_41], %97 {strides = array<i32>} : memref<18x24x128xf32, #tpu.memory_space<vmem>>, vector<1x16x128xf32>,
    %98 = vector.extract_strided_slice %41 {offsets = [224, 0], sizes = [16, 128], strides = [1, 1]} : vector<256x128xf32> to vector<16x128xf32>
    %c15 = arith.constant 15 : index
    %c1_42 = arith.constant 1 : index
    %c0_43 = arith.constant 0 : index
    %99 = vector.load %arg7[%c15, %c1_42, %c0_43] : memref<18x24x128xf32, #tpu.memory_space<vmem>>, vector<1x16x128xf32>
    %100 = vector.shape_cast %99 : vector<1x16x128xf32> to vector<16x128xf32>
    %101 = vector.shape_cast %98 : vector<16x128xf32> to vector<1x16x128xf32>
    tpu.vector_store %arg7[%c15, %c1_42, %c0_43], %101 {strides = array<i32>} : memref<18x24x128xf32, #tpu.memory_space<vmem>>, vector<1x16x128xf32>,
    %102 = vector.extract_strided_slice %41 {offsets = [240, 0], sizes = [16, 128], strides = [1, 1]} : vector<256x128xf32> to vector<16x128xf32>
    %c16 = arith.constant 16 : index
    %c1_44 = arith.constant 1 : index
    %c0_45 = arith.constant 0 : index
    %103 = vector.load %arg7[%c16, %c1_44, %c0_45] : memref<18x24x128xf32, #tpu.memory_space<vmem>>, vector<1x16x128xf32>
    %104 = vector.shape_cast %103 : vector<1x16x128xf32> to vector<16x128xf32>
    %105 = vector.shape_cast %102 : vector<16x128xf32> to vector<1x16x128xf32>
    tpu.vector_store %arg7[%c16, %c1_44, %c0_45], %105 {strides = array<i32>} : memref<18x24x128xf32, #tpu.memory_space<vmem>>, vector<1x16x128xf32>,
    %c0_46 = arith.constant 0 : index
    %c0_47 = arith.constant 0 : index
    %c0_48 = arith.constant 0 : index
    %106 = vector.load %arg7[%c0_46, %c0_47, %c0_48] : memref<18x24x128xf32, #tpu.memory_space<vmem>>, vector<1x24x128xf32>
    %107 = vector.shape_cast %106 : vector<1x24x128xf32> to vector<24x128xf32>
    %108 = vector.extract_strided_slice %107 {offsets = [0, 0], sizes = [16, 128], strides = [1, 1]} : vector<24x128xf32> to vector<16x128xf32>
    %109 = arith.mulf %108, %7 : vector<16x128xf32>
    %110 = arith.addf %34, %109 : vector<16x128xf32>
    %111 = vector.extract_strided_slice %107 {offsets = [1, 0], sizes = [16, 128], strides = [1, 1]} : vector<24x128xf32> to vector<16x128xf32>
    %112 = arith.mulf %111, %10 : vector<16x128xf32>
    %113 = arith.addf %110, %112 : vector<16x128xf32>
    %114 = vector.extract_strided_slice %107 {offsets = [2, 0], sizes = [16, 128], strides = [1, 1]} : vector<24x128xf32> to vector<16x128xf32>
    %115 = arith.mulf %114, %13 : vector<16x128xf32>
    %116 = arith.addf %113, %115 : vector<16x128xf32>
    %c1_49 = arith.constant 1 : index
    %c0_50 = arith.constant 0 : index
    %c0_51 = arith.constant 0 : index
    %117 = vector.load %arg7[%c1_49, %c0_50, %c0_51] : memref<18x24x128xf32, #tpu.memory_space<vmem>>, vector<1x24x128xf32>
    %118 = vector.shape_cast %117 : vector<1x24x128xf32> to vector<24x128xf32>
    %119 = vector.extract_strided_slice %118 {offsets = [0, 0], sizes = [16, 128], strides = [1, 1]} : vector<24x128xf32> to vector<16x128xf32>
    %120 = arith.mulf %119, %16 : vector<16x128xf32>
    %121 = arith.addf %116, %120 : vector<16x128xf32>
    %122 = vector.extract_strided_slice %118 {offsets = [1, 0], sizes = [16, 128], strides = [1, 1]} : vector<24x128xf32> to vector<16x128xf32>
    %123 = arith.mulf %122, %19 : vector<16x128xf32>
    %124 = arith.addf %121, %123 : vector<16x128xf32>
    %125 = vector.extract_strided_slice %118 {offsets = [2, 0], sizes = [16, 128], strides = [1, 1]} : vector<24x128xf32> to vector<16x128xf32>
    %126 = arith.mulf %125, %22 : vector<16x128xf32>
    %127 = arith.addf %124, %126 : vector<16x128xf32>
    %c2_52 = arith.constant 2 : index
    %c0_53 = arith.constant 0 : index
    %c0_54 = arith.constant 0 : index
    %128 = vector.load %arg7[%c2_52, %c0_53, %c0_54] : memref<18x24x128xf32, #tpu.memory_space<vmem>>, vector<1x24x128xf32>
    %129 = vector.shape_cast %128 : vector<1x24x128xf32> to vector<24x128xf32>
    %130 = vector.extract_strided_slice %129 {offsets = [0, 0], sizes = [16, 128], strides = [1, 1]} : vector<24x128xf32> to vector<16x128xf32>
    %131 = arith.mulf %130, %25 : vector<16x128xf32>
    %132 = arith.addf %127, %131 : vector<16x128xf32>
    %133 = vector.extract_strided_slice %129 {offsets = [1, 0], sizes = [16, 128], strides = [1, 1]} : vector<24x128xf32> to vector<16x128xf32>
    %134 = arith.mulf %133, %28 : vector<16x128xf32>
    %135 = arith.addf %132, %134 : vector<16x128xf32>
    %136 = vector.extract_strided_slice %129 {offsets = [2, 0], sizes = [16, 128], strides = [1, 1]} : vector<24x128xf32> to vector<16x128xf32>
    %137 = arith.mulf %136, %31 : vector<16x128xf32>
    %138 = arith.addf %135, %137 : vector<16x128xf32>
    %cst_55 = arith.constant 5.000000e-01 : f32
    %139 = vector.broadcast %cst_55 : f32 to vector<16x128xf32>
    %140 = arith.mulf %139, %138 : vector<16x128xf32>
    %cst_56 = arith.constant 0.707106769 : f32
    %141 = vector.broadcast %cst_56 : f32 to vector<16x128xf32>
    %142 = arith.mulf %138, %141 : vector<16x128xf32>
    %143 = math.absf %142 : vector<16x128xf32>
    %cst_57 = arith.constant 0.327591091 : f32
    %144 = vector.broadcast %cst_57 : f32 to vector<16x128xf32>
    %145 = arith.mulf %144, %143 : vector<16x128xf32>
    %cst_58 = arith.constant 1.000000e+00 : f32
    %146 = vector.broadcast %cst_58 : f32 to vector<16x128xf32>
    %147 = arith.addf %146, %145 : vector<16x128xf32>
    %cst_59 = arith.constant 1.000000e+00 : f32
    %148 = vector.broadcast %cst_59 : f32 to vector<16x128xf32>
    %149 = arith.divf %148, %147 : vector<16x128xf32>
    %cst_60 = arith.constant 1.06140542 : f32
    %150 = vector.broadcast %cst_60 : f32 to vector<16x128xf32>
    %151 = arith.mulf %150, %149 : vector<16x128xf32>
    %cst_61 = arith.constant -1.45315206 : f32
    %152 = vector.broadcast %cst_61 : f32 to vector<16x128xf32>
    %153 = arith.addf %151, %152 : vector<16x128xf32>
    %154 = arith.mulf %153, %149 : vector<16x128xf32>
    %cst_62 = arith.constant 1.42141378 : f32
    %155 = vector.broadcast %cst_62 : f32 to vector<16x128xf32>
    %156 = arith.addf %154, %155 : vector<16x128xf32>
    %157 = arith.mulf %156, %149 : vector<16x128xf32>
    %cst_63 = arith.constant -0.284496725 : f32
    %158 = vector.broadcast %cst_63 : f32 to vector<16x128xf32>
    %159 = arith.addf %157, %158 : vector<16x128xf32>
    %160 = arith.mulf %159, %149 : vector<16x128xf32>
    %cst_64 = arith.constant 0.254829586 : f32
    %161 = vector.broadcast %cst_64 : f32 to vector<16x128xf32>
    %162 = arith.addf %160, %161 : vector<16x128xf32>
    %163 = arith.mulf %162, %149 : vector<16x128xf32>
    %cst_65 = arith.constant 0.000000e+00 : f32
    %164 = vector.broadcast %cst_65 : f32 to vector<16x128xf32>
    %165 = arith.subf %164, %143 : vector<16x128xf32>
    %166 = arith.mulf %165, %143 : vector<16x128xf32>
    %167 = math.exp %166 : vector<16x128xf32>
    %168 = arith.mulf %163, %167 : vector<16x128xf32>
    %cst_66 = arith.constant 1.000000e+00 : f32
    %169 = vector.broadcast %cst_66 : f32 to vector<16x128xf32>
    %170 = arith.subf %169, %168 : vector<16x128xf32>
    %cst_67 = arith.constant 0.000000e+00 : f32
    %171 = vector.broadcast %cst_67 : f32 to vector<16x128xf32>
    %172 = arith.cmpf oge, %142, %171 : vector<16x128xf32>
    %cst_68 = arith.constant 0.000000e+00 : f32
    %173 = vector.broadcast %cst_68 : f32 to vector<16x128xf32>
    %174 = arith.subf %173, %170 : vector<16x128xf32>
    %175 = arith.select %172, %170, %174 : vector<16x128xi1>, vector<16x128xf32>
    %cst_69 = arith.constant 1.000000e+00 : f32
    %176 = vector.broadcast %cst_69 : f32 to vector<16x128xf32>
    %177 = arith.addf %176, %175 : vector<16x128xf32>
    %178 = arith.mulf %140, %177 : vector<16x128xf32>
    %c0_70 = arith.constant 0 : index
    %c0_71 = arith.constant 0 : index
    %179 = vector.load %arg8[%c0_70, %c0_71] : memref<256x128xf32, #tpu.memory_space<vmem>>, vector<16x128xf32>
    tpu.vector_store %arg8[%c0_70, %c0_71], %178 {strides = array<i32>} : memref<256x128xf32, #tpu.memory_space<vmem>>, vector<16x128xf32>,
    %c1_72 = arith.constant 1 : index
    %c0_73 = arith.constant 0 : index
    %c0_74 = arith.constant 0 : index
    %180 = vector.load %arg7[%c1_72, %c0_73, %c0_74] : memref<18x24x128xf32, #tpu.memory_space<vmem>>, vector<1x24x128xf32>
    %181 = vector.shape_cast %180 : vector<1x24x128xf32> to vector<24x128xf32>
    %182 = vector.extract_strided_slice %181 {offsets = [0, 0], sizes = [16, 128], strides = [1, 1]} : vector<24x128xf32> to vector<16x128xf32>
    %183 = arith.mulf %182, %7 : vector<16x128xf32>
    %184 = arith.addf %34, %183 : vector<16x128xf32>
    %185 = vector.extract_strided_slice %181 {offsets = [1, 0], sizes = [16, 128], strides = [1, 1]} : vector<24x128xf32> to vector<16x128xf32>
    %186 = arith.mulf %185, %10 : vector<16x128xf32>
    %187 = arith.addf %184, %186 : vector<16x128xf32>
    %188 = vector.extract_strided_slice %181 {offsets = [2, 0], sizes = [16, 128], strides = [1, 1]} : vector<24x128xf32> to vector<16x128xf32>
    %189 = arith.mulf %188, %13 : vector<16x128xf32>
    %190 = arith.addf %187, %189 : vector<16x128xf32>
    %c2_75 = arith.constant 2 : index
    %c0_76 = arith.constant 0 : index
    %c0_77 = arith.constant 0 : index
    %191 = vector.load %arg7[%c2_75, %c0_76, %c0_77] : memref<18x24x128xf32, #tpu.memory_space<vmem>>, vector<1x24x128xf32>
    %192 = vector.shape_cast %191 : vector<1x24x128xf32> to vector<24x128xf32>
    %193 = vector.extract_strided_slice %192 {offsets = [0, 0], sizes = [16, 128], strides = [1, 1]} : vector<24x128xf32> to vector<16x128xf32>
    %194 = arith.mulf %193, %16 : vector<16x128xf32>
    %195 = arith.addf %190, %194 : vector<16x128xf32>
    %196 = vector.extract_strided_slice %192 {offsets = [1, 0], sizes = [16, 128], strides = [1, 1]} : vector<24x128xf32> to vector<16x128xf32>
    %197 = arith.mulf %196, %19 : vector<16x128xf32>
    %198 = arith.addf %195, %197 : vector<16x128xf32>
    %199 = vector.extract_strided_slice %192 {offsets = [2, 0], sizes = [16, 128], strides = [1, 1]} : vector<24x128xf32> to vector<16x128xf32>
    %200 = arith.mulf %199, %22 : vector<16x128xf32>
    %201 = arith.addf %198, %200 : vector<16x128xf32>
    %c3_78 = arith.constant 3 : index
    %c0_79 = arith.constant 0 : index
    %c0_80 = arith.constant 0 : index
    %202 = vector.load %arg7[%c3_78, %c0_79, %c0_80] : memref<18x24x128xf32, #tpu.memory_space<vmem>>, vector<1x24x128xf32>
    %203 = vector.shape_cast %202 : vector<1x24x128xf32> to vector<24x128xf32>
    %204 = vector.extract_strided_slice %203 {offsets = [0, 0], sizes = [16, 128], strides = [1, 1]} : vector<24x128xf32> to vector<16x128xf32>
    %205 = arith.mulf %204, %25 : vector<16x128xf32>
    %206 = arith.addf %201, %205 : vector<16x128xf32>
    %207 = vector.extract_strided_slice %203 {offsets = [1, 0], sizes = [16, 128], strides = [1, 1]} : vector<24x128xf32> to vector<16x128xf32>
    %208 = arith.mulf %207, %28 : vector<16x128xf32>
    %209 = arith.addf %206, %208 : vector<16x128xf32>
    %210 = vector.extract_strided_slice %203 {offsets = [2, 0], sizes = [16, 128], strides = [1, 1]} : vector<24x128xf32> to vector<16x128xf32>
    %211 = arith.mulf %210, %31 : vector<16x128xf32>
    %212 = arith.addf %209, %211 : vector<16x128xf32>
    %cst_81 = arith.constant 5.000000e-01 : f32
    %213 = vector.broadcast %cst_81 : f32 to vector<16x128xf32>
    %214 = arith.mulf %213, %212 : vector<16x128xf32>
    %cst_82 = arith.constant 0.707106769 : f32
    %215 = vector.broadcast %cst_82 : f32 to vector<16x128xf32>
    %216 = arith.mulf %212, %215 : vector<16x128xf32>
    %217 = math.absf %216 : vector<16x128xf32>
    %cst_83 = arith.constant 0.327591091 : f32
    %218 = vector.broadcast %cst_83 : f32 to vector<16x128xf32>
    %219 = arith.mulf %218, %217 : vector<16x128xf32>
    %cst_84 = arith.constant 1.000000e+00 : f32
    %220 = vector.broadcast %cst_84 : f32 to vector<16x128xf32>
    %221 = arith.addf %220, %219 : vector<16x128xf32>
    %cst_85 = arith.constant 1.000000e+00 : f32
    %222 = vector.broadcast %cst_85 : f32 to vector<16x128xf32>
    %223 = arith.divf %222, %221 : vector<16x128xf32>
    %cst_86 = arith.constant 1.06140542 : f32
    %224 = vector.broadcast %cst_86 : f32 to vector<16x128xf32>
    %225 = arith.mulf %224, %223 : vector<16x128xf32>
    %cst_87 = arith.constant -1.45315206 : f32
    %226 = vector.broadcast %cst_87 : f32 to vector<16x128xf32>
    %227 = arith.addf %225, %226 : vector<16x128xf32>
    %228 = arith.mulf %227, %223 : vector<16x128xf32>
    %cst_88 = arith.constant 1.42141378 : f32
    %229 = vector.broadcast %cst_88 : f32 to vector<16x128xf32>
    %230 = arith.addf %228, %229 : vector<16x128xf32>
    %231 = arith.mulf %230, %223 : vector<16x128xf32>
    %cst_89 = arith.constant -0.284496725 : f32
    %232 = vector.broadcast %cst_89 : f32 to vector<16x128xf32>
    %233 = arith.addf %231, %232 : vector<16x128xf32>
    %234 = arith.mulf %233, %223 : vector<16x128xf32>
    %cst_90 = arith.constant 0.254829586 : f32
    %235 = vector.broadcast %cst_90 : f32 to vector<16x128xf32>
    %236 = arith.addf %234, %235 : vector<16x128xf32>
    %237 = arith.mulf %236, %223 : vector<16x128xf32>
    %cst_91 = arith.constant 0.000000e+00 : f32
    %238 = vector.broadcast %cst_91 : f32 to vector<16x128xf32>
    %239 = arith.subf %238, %217 : vector<16x128xf32>
    %240 = arith.mulf %239, %217 : vector<16x128xf32>
    %241 = math.exp %240 : vector<16x128xf32>
    %242 = arith.mulf %237, %241 : vector<16x128xf32>
    %cst_92 = arith.constant 1.000000e+00 : f32
    %243 = vector.broadcast %cst_92 : f32 to vector<16x128xf32>
    %244 = arith.subf %243, %242 : vector<16x128xf32>
    %cst_93 = arith.constant 0.000000e+00 : f32
    %245 = vector.broadcast %cst_93 : f32 to vector<16x128xf32>
    %246 = arith.cmpf oge, %216, %245 : vector<16x128xf32>
    %cst_94 = arith.constant 0.000000e+00 : f32
    %247 = vector.broadcast %cst_94 : f32 to vector<16x128xf32>
    %248 = arith.subf %247, %244 : vector<16x128xf32>
    %249 = arith.select %246, %244, %248 : vector<16x128xi1>, vector<16x128xf32>
    %cst_95 = arith.constant 1.000000e+00 : f32
    %250 = vector.broadcast %cst_95 : f32 to vector<16x128xf32>
    %251 = arith.addf %250, %249 : vector<16x128xf32>
    %252 = arith.mulf %214, %251 : vector<16x128xf32>
    %c16_96 = arith.constant 16 : index
    %c0_97 = arith.constant 0 : index
    %253 = vector.load %arg8[%c16_96, %c0_97] : memref<256x128xf32, #tpu.memory_space<vmem>>, vector<16x128xf32>
    tpu.vector_store %arg8[%c16_96, %c0_97], %252 {strides = array<i32>} : memref<256x128xf32, #tpu.memory_space<vmem>>, vector<16x128xf32>,
    %c2_98 = arith.constant 2 : index
    %c0_99 = arith.constant 0 : index
    %c0_100 = arith.constant 0 : index
    %254 = vector.load %arg7[%c2_98, %c0_99, %c0_100] : memref<18x24x128xf32, #tpu.memory_space<vmem>>, vector<1x24x128xf32>
    %255 = vector.shape_cast %254 : vector<1x24x128xf32> to vector<24x128xf32>
    %256 = vector.extract_strided_slice %255 {offsets = [0, 0], sizes = [16, 128], strides = [1, 1]} : vector<24x128xf32> to vector<16x128xf32>
    %257 = arith.mulf %256, %7 : vector<16x128xf32>
    %258 = arith.addf %34, %257 : vector<16x128xf32>
    %259 = vector.extract_strided_slice %255 {offsets = [1, 0], sizes = [16, 128], strides = [1, 1]} : vector<24x128xf32> to vector<16x128xf32>
    %260 = arith.mulf %259, %10 : vector<16x128xf32>
    %261 = arith.addf %258, %260 : vector<16x128xf32>
    %262 = vector.extract_strided_slice %255 {offsets = [2, 0], sizes = [16, 128], strides = [1, 1]} : vector<24x128xf32> to vector<16x128xf32>
    %263 = arith.mulf %262, %13 : vector<16x128xf32>
    %264 = arith.addf %261, %263 : vector<16x128xf32>
    %c3_101 = arith.constant 3 : index
    %c0_102 = arith.constant 0 : index
    %c0_103 = arith.constant 0 : index
    %265 = vector.load %arg7[%c3_101, %c0_102, %c0_103] : memref<18x24x128xf32, #tpu.memory_space<vmem>>, vector<1x24x128xf32>
    %266 = vector.shape_cast %265 : vector<1x24x128xf32> to vector<24x128xf32>
    %267 = vector.extract_strided_slice %266 {offsets = [0, 0], sizes = [16, 128], strides = [1, 1]} : vector<24x128xf32> to vector<16x128xf32>
    %268 = arith.mulf %267, %16 : vector<16x128xf32>
    %269 = arith.addf %264, %268 : vector<16x128xf32>
    %270 = vector.extract_strided_slice %266 {offsets = [1, 0], sizes = [16, 128], strides = [1, 1]} : vector<24x128xf32> to vector<16x128xf32>
    %271 = arith.mulf %270, %19 : vector<16x128xf32>
    %272 = arith.addf %269, %271 : vector<16x128xf32>
    %273 = vector.extract_strided_slice %266 {offsets = [2, 0], sizes = [16, 128], strides = [1, 1]} : vector<24x128xf32> to vector<16x128xf32>
    %274 = arith.mulf %273, %22 : vector<16x128xf32>
    %275 = arith.addf %272, %274 : vector<16x128xf32>
    %c4_104 = arith.constant 4 : index
    %c0_105 = arith.constant 0 : index
    %c0_106 = arith.constant 0 : index
    %276 = vector.load %arg7[%c4_104, %c0_105, %c0_106] : memref<18x24x128xf32, #tpu.memory_space<vmem>>, vector<1x24x128xf32>
    %277 = vector.shape_cast %276 : vector<1x24x128xf32> to vector<24x128xf32>
    %278 = vector.extract_strided_slice %277 {offsets = [0, 0], sizes = [16, 128], strides = [1, 1]} : vector<24x128xf32> to vector<16x128xf32>
    %279 = arith.mulf %278, %25 : vector<16x128xf32>
    %280 = arith.addf %275, %279 : vector<16x128xf32>
    %281 = vector.extract_strided_slice %277 {offsets = [1, 0], sizes = [16, 128], strides = [1, 1]} : vector<24x128xf32> to vector<16x128xf32>
    %282 = arith.mulf %281, %28 : vector<16x128xf32>
    %283 = arith.addf %280, %282 : vector<16x128xf32>
    %284 = vector.extract_strided_slice %277 {offsets = [2, 0], sizes = [16, 128], strides = [1, 1]} : vector<24x128xf32> to vector<16x128xf32>
    %285 = arith.mulf %284, %31 : vector<16x128xf32>
    %286 = arith.addf %283, %285 : vector<16x128xf32>
    %cst_107 = arith.constant 5.000000e-01 : f32
    %287 = vector.broadcast %cst_107 : f32 to vector<16x128xf32>
    %288 = arith.mulf %287, %286 : vector<16x128xf32>
    %cst_108 = arith.constant 0.707106769 : f32
    %289 = vector.broadcast %cst_108 : f32 to vector<16x128xf32>
    %290 = arith.mulf %286, %289 : vector<16x128xf32>
    %291 = math.absf %290 : vector<16x128xf32>
    %cst_109 = arith.constant 0.327591091 : f32
    %292 = vector.broadcast %cst_109 : f32 to vector<16x128xf32>
    %293 = arith.mulf %292, %291 : vector<16x128xf32>
    %cst_110 = arith.constant 1.000000e+00 : f32
    %294 = vector.broadcast %cst_110 : f32 to vector<16x128xf32>
    %295 = arith.addf %294, %293 : vector<16x128xf32>
    %cst_111 = arith.constant 1.000000e+00 : f32
    %296 = vector.broadcast %cst_111 : f32 to vector<16x128xf32>
    %297 = arith.divf %296, %295 : vector<16x128xf32>
    %cst_112 = arith.constant 1.06140542 : f32
    %298 = vector.broadcast %cst_112 : f32 to vector<16x128xf32>
    %299 = arith.mulf %298, %297 : vector<16x128xf32>
    %cst_113 = arith.constant -1.45315206 : f32
    %300 = vector.broadcast %cst_113 : f32 to vector<16x128xf32>
    %301 = arith.addf %299, %300 : vector<16x128xf32>
    %302 = arith.mulf %301, %297 : vector<16x128xf32>
    %cst_114 = arith.constant 1.42141378 : f32
    %303 = vector.broadcast %cst_114 : f32 to vector<16x128xf32>
    %304 = arith.addf %302, %303 : vector<16x128xf32>
    %305 = arith.mulf %304, %297 : vector<16x128xf32>
    %cst_115 = arith.constant -0.284496725 : f32
    %306 = vector.broadcast %cst_115 : f32 to vector<16x128xf32>
    %307 = arith.addf %305, %306 : vector<16x128xf32>
    %308 = arith.mulf %307, %297 : vector<16x128xf32>
    %cst_116 = arith.constant 0.254829586 : f32
    %309 = vector.broadcast %cst_116 : f32 to vector<16x128xf32>
    %310 = arith.addf %308, %309 : vector<16x128xf32>
    %311 = arith.mulf %310, %297 : vector<16x128xf32>
    %cst_117 = arith.constant 0.000000e+00 : f32
    %312 = vector.broadcast %cst_117 : f32 to vector<16x128xf32>
    %313 = arith.subf %312, %291 : vector<16x128xf32>
    %314 = arith.mulf %313, %291 : vector<16x128xf32>
    %315 = math.exp %314 : vector<16x128xf32>
    %316 = arith.mulf %311, %315 : vector<16x128xf32>
    %cst_118 = arith.constant 1.000000e+00 : f32
    %317 = vector.broadcast %cst_118 : f32 to vector<16x128xf32>
    %318 = arith.subf %317, %316 : vector<16x128xf32>
    %cst_119 = arith.constant 0.000000e+00 : f32
    %319 = vector.broadcast %cst_119 : f32 to vector<16x128xf32>
    %320 = arith.cmpf oge, %290, %319 : vector<16x128xf32>
    %cst_120 = arith.constant 0.000000e+00 : f32
    %321 = vector.broadcast %cst_120 : f32 to vector<16x128xf32>
    %322 = arith.subf %321, %318 : vector<16x128xf32>
    %323 = arith.select %320, %318, %322 : vector<16x128xi1>, vector<16x128xf32>
    %cst_121 = arith.constant 1.000000e+00 : f32
    %324 = vector.broadcast %cst_121 : f32 to vector<16x128xf32>
    %325 = arith.addf %324, %323 : vector<16x128xf32>
    %326 = arith.mulf %288, %325 : vector<16x128xf32>
    %c32 = arith.constant 32 : index
    %c0_122 = arith.constant 0 : index
    %327 = vector.load %arg8[%c32, %c0_122] : memref<256x128xf32, #tpu.memory_space<vmem>>, vector<16x128xf32>
    tpu.vector_store %arg8[%c32, %c0_122], %326 {strides = array<i32>} : memref<256x128xf32, #tpu.memory_space<vmem>>, vector<16x128xf32>,
    %c3_123 = arith.constant 3 : index
    %c0_124 = arith.constant 0 : index
    %c0_125 = arith.constant 0 : index
    %328 = vector.load %arg7[%c3_123, %c0_124, %c0_125] : memref<18x24x128xf32, #tpu.memory_space<vmem>>, vector<1x24x128xf32>
    %329 = vector.shape_cast %328 : vector<1x24x128xf32> to vector<24x128xf32>
    %330 = vector.extract_strided_slice %329 {offsets = [0, 0], sizes = [16, 128], strides = [1, 1]} : vector<24x128xf32> to vector<16x128xf32>
    %331 = arith.mulf %330, %7 : vector<16x128xf32>
    %332 = arith.addf %34, %331 : vector<16x128xf32>
    %333 = vector.extract_strided_slice %329 {offsets = [1, 0], sizes = [16, 128], strides = [1, 1]} : vector<24x128xf32> to vector<16x128xf32>
    %334 = arith.mulf %333, %10 : vector<16x128xf32>
    %335 = arith.addf %332, %334 : vector<16x128xf32>
    %336 = vector.extract_strided_slice %329 {offsets = [2, 0], sizes = [16, 128], strides = [1, 1]} : vector<24x128xf32> to vector<16x128xf32>
    %337 = arith.mulf %336, %13 : vector<16x128xf32>
    %338 = arith.addf %335, %337 : vector<16x128xf32>
    %c4_126 = arith.constant 4 : index
    %c0_127 = arith.constant 0 : index
    %c0_128 = arith.constant 0 : index
    %339 = vector.load %arg7[%c4_126, %c0_127, %c0_128] : memref<18x24x128xf32, #tpu.memory_space<vmem>>, vector<1x24x128xf32>
    %340 = vector.shape_cast %339 : vector<1x24x128xf32> to vector<24x128xf32>
    %341 = vector.extract_strided_slice %340 {offsets = [0, 0], sizes = [16, 128], strides = [1, 1]} : vector<24x128xf32> to vector<16x128xf32>
    %342 = arith.mulf %341, %16 : vector<16x128xf32>
    %343 = arith.addf %338, %342 : vector<16x128xf32>
    %344 = vector.extract_strided_slice %340 {offsets = [1, 0], sizes = [16, 128], strides = [1, 1]} : vector<24x128xf32> to vector<16x128xf32>
    %345 = arith.mulf %344, %19 : vector<16x128xf32>
    %346 = arith.addf %343, %345 : vector<16x128xf32>
    %347 = vector.extract_strided_slice %340 {offsets = [2, 0], sizes = [16, 128], strides = [1, 1]} : vector<24x128xf32> to vector<16x128xf32>
    %348 = arith.mulf %347, %22 : vector<16x128xf32>
    %349 = arith.addf %346, %348 : vector<16x128xf32>
    %c5_129 = arith.constant 5 : index
    %c0_130 = arith.constant 0 : index
    %c0_131 = arith.constant 0 : index
    %350 = vector.load %arg7[%c5_129, %c0_130, %c0_131] : memref<18x24x128xf32, #tpu.memory_space<vmem>>, vector<1x24x128xf32>
    %351 = vector.shape_cast %350 : vector<1x24x128xf32> to vector<24x128xf32>
    %352 = vector.extract_strided_slice %351 {offsets = [0, 0], sizes = [16, 128], strides = [1, 1]} : vector<24x128xf32> to vector<16x128xf32>
    %353 = arith.mulf %352, %25 : vector<16x128xf32>
    %354 = arith.addf %349, %353 : vector<16x128xf32>
    %355 = vector.extract_strided_slice %351 {offsets = [1, 0], sizes = [16, 128], strides = [1, 1]} : vector<24x128xf32> to vector<16x128xf32>
    %356 = arith.mulf %355, %28 : vector<16x128xf32>
    %357 = arith.addf %354, %356 : vector<16x128xf32>
    %358 = vector.extract_strided_slice %351 {offsets = [2, 0], sizes = [16, 128], strides = [1, 1]} : vector<24x128xf32> to vector<16x128xf32>
    %359 = arith.mulf %358, %31 : vector<16x128xf32>
    %360 = arith.addf %357, %359 : vector<16x128xf32>
    %cst_132 = arith.constant 5.000000e-01 : f32
    %361 = vector.broadcast %cst_132 : f32 to vector<16x128xf32>
    %362 = arith.mulf %361, %360 : vector<16x128xf32>
    %cst_133 = arith.constant 0.707106769 : f32
    %363 = vector.broadcast %cst_133 : f32 to vector<16x128xf32>
    %364 = arith.mulf %360, %363 : vector<16x128xf32>
    %365 = math.absf %364 : vector<16x128xf32>
    %cst_134 = arith.constant 0.327591091 : f32
    %366 = vector.broadcast %cst_134 : f32 to vector<16x128xf32>
    %367 = arith.mulf %366, %365 : vector<16x128xf32>
    %cst_135 = arith.constant 1.000000e+00 : f32
    %368 = vector.broadcast %cst_135 : f32 to vector<16x128xf32>
    %369 = arith.addf %368, %367 : vector<16x128xf32>
    %cst_136 = arith.constant 1.000000e+00 : f32
    %370 = vector.broadcast %cst_136 : f32 to vector<16x128xf32>
    %371 = arith.divf %370, %369 : vector<16x128xf32>
    %cst_137 = arith.constant 1.06140542 : f32
    %372 = vector.broadcast %cst_137 : f32 to vector<16x128xf32>
    %373 = arith.mulf %372, %371 : vector<16x128xf32>
    %cst_138 = arith.constant -1.45315206 : f32
    %374 = vector.broadcast %cst_138 : f32 to vector<16x128xf32>
    %375 = arith.addf %373, %374 : vector<16x128xf32>
    %376 = arith.mulf %375, %371 : vector<16x128xf32>
    %cst_139 = arith.constant 1.42141378 : f32
    %377 = vector.broadcast %cst_139 : f32 to vector<16x128xf32>
    %378 = arith.addf %376, %377 : vector<16x128xf32>
    %379 = arith.mulf %378, %371 : vector<16x128xf32>
    %cst_140 = arith.constant -0.284496725 : f32
    %380 = vector.broadcast %cst_140 : f32 to vector<16x128xf32>
    %381 = arith.addf %379, %380 : vector<16x128xf32>
    %382 = arith.mulf %381, %371 : vector<16x128xf32>
    %cst_141 = arith.constant 0.254829586 : f32
    %383 = vector.broadcast %cst_141 : f32 to vector<16x128xf32>
    %384 = arith.addf %382, %383 : vector<16x128xf32>
    %385 = arith.mulf %384, %371 : vector<16x128xf32>
    %cst_142 = arith.constant 0.000000e+00 : f32
    %386 = vector.broadcast %cst_142 : f32 to vector<16x128xf32>
    %387 = arith.subf %386, %365 : vector<16x128xf32>
    %388 = arith.mulf %387, %365 : vector<16x128xf32>
    %389 = math.exp %388 : vector<16x128xf32>
    %390 = arith.mulf %385, %389 : vector<16x128xf32>
    %cst_143 = arith.constant 1.000000e+00 : f32
    %391 = vector.broadcast %cst_143 : f32 to vector<16x128xf32>
    %392 = arith.subf %391, %390 : vector<16x128xf32>
    %cst_144 = arith.constant 0.000000e+00 : f32
    %393 = vector.broadcast %cst_144 : f32 to vector<16x128xf32>
    %394 = arith.cmpf oge, %364, %393 : vector<16x128xf32>
    %cst_145 = arith.constant 0.000000e+00 : f32
    %395 = vector.broadcast %cst_145 : f32 to vector<16x128xf32>
    %396 = arith.subf %395, %392 : vector<16x128xf32>
    %397 = arith.select %394, %392, %396 : vector<16x128xi1>, vector<16x128xf32>
    %cst_146 = arith.constant 1.000000e+00 : f32
    %398 = vector.broadcast %cst_146 : f32 to vector<16x128xf32>
    %399 = arith.addf %398, %397 : vector<16x128xf32>
    %400 = arith.mulf %362, %399 : vector<16x128xf32>
    %c48 = arith.constant 48 : index
    %c0_147 = arith.constant 0 : index
    %401 = vector.load %arg8[%c48, %c0_147] : memref<256x128xf32, #tpu.memory_space<vmem>>, vector<16x128xf32>
    tpu.vector_store %arg8[%c48, %c0_147], %400 {strides = array<i32>} : memref<256x128xf32, #tpu.memory_space<vmem>>, vector<16x128xf32>,
    %c4_148 = arith.constant 4 : index
    %c0_149 = arith.constant 0 : index
    %c0_150 = arith.constant 0 : index
    %402 = vector.load %arg7[%c4_148, %c0_149, %c0_150] : memref<18x24x128xf32, #tpu.memory_space<vmem>>, vector<1x24x128xf32>
    %403 = vector.shape_cast %402 : vector<1x24x128xf32> to vector<24x128xf32>
    %404 = vector.extract_strided_slice %403 {offsets = [0, 0], sizes = [16, 128], strides = [1, 1]} : vector<24x128xf32> to vector<16x128xf32>
    %405 = arith.mulf %404, %7 : vector<16x128xf32>
    %406 = arith.addf %34, %405 : vector<16x128xf32>
    %407 = vector.extract_strided_slice %403 {offsets = [1, 0], sizes = [16, 128], strides = [1, 1]} : vector<24x128xf32> to vector<16x128xf32>
    %408 = arith.mulf %407, %10 : vector<16x128xf32>
    %409 = arith.addf %406, %408 : vector<16x128xf32>
    %410 = vector.extract_strided_slice %403 {offsets = [2, 0], sizes = [16, 128], strides = [1, 1]} : vector<24x128xf32> to vector<16x128xf32>
    %411 = arith.mulf %410, %13 : vector<16x128xf32>
    %412 = arith.addf %409, %411 : vector<16x128xf32>
    %c5_151 = arith.constant 5 : index
    %c0_152 = arith.constant 0 : index
    %c0_153 = arith.constant 0 : index
    %413 = vector.load %arg7[%c5_151, %c0_152, %c0_153] : memref<18x24x128xf32, #tpu.memory_space<vmem>>, vector<1x24x128xf32>
    %414 = vector.shape_cast %413 : vector<1x24x128xf32> to vector<24x128xf32>
    %415 = vector.extract_strided_slice %414 {offsets = [0, 0], sizes = [16, 128], strides = [1, 1]} : vector<24x128xf32> to vector<16x128xf32>
    %416 = arith.mulf %415, %16 : vector<16x128xf32>
    %417 = arith.addf %412, %416 : vector<16x128xf32>
    %418 = vector.extract_strided_slice %414 {offsets = [1, 0], sizes = [16, 128], strides = [1, 1]} : vector<24x128xf32> to vector<16x128xf32>
    %419 = arith.mulf %418, %19 : vector<16x128xf32>
    %420 = arith.addf %417, %419 : vector<16x128xf32>
    %421 = vector.extract_strided_slice %414 {offsets = [2, 0], sizes = [16, 128], strides = [1, 1]} : vector<24x128xf32> to vector<16x128xf32>
    %422 = arith.mulf %421, %22 : vector<16x128xf32>
    %423 = arith.addf %420, %422 : vector<16x128xf32>
    %c6_154 = arith.constant 6 : index
    %c0_155 = arith.constant 0 : index
    %c0_156 = arith.constant 0 : index
    %424 = vector.load %arg7[%c6_154, %c0_155, %c0_156] : memref<18x24x128xf32, #tpu.memory_space<vmem>>, vector<1x24x128xf32>
    %425 = vector.shape_cast %424 : vector<1x24x128xf32> to vector<24x128xf32>
    %426 = vector.extract_strided_slice %425 {offsets = [0, 0], sizes = [16, 128], strides = [1, 1]} : vector<24x128xf32> to vector<16x128xf32>
    %427 = arith.mulf %426, %25 : vector<16x128xf32>
    %428 = arith.addf %423, %427 : vector<16x128xf32>
    %429 = vector.extract_strided_slice %425 {offsets = [1, 0], sizes = [16, 128], strides = [1, 1]} : vector<24x128xf32> to vector<16x128xf32>
    %430 = arith.mulf %429, %28 : vector<16x128xf32>
    %431 = arith.addf %428, %430 : vector<16x128xf32>
    %432 = vector.extract_strided_slice %425 {offsets = [2, 0], sizes = [16, 128], strides = [1, 1]} : vector<24x128xf32> to vector<16x128xf32>
    %433 = arith.mulf %432, %31 : vector<16x128xf32>
    %434 = arith.addf %431, %433 : vector<16x128xf32>
    %cst_157 = arith.constant 5.000000e-01 : f32
    %435 = vector.broadcast %cst_157 : f32 to vector<16x128xf32>
    %436 = arith.mulf %435, %434 : vector<16x128xf32>
    %cst_158 = arith.constant 0.707106769 : f32
    %437 = vector.broadcast %cst_158 : f32 to vector<16x128xf32>
    %438 = arith.mulf %434, %437 : vector<16x128xf32>
    %439 = math.absf %438 : vector<16x128xf32>
    %cst_159 = arith.constant 0.327591091 : f32
    %440 = vector.broadcast %cst_159 : f32 to vector<16x128xf32>
    %441 = arith.mulf %440, %439 : vector<16x128xf32>
    %cst_160 = arith.constant 1.000000e+00 : f32
    %442 = vector.broadcast %cst_160 : f32 to vector<16x128xf32>
    %443 = arith.addf %442, %441 : vector<16x128xf32>
    %cst_161 = arith.constant 1.000000e+00 : f32
    %444 = vector.broadcast %cst_161 : f32 to vector<16x128xf32>
    %445 = arith.divf %444, %443 : vector<16x128xf32>
    %cst_162 = arith.constant 1.06140542 : f32
    %446 = vector.broadcast %cst_162 : f32 to vector<16x128xf32>
    %447 = arith.mulf %446, %445 : vector<16x128xf32>
    %cst_163 = arith.constant -1.45315206 : f32
    %448 = vector.broadcast %cst_163 : f32 to vector<16x128xf32>
    %449 = arith.addf %447, %448 : vector<16x128xf32>
    %450 = arith.mulf %449, %445 : vector<16x128xf32>
    %cst_164 = arith.constant 1.42141378 : f32
    %451 = vector.broadcast %cst_164 : f32 to vector<16x128xf32>
    %452 = arith.addf %450, %451 : vector<16x128xf32>
    %453 = arith.mulf %452, %445 : vector<16x128xf32>
    %cst_165 = arith.constant -0.284496725 : f32
    %454 = vector.broadcast %cst_165 : f32 to vector<16x128xf32>
    %455 = arith.addf %453, %454 : vector<16x128xf32>
    %456 = arith.mulf %455, %445 : vector<16x128xf32>
    %cst_166 = arith.constant 0.254829586 : f32
    %457 = vector.broadcast %cst_166 : f32 to vector<16x128xf32>
    %458 = arith.addf %456, %457 : vector<16x128xf32>
    %459 = arith.mulf %458, %445 : vector<16x128xf32>
    %cst_167 = arith.constant 0.000000e+00 : f32
    %460 = vector.broadcast %cst_167 : f32 to vector<16x128xf32>
    %461 = arith.subf %460, %439 : vector<16x128xf32>
    %462 = arith.mulf %461, %439 : vector<16x128xf32>
    %463 = math.exp %462 : vector<16x128xf32>
    %464 = arith.mulf %459, %463 : vector<16x128xf32>
    %cst_168 = arith.constant 1.000000e+00 : f32
    %465 = vector.broadcast %cst_168 : f32 to vector<16x128xf32>
    %466 = arith.subf %465, %464 : vector<16x128xf32>
    %cst_169 = arith.constant 0.000000e+00 : f32
    %467 = vector.broadcast %cst_169 : f32 to vector<16x128xf32>
    %468 = arith.cmpf oge, %438, %467 : vector<16x128xf32>
    %cst_170 = arith.constant 0.000000e+00 : f32
    %469 = vector.broadcast %cst_170 : f32 to vector<16x128xf32>
    %470 = arith.subf %469, %466 : vector<16x128xf32>
    %471 = arith.select %468, %466, %470 : vector<16x128xi1>, vector<16x128xf32>
    %cst_171 = arith.constant 1.000000e+00 : f32
    %472 = vector.broadcast %cst_171 : f32 to vector<16x128xf32>
    %473 = arith.addf %472, %471 : vector<16x128xf32>
    %474 = arith.mulf %436, %473 : vector<16x128xf32>
    %c64 = arith.constant 64 : index
    %c0_172 = arith.constant 0 : index
    %475 = vector.load %arg8[%c64, %c0_172] : memref<256x128xf32, #tpu.memory_space<vmem>>, vector<16x128xf32>
    tpu.vector_store %arg8[%c64, %c0_172], %474 {strides = array<i32>} : memref<256x128xf32, #tpu.memory_space<vmem>>, vector<16x128xf32>,
    %c5_173 = arith.constant 5 : index
    %c0_174 = arith.constant 0 : index
    %c0_175 = arith.constant 0 : index
    %476 = vector.load %arg7[%c5_173, %c0_174, %c0_175] : memref<18x24x128xf32, #tpu.memory_space<vmem>>, vector<1x24x128xf32>
    %477 = vector.shape_cast %476 : vector<1x24x128xf32> to vector<24x128xf32>
    %478 = vector.extract_strided_slice %477 {offsets = [0, 0], sizes = [16, 128], strides = [1, 1]} : vector<24x128xf32> to vector<16x128xf32>
    %479 = arith.mulf %478, %7 : vector<16x128xf32>
    %480 = arith.addf %34, %479 : vector<16x128xf32>
    %481 = vector.extract_strided_slice %477 {offsets = [1, 0], sizes = [16, 128], strides = [1, 1]} : vector<24x128xf32> to vector<16x128xf32>
    %482 = arith.mulf %481, %10 : vector<16x128xf32>
    %483 = arith.addf %480, %482 : vector<16x128xf32>
    %484 = vector.extract_strided_slice %477 {offsets = [2, 0], sizes = [16, 128], strides = [1, 1]} : vector<24x128xf32> to vector<16x128xf32>
    %485 = arith.mulf %484, %13 : vector<16x128xf32>
    %486 = arith.addf %483, %485 : vector<16x128xf32>
    %c6_176 = arith.constant 6 : index
    %c0_177 = arith.constant 0 : index
    %c0_178 = arith.constant 0 : index
    %487 = vector.load %arg7[%c6_176, %c0_177, %c0_178] : memref<18x24x128xf32, #tpu.memory_space<vmem>>, vector<1x24x128xf32>
    %488 = vector.shape_cast %487 : vector<1x24x128xf32> to vector<24x128xf32>
    %489 = vector.extract_strided_slice %488 {offsets = [0, 0], sizes = [16, 128], strides = [1, 1]} : vector<24x128xf32> to vector<16x128xf32>
    %490 = arith.mulf %489, %16 : vector<16x128xf32>
    %491 = arith.addf %486, %490 : vector<16x128xf32>
    %492 = vector.extract_strided_slice %488 {offsets = [1, 0], sizes = [16, 128], strides = [1, 1]} : vector<24x128xf32> to vector<16x128xf32>
    %493 = arith.mulf %492, %19 : vector<16x128xf32>
    %494 = arith.addf %491, %493 : vector<16x128xf32>
    %495 = vector.extract_strided_slice %488 {offsets = [2, 0], sizes = [16, 128], strides = [1, 1]} : vector<24x128xf32> to vector<16x128xf32>
    %496 = arith.mulf %495, %22 : vector<16x128xf32>
    %497 = arith.addf %494, %496 : vector<16x128xf32>
    %c7_179 = arith.constant 7 : index
    %c0_180 = arith.constant 0 : index
    %c0_181 = arith.constant 0 : index
    %498 = vector.load %arg7[%c7_179, %c0_180, %c0_181] : memref<18x24x128xf32, #tpu.memory_space<vmem>>, vector<1x24x128xf32>
    %499 = vector.shape_cast %498 : vector<1x24x128xf32> to vector<24x128xf32>
    %500 = vector.extract_strided_slice %499 {offsets = [0, 0], sizes = [16, 128], strides = [1, 1]} : vector<24x128xf32> to vector<16x128xf32>
    %501 = arith.mulf %500, %25 : vector<16x128xf32>
    %502 = arith.addf %497, %501 : vector<16x128xf32>
    %503 = vector.extract_strided_slice %499 {offsets = [1, 0], sizes = [16, 128], strides = [1, 1]} : vector<24x128xf32> to vector<16x128xf32>
    %504 = arith.mulf %503, %28 : vector<16x128xf32>
    %505 = arith.addf %502, %504 : vector<16x128xf32>
    %506 = vector.extract_strided_slice %499 {offsets = [2, 0], sizes = [16, 128], strides = [1, 1]} : vector<24x128xf32> to vector<16x128xf32>
    %507 = arith.mulf %506, %31 : vector<16x128xf32>
    %508 = arith.addf %505, %507 : vector<16x128xf32>
    %cst_182 = arith.constant 5.000000e-01 : f32
    %509 = vector.broadcast %cst_182 : f32 to vector<16x128xf32>
    %510 = arith.mulf %509, %508 : vector<16x128xf32>
    %cst_183 = arith.constant 0.707106769 : f32
    %511 = vector.broadcast %cst_183 : f32 to vector<16x128xf32>
    %512 = arith.mulf %508, %511 : vector<16x128xf32>
    %513 = math.absf %512 : vector<16x128xf32>
    %cst_184 = arith.constant 0.327591091 : f32
    %514 = vector.broadcast %cst_184 : f32 to vector<16x128xf32>
    %515 = arith.mulf %514, %513 : vector<16x128xf32>
    %cst_185 = arith.constant 1.000000e+00 : f32
    %516 = vector.broadcast %cst_185 : f32 to vector<16x128xf32>
    %517 = arith.addf %516, %515 : vector<16x128xf32>
    %cst_186 = arith.constant 1.000000e+00 : f32
    %518 = vector.broadcast %cst_186 : f32 to vector<16x128xf32>
    %519 = arith.divf %518, %517 : vector<16x128xf32>
    %cst_187 = arith.constant 1.06140542 : f32
    %520 = vector.broadcast %cst_187 : f32 to vector<16x128xf32>
    %521 = arith.mulf %520, %519 : vector<16x128xf32>
    %cst_188 = arith.constant -1.45315206 : f32
    %522 = vector.broadcast %cst_188 : f32 to vector<16x128xf32>
    %523 = arith.addf %521, %522 : vector<16x128xf32>
    %524 = arith.mulf %523, %519 : vector<16x128xf32>
    %cst_189 = arith.constant 1.42141378 : f32
    %525 = vector.broadcast %cst_189 : f32 to vector<16x128xf32>
    %526 = arith.addf %524, %525 : vector<16x128xf32>
    %527 = arith.mulf %526, %519 : vector<16x128xf32>
    %cst_190 = arith.constant -0.284496725 : f32
    %528 = vector.broadcast %cst_190 : f32 to vector<16x128xf32>
    %529 = arith.addf %527, %528 : vector<16x128xf32>
    %530 = arith.mulf %529, %519 : vector<16x128xf32>
    %cst_191 = arith.constant 0.254829586 : f32
    %531 = vector.broadcast %cst_191 : f32 to vector<16x128xf32>
    %532 = arith.addf %530, %531 : vector<16x128xf32>
    %533 = arith.mulf %532, %519 : vector<16x128xf32>
    %cst_192 = arith.constant 0.000000e+00 : f32
    %534 = vector.broadcast %cst_192 : f32 to vector<16x128xf32>
    %535 = arith.subf %534, %513 : vector<16x128xf32>
    %536 = arith.mulf %535, %513 : vector<16x128xf32>
    %537 = math.exp %536 : vector<16x128xf32>
    %538 = arith.mulf %533, %537 : vector<16x128xf32>
    %cst_193 = arith.constant 1.000000e+00 : f32
    %539 = vector.broadcast %cst_193 : f32 to vector<16x128xf32>
    %540 = arith.subf %539, %538 : vector<16x128xf32>
    %cst_194 = arith.constant 0.000000e+00 : f32
    %541 = vector.broadcast %cst_194 : f32 to vector<16x128xf32>
    %542 = arith.cmpf oge, %512, %541 : vector<16x128xf32>
    %cst_195 = arith.constant 0.000000e+00 : f32
    %543 = vector.broadcast %cst_195 : f32 to vector<16x128xf32>
    %544 = arith.subf %543, %540 : vector<16x128xf32>
    %545 = arith.select %542, %540, %544 : vector<16x128xi1>, vector<16x128xf32>
    %cst_196 = arith.constant 1.000000e+00 : f32
    %546 = vector.broadcast %cst_196 : f32 to vector<16x128xf32>
    %547 = arith.addf %546, %545 : vector<16x128xf32>
    %548 = arith.mulf %510, %547 : vector<16x128xf32>
    %c80 = arith.constant 80 : index
    %c0_197 = arith.constant 0 : index
    %549 = vector.load %arg8[%c80, %c0_197] : memref<256x128xf32, #tpu.memory_space<vmem>>, vector<16x128xf32>
    tpu.vector_store %arg8[%c80, %c0_197], %548 {strides = array<i32>} : memref<256x128xf32, #tpu.memory_space<vmem>>, vector<16x128xf32>,
    %c6_198 = arith.constant 6 : index
    %c0_199 = arith.constant 0 : index
    %c0_200 = arith.constant 0 : index
    %550 = vector.load %arg7[%c6_198, %c0_199, %c0_200] : memref<18x24x128xf32, #tpu.memory_space<vmem>>, vector<1x24x128xf32>
    %551 = vector.shape_cast %550 : vector<1x24x128xf32> to vector<24x128xf32>
    %552 = vector.extract_strided_slice %551 {offsets = [0, 0], sizes = [16, 128], strides = [1, 1]} : vector<24x128xf32> to vector<16x128xf32>
    %553 = arith.mulf %552, %7 : vector<16x128xf32>
    %554 = arith.addf %34, %553 : vector<16x128xf32>
    %555 = vector.extract_strided_slice %551 {offsets = [1, 0], sizes = [16, 128], strides = [1, 1]} : vector<24x128xf32> to vector<16x128xf32>
    %556 = arith.mulf %555, %10 : vector<16x128xf32>
    %557 = arith.addf %554, %556 : vector<16x128xf32>
    %558 = vector.extract_strided_slice %551 {offsets = [2, 0], sizes = [16, 128], strides = [1, 1]} : vector<24x128xf32> to vector<16x128xf32>
    %559 = arith.mulf %558, %13 : vector<16x128xf32>
    %560 = arith.addf %557, %559 : vector<16x128xf32>
    %c7_201 = arith.constant 7 : index
    %c0_202 = arith.constant 0 : index
    %c0_203 = arith.constant 0 : index
    %561 = vector.load %arg7[%c7_201, %c0_202, %c0_203] : memref<18x24x128xf32, #tpu.memory_space<vmem>>, vector<1x24x128xf32>
    %562 = vector.shape_cast %561 : vector<1x24x128xf32> to vector<24x128xf32>
    %563 = vector.extract_strided_slice %562 {offsets = [0, 0], sizes = [16, 128], strides = [1, 1]} : vector<24x128xf32> to vector<16x128xf32>
    %564 = arith.mulf %563, %16 : vector<16x128xf32>
    %565 = arith.addf %560, %564 : vector<16x128xf32>
    %566 = vector.extract_strided_slice %562 {offsets = [1, 0], sizes = [16, 128], strides = [1, 1]} : vector<24x128xf32> to vector<16x128xf32>
    %567 = arith.mulf %566, %19 : vector<16x128xf32>
    %568 = arith.addf %565, %567 : vector<16x128xf32>
    %569 = vector.extract_strided_slice %562 {offsets = [2, 0], sizes = [16, 128], strides = [1, 1]} : vector<24x128xf32> to vector<16x128xf32>
    %570 = arith.mulf %569, %22 : vector<16x128xf32>
    %571 = arith.addf %568, %570 : vector<16x128xf32>
    %c8_204 = arith.constant 8 : index
    %c0_205 = arith.constant 0 : index
    %c0_206 = arith.constant 0 : index
    %572 = vector.load %arg7[%c8_204, %c0_205, %c0_206] : memref<18x24x128xf32, #tpu.memory_space<vmem>>, vector<1x24x128xf32>
    %573 = vector.shape_cast %572 : vector<1x24x128xf32> to vector<24x128xf32>
    %574 = vector.extract_strided_slice %573 {offsets = [0, 0], sizes = [16, 128], strides = [1, 1]} : vector<24x128xf32> to vector<16x128xf32>
    %575 = arith.mulf %574, %25 : vector<16x128xf32>
    %576 = arith.addf %571, %575 : vector<16x128xf32>
    %577 = vector.extract_strided_slice %573 {offsets = [1, 0], sizes = [16, 128], strides = [1, 1]} : vector<24x128xf32> to vector<16x128xf32>
    %578 = arith.mulf %577, %28 : vector<16x128xf32>
    %579 = arith.addf %576, %578 : vector<16x128xf32>
    %580 = vector.extract_strided_slice %573 {offsets = [2, 0], sizes = [16, 128], strides = [1, 1]} : vector<24x128xf32> to vector<16x128xf32>
    %581 = arith.mulf %580, %31 : vector<16x128xf32>
    %582 = arith.addf %579, %581 : vector<16x128xf32>
    %cst_207 = arith.constant 5.000000e-01 : f32
    %583 = vector.broadcast %cst_207 : f32 to vector<16x128xf32>
    %584 = arith.mulf %583, %582 : vector<16x128xf32>
    %cst_208 = arith.constant 0.707106769 : f32
    %585 = vector.broadcast %cst_208 : f32 to vector<16x128xf32>
    %586 = arith.mulf %582, %585 : vector<16x128xf32>
    %587 = math.absf %586 : vector<16x128xf32>
    %cst_209 = arith.constant 0.327591091 : f32
    %588 = vector.broadcast %cst_209 : f32 to vector<16x128xf32>
    %589 = arith.mulf %588, %587 : vector<16x128xf32>
    %cst_210 = arith.constant 1.000000e+00 : f32
    %590 = vector.broadcast %cst_210 : f32 to vector<16x128xf32>
    %591 = arith.addf %590, %589 : vector<16x128xf32>
    %cst_211 = arith.constant 1.000000e+00 : f32
    %592 = vector.broadcast %cst_211 : f32 to vector<16x128xf32>
    %593 = arith.divf %592, %591 : vector<16x128xf32>
    %cst_212 = arith.constant 1.06140542 : f32
    %594 = vector.broadcast %cst_212 : f32 to vector<16x128xf32>
    %595 = arith.mulf %594, %593 : vector<16x128xf32>
    %cst_213 = arith.constant -1.45315206 : f32
    %596 = vector.broadcast %cst_213 : f32 to vector<16x128xf32>
    %597 = arith.addf %595, %596 : vector<16x128xf32>
    %598 = arith.mulf %597, %593 : vector<16x128xf32>
    %cst_214 = arith.constant 1.42141378 : f32
    %599 = vector.broadcast %cst_214 : f32 to vector<16x128xf32>
    %600 = arith.addf %598, %599 : vector<16x128xf32>
    %601 = arith.mulf %600, %593 : vector<16x128xf32>
    %cst_215 = arith.constant -0.284496725 : f32
    %602 = vector.broadcast %cst_215 : f32 to vector<16x128xf32>
    %603 = arith.addf %601, %602 : vector<16x128xf32>
    %604 = arith.mulf %603, %593 : vector<16x128xf32>
    %cst_216 = arith.constant 0.254829586 : f32
    %605 = vector.broadcast %cst_216 : f32 to vector<16x128xf32>
    %606 = arith.addf %604, %605 : vector<16x128xf32>
    %607 = arith.mulf %606, %593 : vector<16x128xf32>
    %cst_217 = arith.constant 0.000000e+00 : f32
    %608 = vector.broadcast %cst_217 : f32 to vector<16x128xf32>
    %609 = arith.subf %608, %587 : vector<16x128xf32>
    %610 = arith.mulf %609, %587 : vector<16x128xf32>
    %611 = math.exp %610 : vector<16x128xf32>
    %612 = arith.mulf %607, %611 : vector<16x128xf32>
    %cst_218 = arith.constant 1.000000e+00 : f32
    %613 = vector.broadcast %cst_218 : f32 to vector<16x128xf32>
    %614 = arith.subf %613, %612 : vector<16x128xf32>
    %cst_219 = arith.constant 0.000000e+00 : f32
    %615 = vector.broadcast %cst_219 : f32 to vector<16x128xf32>
    %616 = arith.cmpf oge, %586, %615 : vector<16x128xf32>
    %cst_220 = arith.constant 0.000000e+00 : f32
    %617 = vector.broadcast %cst_220 : f32 to vector<16x128xf32>
    %618 = arith.subf %617, %614 : vector<16x128xf32>
    %619 = arith.select %616, %614, %618 : vector<16x128xi1>, vector<16x128xf32>
    %cst_221 = arith.constant 1.000000e+00 : f32
    %620 = vector.broadcast %cst_221 : f32 to vector<16x128xf32>
    %621 = arith.addf %620, %619 : vector<16x128xf32>
    %622 = arith.mulf %584, %621 : vector<16x128xf32>
    %c96 = arith.constant 96 : index
    %c0_222 = arith.constant 0 : index
    %623 = vector.load %arg8[%c96, %c0_222] : memref<256x128xf32, #tpu.memory_space<vmem>>, vector<16x128xf32>
    tpu.vector_store %arg8[%c96, %c0_222], %622 {strides = array<i32>} : memref<256x128xf32, #tpu.memory_space<vmem>>, vector<16x128xf32>,
    %c7_223 = arith.constant 7 : index
    %c0_224 = arith.constant 0 : index
    %c0_225 = arith.constant 0 : index
    %624 = vector.load %arg7[%c7_223, %c0_224, %c0_225] : memref<18x24x128xf32, #tpu.memory_space<vmem>>, vector<1x24x128xf32>
    %625 = vector.shape_cast %624 : vector<1x24x128xf32> to vector<24x128xf32>
    %626 = vector.extract_strided_slice %625 {offsets = [0, 0], sizes = [16, 128], strides = [1, 1]} : vector<24x128xf32> to vector<16x128xf32>
    %627 = arith.mulf %626, %7 : vector<16x128xf32>
    %628 = arith.addf %34, %627 : vector<16x128xf32>
    %629 = vector.extract_strided_slice %625 {offsets = [1, 0], sizes = [16, 128], strides = [1, 1]} : vector<24x128xf32> to vector<16x128xf32>
    %630 = arith.mulf %629, %10 : vector<16x128xf32>
    %631 = arith.addf %628, %630 : vector<16x128xf32>
    %632 = vector.extract_strided_slice %625 {offsets = [2, 0], sizes = [16, 128], strides = [1, 1]} : vector<24x128xf32> to vector<16x128xf32>
    %633 = arith.mulf %632, %13 : vector<16x128xf32>
    %634 = arith.addf %631, %633 : vector<16x128xf32>
    %c8_226 = arith.constant 8 : index
    %c0_227 = arith.constant 0 : index
    %c0_228 = arith.constant 0 : index
    %635 = vector.load %arg7[%c8_226, %c0_227, %c0_228] : memref<18x24x128xf32, #tpu.memory_space<vmem>>, vector<1x24x128xf32>
    %636 = vector.shape_cast %635 : vector<1x24x128xf32> to vector<24x128xf32>
    %637 = vector.extract_strided_slice %636 {offsets = [0, 0], sizes = [16, 128], strides = [1, 1]} : vector<24x128xf32> to vector<16x128xf32>
    %638 = arith.mulf %637, %16 : vector<16x128xf32>
    %639 = arith.addf %634, %638 : vector<16x128xf32>
    %640 = vector.extract_strided_slice %636 {offsets = [1, 0], sizes = [16, 128], strides = [1, 1]} : vector<24x128xf32> to vector<16x128xf32>
    %641 = arith.mulf %640, %19 : vector<16x128xf32>
    %642 = arith.addf %639, %641 : vector<16x128xf32>
    %643 = vector.extract_strided_slice %636 {offsets = [2, 0], sizes = [16, 128], strides = [1, 1]} : vector<24x128xf32> to vector<16x128xf32>
    %644 = arith.mulf %643, %22 : vector<16x128xf32>
    %645 = arith.addf %642, %644 : vector<16x128xf32>
    %c9_229 = arith.constant 9 : index
    %c0_230 = arith.constant 0 : index
    %c0_231 = arith.constant 0 : index
    %646 = vector.load %arg7[%c9_229, %c0_230, %c0_231] : memref<18x24x128xf32, #tpu.memory_space<vmem>>, vector<1x24x128xf32>
    %647 = vector.shape_cast %646 : vector<1x24x128xf32> to vector<24x128xf32>
    %648 = vector.extract_strided_slice %647 {offsets = [0, 0], sizes = [16, 128], strides = [1, 1]} : vector<24x128xf32> to vector<16x128xf32>
    %649 = arith.mulf %648, %25 : vector<16x128xf32>
    %650 = arith.addf %645, %649 : vector<16x128xf32>
    %651 = vector.extract_strided_slice %647 {offsets = [1, 0], sizes = [16, 128], strides = [1, 1]} : vector<24x128xf32> to vector<16x128xf32>
    %652 = arith.mulf %651, %28 : vector<16x128xf32>
    %653 = arith.addf %650, %652 : vector<16x128xf32>
    %654 = vector.extract_strided_slice %647 {offsets = [2, 0], sizes = [16, 128], strides = [1, 1]} : vector<24x128xf32> to vector<16x128xf32>
    %655 = arith.mulf %654, %31 : vector<16x128xf32>
    %656 = arith.addf %653, %655 : vector<16x128xf32>
    %cst_232 = arith.constant 5.000000e-01 : f32
    %657 = vector.broadcast %cst_232 : f32 to vector<16x128xf32>
    %658 = arith.mulf %657, %656 : vector<16x128xf32>
    %cst_233 = arith.constant 0.707106769 : f32
    %659 = vector.broadcast %cst_233 : f32 to vector<16x128xf32>
    %660 = arith.mulf %656, %659 : vector<16x128xf32>
    %661 = math.absf %660 : vector<16x128xf32>
    %cst_234 = arith.constant 0.327591091 : f32
    %662 = vector.broadcast %cst_234 : f32 to vector<16x128xf32>
    %663 = arith.mulf %662, %661 : vector<16x128xf32>
    %cst_235 = arith.constant 1.000000e+00 : f32
    %664 = vector.broadcast %cst_235 : f32 to vector<16x128xf32>
    %665 = arith.addf %664, %663 : vector<16x128xf32>
    %cst_236 = arith.constant 1.000000e+00 : f32
    %666 = vector.broadcast %cst_236 : f32 to vector<16x128xf32>
    %667 = arith.divf %666, %665 : vector<16x128xf32>
    %cst_237 = arith.constant 1.06140542 : f32
    %668 = vector.broadcast %cst_237 : f32 to vector<16x128xf32>
    %669 = arith.mulf %668, %667 : vector<16x128xf32>
    %cst_238 = arith.constant -1.45315206 : f32
    %670 = vector.broadcast %cst_238 : f32 to vector<16x128xf32>
    %671 = arith.addf %669, %670 : vector<16x128xf32>
    %672 = arith.mulf %671, %667 : vector<16x128xf32>
    %cst_239 = arith.constant 1.42141378 : f32
    %673 = vector.broadcast %cst_239 : f32 to vector<16x128xf32>
    %674 = arith.addf %672, %673 : vector<16x128xf32>
    %675 = arith.mulf %674, %667 : vector<16x128xf32>
    %cst_240 = arith.constant -0.284496725 : f32
    %676 = vector.broadcast %cst_240 : f32 to vector<16x128xf32>
    %677 = arith.addf %675, %676 : vector<16x128xf32>
    %678 = arith.mulf %677, %667 : vector<16x128xf32>
    %cst_241 = arith.constant 0.254829586 : f32
    %679 = vector.broadcast %cst_241 : f32 to vector<16x128xf32>
    %680 = arith.addf %678, %679 : vector<16x128xf32>
    %681 = arith.mulf %680, %667 : vector<16x128xf32>
    %cst_242 = arith.constant 0.000000e+00 : f32
    %682 = vector.broadcast %cst_242 : f32 to vector<16x128xf32>
    %683 = arith.subf %682, %661 : vector<16x128xf32>
    %684 = arith.mulf %683, %661 : vector<16x128xf32>
    %685 = math.exp %684 : vector<16x128xf32>
    %686 = arith.mulf %681, %685 : vector<16x128xf32>
    %cst_243 = arith.constant 1.000000e+00 : f32
    %687 = vector.broadcast %cst_243 : f32 to vector<16x128xf32>
    %688 = arith.subf %687, %686 : vector<16x128xf32>
    %cst_244 = arith.constant 0.000000e+00 : f32
    %689 = vector.broadcast %cst_244 : f32 to vector<16x128xf32>
    %690 = arith.cmpf oge, %660, %689 : vector<16x128xf32>
    %cst_245 = arith.constant 0.000000e+00 : f32
    %691 = vector.broadcast %cst_245 : f32 to vector<16x128xf32>
    %692 = arith.subf %691, %688 : vector<16x128xf32>
    %693 = arith.select %690, %688, %692 : vector<16x128xi1>, vector<16x128xf32>
    %cst_246 = arith.constant 1.000000e+00 : f32
    %694 = vector.broadcast %cst_246 : f32 to vector<16x128xf32>
    %695 = arith.addf %694, %693 : vector<16x128xf32>
    %696 = arith.mulf %658, %695 : vector<16x128xf32>
    %c112 = arith.constant 112 : index
    %c0_247 = arith.constant 0 : index
    %697 = vector.load %arg8[%c112, %c0_247] : memref<256x128xf32, #tpu.memory_space<vmem>>, vector<16x128xf32>
    tpu.vector_store %arg8[%c112, %c0_247], %696 {strides = array<i32>} : memref<256x128xf32, #tpu.memory_space<vmem>>, vector<16x128xf32>,
    %c8_248 = arith.constant 8 : index
    %c0_249 = arith.constant 0 : index
    %c0_250 = arith.constant 0 : index
    %698 = vector.load %arg7[%c8_248, %c0_249, %c0_250] : memref<18x24x128xf32, #tpu.memory_space<vmem>>, vector<1x24x128xf32>
    %699 = vector.shape_cast %698 : vector<1x24x128xf32> to vector<24x128xf32>
    %700 = vector.extract_strided_slice %699 {offsets = [0, 0], sizes = [16, 128], strides = [1, 1]} : vector<24x128xf32> to vector<16x128xf32>
    %701 = arith.mulf %700, %7 : vector<16x128xf32>
    %702 = arith.addf %34, %701 : vector<16x128xf32>
    %703 = vector.extract_strided_slice %699 {offsets = [1, 0], sizes = [16, 128], strides = [1, 1]} : vector<24x128xf32> to vector<16x128xf32>
    %704 = arith.mulf %703, %10 : vector<16x128xf32>
    %705 = arith.addf %702, %704 : vector<16x128xf32>
    %706 = vector.extract_strided_slice %699 {offsets = [2, 0], sizes = [16, 128], strides = [1, 1]} : vector<24x128xf32> to vector<16x128xf32>
    %707 = arith.mulf %706, %13 : vector<16x128xf32>
    %708 = arith.addf %705, %707 : vector<16x128xf32>
    %c9_251 = arith.constant 9 : index
    %c0_252 = arith.constant 0 : index
    %c0_253 = arith.constant 0 : index
    %709 = vector.load %arg7[%c9_251, %c0_252, %c0_253] : memref<18x24x128xf32, #tpu.memory_space<vmem>>, vector<1x24x128xf32>
    %710 = vector.shape_cast %709 : vector<1x24x128xf32> to vector<24x128xf32>
    %711 = vector.extract_strided_slice %710 {offsets = [0, 0], sizes = [16, 128], strides = [1, 1]} : vector<24x128xf32> to vector<16x128xf32>
    %712 = arith.mulf %711, %16 : vector<16x128xf32>
    %713 = arith.addf %708, %712 : vector<16x128xf32>
    %714 = vector.extract_strided_slice %710 {offsets = [1, 0], sizes = [16, 128], strides = [1, 1]} : vector<24x128xf32> to vector<16x128xf32>
    %715 = arith.mulf %714, %19 : vector<16x128xf32>
    %716 = arith.addf %713, %715 : vector<16x128xf32>
    %717 = vector.extract_strided_slice %710 {offsets = [2, 0], sizes = [16, 128], strides = [1, 1]} : vector<24x128xf32> to vector<16x128xf32>
    %718 = arith.mulf %717, %22 : vector<16x128xf32>
    %719 = arith.addf %716, %718 : vector<16x128xf32>
    %c10_254 = arith.constant 10 : index
    %c0_255 = arith.constant 0 : index
    %c0_256 = arith.constant 0 : index
    %720 = vector.load %arg7[%c10_254, %c0_255, %c0_256] : memref<18x24x128xf32, #tpu.memory_space<vmem>>, vector<1x24x128xf32>
    %721 = vector.shape_cast %720 : vector<1x24x128xf32> to vector<24x128xf32>
    %722 = vector.extract_strided_slice %721 {offsets = [0, 0], sizes = [16, 128], strides = [1, 1]} : vector<24x128xf32> to vector<16x128xf32>
    %723 = arith.mulf %722, %25 : vector<16x128xf32>
    %724 = arith.addf %719, %723 : vector<16x128xf32>
    %725 = vector.extract_strided_slice %721 {offsets = [1, 0], sizes = [16, 128], strides = [1, 1]} : vector<24x128xf32> to vector<16x128xf32>
    %726 = arith.mulf %725, %28 : vector<16x128xf32>
    %727 = arith.addf %724, %726 : vector<16x128xf32>
    %728 = vector.extract_strided_slice %721 {offsets = [2, 0], sizes = [16, 128], strides = [1, 1]} : vector<24x128xf32> to vector<16x128xf32>
    %729 = arith.mulf %728, %31 : vector<16x128xf32>
    %730 = arith.addf %727, %729 : vector<16x128xf32>
    %cst_257 = arith.constant 5.000000e-01 : f32
    %731 = vector.broadcast %cst_257 : f32 to vector<16x128xf32>
    %732 = arith.mulf %731, %730 : vector<16x128xf32>
    %cst_258 = arith.constant 0.707106769 : f32
    %733 = vector.broadcast %cst_258 : f32 to vector<16x128xf32>
    %734 = arith.mulf %730, %733 : vector<16x128xf32>
    %735 = math.absf %734 : vector<16x128xf32>
    %cst_259 = arith.constant 0.327591091 : f32
    %736 = vector.broadcast %cst_259 : f32 to vector<16x128xf32>
    %737 = arith.mulf %736, %735 : vector<16x128xf32>
    %cst_260 = arith.constant 1.000000e+00 : f32
    %738 = vector.broadcast %cst_260 : f32 to vector<16x128xf32>
    %739 = arith.addf %738, %737 : vector<16x128xf32>
    %cst_261 = arith.constant 1.000000e+00 : f32
    %740 = vector.broadcast %cst_261 : f32 to vector<16x128xf32>
    %741 = arith.divf %740, %739 : vector<16x128xf32>
    %cst_262 = arith.constant 1.06140542 : f32
    %742 = vector.broadcast %cst_262 : f32 to vector<16x128xf32>
    %743 = arith.mulf %742, %741 : vector<16x128xf32>
    %cst_263 = arith.constant -1.45315206 : f32
    %744 = vector.broadcast %cst_263 : f32 to vector<16x128xf32>
    %745 = arith.addf %743, %744 : vector<16x128xf32>
    %746 = arith.mulf %745, %741 : vector<16x128xf32>
    %cst_264 = arith.constant 1.42141378 : f32
    %747 = vector.broadcast %cst_264 : f32 to vector<16x128xf32>
    %748 = arith.addf %746, %747 : vector<16x128xf32>
    %749 = arith.mulf %748, %741 : vector<16x128xf32>
    %cst_265 = arith.constant -0.284496725 : f32
    %750 = vector.broadcast %cst_265 : f32 to vector<16x128xf32>
    %751 = arith.addf %749, %750 : vector<16x128xf32>
    %752 = arith.mulf %751, %741 : vector<16x128xf32>
    %cst_266 = arith.constant 0.254829586 : f32
    %753 = vector.broadcast %cst_266 : f32 to vector<16x128xf32>
    %754 = arith.addf %752, %753 : vector<16x128xf32>
    %755 = arith.mulf %754, %741 : vector<16x128xf32>
    %cst_267 = arith.constant 0.000000e+00 : f32
    %756 = vector.broadcast %cst_267 : f32 to vector<16x128xf32>
    %757 = arith.subf %756, %735 : vector<16x128xf32>
    %758 = arith.mulf %757, %735 : vector<16x128xf32>
    %759 = math.exp %758 : vector<16x128xf32>
    %760 = arith.mulf %755, %759 : vector<16x128xf32>
    %cst_268 = arith.constant 1.000000e+00 : f32
    %761 = vector.broadcast %cst_268 : f32 to vector<16x128xf32>
    %762 = arith.subf %761, %760 : vector<16x128xf32>
    %cst_269 = arith.constant 0.000000e+00 : f32
    %763 = vector.broadcast %cst_269 : f32 to vector<16x128xf32>
    %764 = arith.cmpf oge, %734, %763 : vector<16x128xf32>
    %cst_270 = arith.constant 0.000000e+00 : f32
    %765 = vector.broadcast %cst_270 : f32 to vector<16x128xf32>
    %766 = arith.subf %765, %762 : vector<16x128xf32>
    %767 = arith.select %764, %762, %766 : vector<16x128xi1>, vector<16x128xf32>
    %cst_271 = arith.constant 1.000000e+00 : f32
    %768 = vector.broadcast %cst_271 : f32 to vector<16x128xf32>
    %769 = arith.addf %768, %767 : vector<16x128xf32>
    %770 = arith.mulf %732, %769 : vector<16x128xf32>
    %c128 = arith.constant 128 : index
    %c0_272 = arith.constant 0 : index
    %771 = vector.load %arg8[%c128, %c0_272] : memref<256x128xf32, #tpu.memory_space<vmem>>, vector<16x128xf32>
    tpu.vector_store %arg8[%c128, %c0_272], %770 {strides = array<i32>} : memref<256x128xf32, #tpu.memory_space<vmem>>, vector<16x128xf32>,
    %c9_273 = arith.constant 9 : index
    %c0_274 = arith.constant 0 : index
    %c0_275 = arith.constant 0 : index
    %772 = vector.load %arg7[%c9_273, %c0_274, %c0_275] : memref<18x24x128xf32, #tpu.memory_space<vmem>>, vector<1x24x128xf32>
    %773 = vector.shape_cast %772 : vector<1x24x128xf32> to vector<24x128xf32>
    %774 = vector.extract_strided_slice %773 {offsets = [0, 0], sizes = [16, 128], strides = [1, 1]} : vector<24x128xf32> to vector<16x128xf32>
    %775 = arith.mulf %774, %7 : vector<16x128xf32>
    %776 = arith.addf %34, %775 : vector<16x128xf32>
    %777 = vector.extract_strided_slice %773 {offsets = [1, 0], sizes = [16, 128], strides = [1, 1]} : vector<24x128xf32> to vector<16x128xf32>
    %778 = arith.mulf %777, %10 : vector<16x128xf32>
    %779 = arith.addf %776, %778 : vector<16x128xf32>
    %780 = vector.extract_strided_slice %773 {offsets = [2, 0], sizes = [16, 128], strides = [1, 1]} : vector<24x128xf32> to vector<16x128xf32>
    %781 = arith.mulf %780, %13 : vector<16x128xf32>
    %782 = arith.addf %779, %781 : vector<16x128xf32>
    %c10_276 = arith.constant 10 : index
    %c0_277 = arith.constant 0 : index
    %c0_278 = arith.constant 0 : index
    %783 = vector.load %arg7[%c10_276, %c0_277, %c0_278] : memref<18x24x128xf32, #tpu.memory_space<vmem>>, vector<1x24x128xf32>
    %784 = vector.shape_cast %783 : vector<1x24x128xf32> to vector<24x128xf32>
    %785 = vector.extract_strided_slice %784 {offsets = [0, 0], sizes = [16, 128], strides = [1, 1]} : vector<24x128xf32> to vector<16x128xf32>
    %786 = arith.mulf %785, %16 : vector<16x128xf32>
    %787 = arith.addf %782, %786 : vector<16x128xf32>
    %788 = vector.extract_strided_slice %784 {offsets = [1, 0], sizes = [16, 128], strides = [1, 1]} : vector<24x128xf32> to vector<16x128xf32>
    %789 = arith.mulf %788, %19 : vector<16x128xf32>
    %790 = arith.addf %787, %789 : vector<16x128xf32>
    %791 = vector.extract_strided_slice %784 {offsets = [2, 0], sizes = [16, 128], strides = [1, 1]} : vector<24x128xf32> to vector<16x128xf32>
    %792 = arith.mulf %791, %22 : vector<16x128xf32>
    %793 = arith.addf %790, %792 : vector<16x128xf32>
    %c11_279 = arith.constant 11 : index
    %c0_280 = arith.constant 0 : index
    %c0_281 = arith.constant 0 : index
    %794 = vector.load %arg7[%c11_279, %c0_280, %c0_281] : memref<18x24x128xf32, #tpu.memory_space<vmem>>, vector<1x24x128xf32>
    %795 = vector.shape_cast %794 : vector<1x24x128xf32> to vector<24x128xf32>
    %796 = vector.extract_strided_slice %795 {offsets = [0, 0], sizes = [16, 128], strides = [1, 1]} : vector<24x128xf32> to vector<16x128xf32>
    %797 = arith.mulf %796, %25 : vector<16x128xf32>
    %798 = arith.addf %793, %797 : vector<16x128xf32>
    %799 = vector.extract_strided_slice %795 {offsets = [1, 0], sizes = [16, 128], strides = [1, 1]} : vector<24x128xf32> to vector<16x128xf32>
    %800 = arith.mulf %799, %28 : vector<16x128xf32>
    %801 = arith.addf %798, %800 : vector<16x128xf32>
    %802 = vector.extract_strided_slice %795 {offsets = [2, 0], sizes = [16, 128], strides = [1, 1]} : vector<24x128xf32> to vector<16x128xf32>
    %803 = arith.mulf %802, %31 : vector<16x128xf32>
    %804 = arith.addf %801, %803 : vector<16x128xf32>
    %cst_282 = arith.constant 5.000000e-01 : f32
    %805 = vector.broadcast %cst_282 : f32 to vector<16x128xf32>
    %806 = arith.mulf %805, %804 : vector<16x128xf32>
    %cst_283 = arith.constant 0.707106769 : f32
    %807 = vector.broadcast %cst_283 : f32 to vector<16x128xf32>
    %808 = arith.mulf %804, %807 : vector<16x128xf32>
    %809 = math.absf %808 : vector<16x128xf32>
    %cst_284 = arith.constant 0.327591091 : f32
    %810 = vector.broadcast %cst_284 : f32 to vector<16x128xf32>
    %811 = arith.mulf %810, %809 : vector<16x128xf32>
    %cst_285 = arith.constant 1.000000e+00 : f32
    %812 = vector.broadcast %cst_285 : f32 to vector<16x128xf32>
    %813 = arith.addf %812, %811 : vector<16x128xf32>
    %cst_286 = arith.constant 1.000000e+00 : f32
    %814 = vector.broadcast %cst_286 : f32 to vector<16x128xf32>
    %815 = arith.divf %814, %813 : vector<16x128xf32>
    %cst_287 = arith.constant 1.06140542 : f32
    %816 = vector.broadcast %cst_287 : f32 to vector<16x128xf32>
    %817 = arith.mulf %816, %815 : vector<16x128xf32>
    %cst_288 = arith.constant -1.45315206 : f32
    %818 = vector.broadcast %cst_288 : f32 to vector<16x128xf32>
    %819 = arith.addf %817, %818 : vector<16x128xf32>
    %820 = arith.mulf %819, %815 : vector<16x128xf32>
    %cst_289 = arith.constant 1.42141378 : f32
    %821 = vector.broadcast %cst_289 : f32 to vector<16x128xf32>
    %822 = arith.addf %820, %821 : vector<16x128xf32>
    %823 = arith.mulf %822, %815 : vector<16x128xf32>
    %cst_290 = arith.constant -0.284496725 : f32
    %824 = vector.broadcast %cst_290 : f32 to vector<16x128xf32>
    %825 = arith.addf %823, %824 : vector<16x128xf32>
    %826 = arith.mulf %825, %815 : vector<16x128xf32>
    %cst_291 = arith.constant 0.254829586 : f32
    %827 = vector.broadcast %cst_291 : f32 to vector<16x128xf32>
    %828 = arith.addf %826, %827 : vector<16x128xf32>
    %829 = arith.mulf %828, %815 : vector<16x128xf32>
    %cst_292 = arith.constant 0.000000e+00 : f32
    %830 = vector.broadcast %cst_292 : f32 to vector<16x128xf32>
    %831 = arith.subf %830, %809 : vector<16x128xf32>
    %832 = arith.mulf %831, %809 : vector<16x128xf32>
    %833 = math.exp %832 : vector<16x128xf32>
    %834 = arith.mulf %829, %833 : vector<16x128xf32>
    %cst_293 = arith.constant 1.000000e+00 : f32
    %835 = vector.broadcast %cst_293 : f32 to vector<16x128xf32>
    %836 = arith.subf %835, %834 : vector<16x128xf32>
    %cst_294 = arith.constant 0.000000e+00 : f32
    %837 = vector.broadcast %cst_294 : f32 to vector<16x128xf32>
    %838 = arith.cmpf oge, %808, %837 : vector<16x128xf32>
    %cst_295 = arith.constant 0.000000e+00 : f32
    %839 = vector.broadcast %cst_295 : f32 to vector<16x128xf32>
    %840 = arith.subf %839, %836 : vector<16x128xf32>
    %841 = arith.select %838, %836, %840 : vector<16x128xi1>, vector<16x128xf32>
    %cst_296 = arith.constant 1.000000e+00 : f32
    %842 = vector.broadcast %cst_296 : f32 to vector<16x128xf32>
    %843 = arith.addf %842, %841 : vector<16x128xf32>
    %844 = arith.mulf %806, %843 : vector<16x128xf32>
    %c144 = arith.constant 144 : index
    %c0_297 = arith.constant 0 : index
    %845 = vector.load %arg8[%c144, %c0_297] : memref<256x128xf32, #tpu.memory_space<vmem>>, vector<16x128xf32>
    tpu.vector_store %arg8[%c144, %c0_297], %844 {strides = array<i32>} : memref<256x128xf32, #tpu.memory_space<vmem>>, vector<16x128xf32>,
    %c10_298 = arith.constant 10 : index
    %c0_299 = arith.constant 0 : index
    %c0_300 = arith.constant 0 : index
    %846 = vector.load %arg7[%c10_298, %c0_299, %c0_300] : memref<18x24x128xf32, #tpu.memory_space<vmem>>, vector<1x24x128xf32>
    %847 = vector.shape_cast %846 : vector<1x24x128xf32> to vector<24x128xf32>
    %848 = vector.extract_strided_slice %847 {offsets = [0, 0], sizes = [16, 128], strides = [1, 1]} : vector<24x128xf32> to vector<16x128xf32>
    %849 = arith.mulf %848, %7 : vector<16x128xf32>
    %850 = arith.addf %34, %849 : vector<16x128xf32>
    %851 = vector.extract_strided_slice %847 {offsets = [1, 0], sizes = [16, 128], strides = [1, 1]} : vector<24x128xf32> to vector<16x128xf32>
    %852 = arith.mulf %851, %10 : vector<16x128xf32>
    %853 = arith.addf %850, %852 : vector<16x128xf32>
    %854 = vector.extract_strided_slice %847 {offsets = [2, 0], sizes = [16, 128], strides = [1, 1]} : vector<24x128xf32> to vector<16x128xf32>
    %855 = arith.mulf %854, %13 : vector<16x128xf32>
    %856 = arith.addf %853, %855 : vector<16x128xf32>
    %c11_301 = arith.constant 11 : index
    %c0_302 = arith.constant 0 : index
    %c0_303 = arith.constant 0 : index
    %857 = vector.load %arg7[%c11_301, %c0_302, %c0_303] : memref<18x24x128xf32, #tpu.memory_space<vmem>>, vector<1x24x128xf32>
    %858 = vector.shape_cast %857 : vector<1x24x128xf32> to vector<24x128xf32>
    %859 = vector.extract_strided_slice %858 {offsets = [0, 0], sizes = [16, 128], strides = [1, 1]} : vector<24x128xf32> to vector<16x128xf32>
    %860 = arith.mulf %859, %16 : vector<16x128xf32>
    %861 = arith.addf %856, %860 : vector<16x128xf32>
    %862 = vector.extract_strided_slice %858 {offsets = [1, 0], sizes = [16, 128], strides = [1, 1]} : vector<24x128xf32> to vector<16x128xf32>
    %863 = arith.mulf %862, %19 : vector<16x128xf32>
    %864 = arith.addf %861, %863 : vector<16x128xf32>
    %865 = vector.extract_strided_slice %858 {offsets = [2, 0], sizes = [16, 128], strides = [1, 1]} : vector<24x128xf32> to vector<16x128xf32>
    %866 = arith.mulf %865, %22 : vector<16x128xf32>
    %867 = arith.addf %864, %866 : vector<16x128xf32>
    %c12_304 = arith.constant 12 : index
    %c0_305 = arith.constant 0 : index
    %c0_306 = arith.constant 0 : index
    %868 = vector.load %arg7[%c12_304, %c0_305, %c0_306] : memref<18x24x128xf32, #tpu.memory_space<vmem>>, vector<1x24x128xf32>
    %869 = vector.shape_cast %868 : vector<1x24x128xf32> to vector<24x128xf32>
    %870 = vector.extract_strided_slice %869 {offsets = [0, 0], sizes = [16, 128], strides = [1, 1]} : vector<24x128xf32> to vector<16x128xf32>
    %871 = arith.mulf %870, %25 : vector<16x128xf32>
    %872 = arith.addf %867, %871 : vector<16x128xf32>
    %873 = vector.extract_strided_slice %869 {offsets = [1, 0], sizes = [16, 128], strides = [1, 1]} : vector<24x128xf32> to vector<16x128xf32>
    %874 = arith.mulf %873, %28 : vector<16x128xf32>
    %875 = arith.addf %872, %874 : vector<16x128xf32>
    %876 = vector.extract_strided_slice %869 {offsets = [2, 0], sizes = [16, 128], strides = [1, 1]} : vector<24x128xf32> to vector<16x128xf32>
    %877 = arith.mulf %876, %31 : vector<16x128xf32>
    %878 = arith.addf %875, %877 : vector<16x128xf32>
    %cst_307 = arith.constant 5.000000e-01 : f32
    %879 = vector.broadcast %cst_307 : f32 to vector<16x128xf32>
    %880 = arith.mulf %879, %878 : vector<16x128xf32>
    %cst_308 = arith.constant 0.707106769 : f32
    %881 = vector.broadcast %cst_308 : f32 to vector<16x128xf32>
    %882 = arith.mulf %878, %881 : vector<16x128xf32>
    %883 = math.absf %882 : vector<16x128xf32>
    %cst_309 = arith.constant 0.327591091 : f32
    %884 = vector.broadcast %cst_309 : f32 to vector<16x128xf32>
    %885 = arith.mulf %884, %883 : vector<16x128xf32>
    %cst_310 = arith.constant 1.000000e+00 : f32
    %886 = vector.broadcast %cst_310 : f32 to vector<16x128xf32>
    %887 = arith.addf %886, %885 : vector<16x128xf32>
    %cst_311 = arith.constant 1.000000e+00 : f32
    %888 = vector.broadcast %cst_311 : f32 to vector<16x128xf32>
    %889 = arith.divf %888, %887 : vector<16x128xf32>
    %cst_312 = arith.constant 1.06140542 : f32
    %890 = vector.broadcast %cst_312 : f32 to vector<16x128xf32>
    %891 = arith.mulf %890, %889 : vector<16x128xf32>
    %cst_313 = arith.constant -1.45315206 : f32
    %892 = vector.broadcast %cst_313 : f32 to vector<16x128xf32>
    %893 = arith.addf %891, %892 : vector<16x128xf32>
    %894 = arith.mulf %893, %889 : vector<16x128xf32>
    %cst_314 = arith.constant 1.42141378 : f32
    %895 = vector.broadcast %cst_314 : f32 to vector<16x128xf32>
    %896 = arith.addf %894, %895 : vector<16x128xf32>
    %897 = arith.mulf %896, %889 : vector<16x128xf32>
    %cst_315 = arith.constant -0.284496725 : f32
    %898 = vector.broadcast %cst_315 : f32 to vector<16x128xf32>
    %899 = arith.addf %897, %898 : vector<16x128xf32>
    %900 = arith.mulf %899, %889 : vector<16x128xf32>
    %cst_316 = arith.constant 0.254829586 : f32
    %901 = vector.broadcast %cst_316 : f32 to vector<16x128xf32>
    %902 = arith.addf %900, %901 : vector<16x128xf32>
    %903 = arith.mulf %902, %889 : vector<16x128xf32>
    %cst_317 = arith.constant 0.000000e+00 : f32
    %904 = vector.broadcast %cst_317 : f32 to vector<16x128xf32>
    %905 = arith.subf %904, %883 : vector<16x128xf32>
    %906 = arith.mulf %905, %883 : vector<16x128xf32>
    %907 = math.exp %906 : vector<16x128xf32>
    %908 = arith.mulf %903, %907 : vector<16x128xf32>
    %cst_318 = arith.constant 1.000000e+00 : f32
    %909 = vector.broadcast %cst_318 : f32 to vector<16x128xf32>
    %910 = arith.subf %909, %908 : vector<16x128xf32>
    %cst_319 = arith.constant 0.000000e+00 : f32
    %911 = vector.broadcast %cst_319 : f32 to vector<16x128xf32>
    %912 = arith.cmpf oge, %882, %911 : vector<16x128xf32>
    %cst_320 = arith.constant 0.000000e+00 : f32
    %913 = vector.broadcast %cst_320 : f32 to vector<16x128xf32>
    %914 = arith.subf %913, %910 : vector<16x128xf32>
    %915 = arith.select %912, %910, %914 : vector<16x128xi1>, vector<16x128xf32>
    %cst_321 = arith.constant 1.000000e+00 : f32
    %916 = vector.broadcast %cst_321 : f32 to vector<16x128xf32>
    %917 = arith.addf %916, %915 : vector<16x128xf32>
    %918 = arith.mulf %880, %917 : vector<16x128xf32>
    %c160 = arith.constant 160 : index
    %c0_322 = arith.constant 0 : index
    %919 = vector.load %arg8[%c160, %c0_322] : memref<256x128xf32, #tpu.memory_space<vmem>>, vector<16x128xf32>
    tpu.vector_store %arg8[%c160, %c0_322], %918 {strides = array<i32>} : memref<256x128xf32, #tpu.memory_space<vmem>>, vector<16x128xf32>,
    %c11_323 = arith.constant 11 : index
    %c0_324 = arith.constant 0 : index
    %c0_325 = arith.constant 0 : index
    %920 = vector.load %arg7[%c11_323, %c0_324, %c0_325] : memref<18x24x128xf32, #tpu.memory_space<vmem>>, vector<1x24x128xf32>
    %921 = vector.shape_cast %920 : vector<1x24x128xf32> to vector<24x128xf32>
    %922 = vector.extract_strided_slice %921 {offsets = [0, 0], sizes = [16, 128], strides = [1, 1]} : vector<24x128xf32> to vector<16x128xf32>
    %923 = arith.mulf %922, %7 : vector<16x128xf32>
    %924 = arith.addf %34, %923 : vector<16x128xf32>
    %925 = vector.extract_strided_slice %921 {offsets = [1, 0], sizes = [16, 128], strides = [1, 1]} : vector<24x128xf32> to vector<16x128xf32>
    %926 = arith.mulf %925, %10 : vector<16x128xf32>
    %927 = arith.addf %924, %926 : vector<16x128xf32>
    %928 = vector.extract_strided_slice %921 {offsets = [2, 0], sizes = [16, 128], strides = [1, 1]} : vector<24x128xf32> to vector<16x128xf32>
    %929 = arith.mulf %928, %13 : vector<16x128xf32>
    %930 = arith.addf %927, %929 : vector<16x128xf32>
    %c12_326 = arith.constant 12 : index
    %c0_327 = arith.constant 0 : index
    %c0_328 = arith.constant 0 : index
    %931 = vector.load %arg7[%c12_326, %c0_327, %c0_328] : memref<18x24x128xf32, #tpu.memory_space<vmem>>, vector<1x24x128xf32>
    %932 = vector.shape_cast %931 : vector<1x24x128xf32> to vector<24x128xf32>
    %933 = vector.extract_strided_slice %932 {offsets = [0, 0], sizes = [16, 128], strides = [1, 1]} : vector<24x128xf32> to vector<16x128xf32>
    %934 = arith.mulf %933, %16 : vector<16x128xf32>
    %935 = arith.addf %930, %934 : vector<16x128xf32>
    %936 = vector.extract_strided_slice %932 {offsets = [1, 0], sizes = [16, 128], strides = [1, 1]} : vector<24x128xf32> to vector<16x128xf32>
    %937 = arith.mulf %936, %19 : vector<16x128xf32>
    %938 = arith.addf %935, %937 : vector<16x128xf32>
    %939 = vector.extract_strided_slice %932 {offsets = [2, 0], sizes = [16, 128], strides = [1, 1]} : vector<24x128xf32> to vector<16x128xf32>
    %940 = arith.mulf %939, %22 : vector<16x128xf32>
    %941 = arith.addf %938, %940 : vector<16x128xf32>
    %c13_329 = arith.constant 13 : index
    %c0_330 = arith.constant 0 : index
    %c0_331 = arith.constant 0 : index
    %942 = vector.load %arg7[%c13_329, %c0_330, %c0_331] : memref<18x24x128xf32, #tpu.memory_space<vmem>>, vector<1x24x128xf32>
    %943 = vector.shape_cast %942 : vector<1x24x128xf32> to vector<24x128xf32>
    %944 = vector.extract_strided_slice %943 {offsets = [0, 0], sizes = [16, 128], strides = [1, 1]} : vector<24x128xf32> to vector<16x128xf32>
    %945 = arith.mulf %944, %25 : vector<16x128xf32>
    %946 = arith.addf %941, %945 : vector<16x128xf32>
    %947 = vector.extract_strided_slice %943 {offsets = [1, 0], sizes = [16, 128], strides = [1, 1]} : vector<24x128xf32> to vector<16x128xf32>
    %948 = arith.mulf %947, %28 : vector<16x128xf32>
    %949 = arith.addf %946, %948 : vector<16x128xf32>
    %950 = vector.extract_strided_slice %943 {offsets = [2, 0], sizes = [16, 128], strides = [1, 1]} : vector<24x128xf32> to vector<16x128xf32>
    %951 = arith.mulf %950, %31 : vector<16x128xf32>
    %952 = arith.addf %949, %951 : vector<16x128xf32>
    %cst_332 = arith.constant 5.000000e-01 : f32
    %953 = vector.broadcast %cst_332 : f32 to vector<16x128xf32>
    %954 = arith.mulf %953, %952 : vector<16x128xf32>
    %cst_333 = arith.constant 0.707106769 : f32
    %955 = vector.broadcast %cst_333 : f32 to vector<16x128xf32>
    %956 = arith.mulf %952, %955 : vector<16x128xf32>
    %957 = math.absf %956 : vector<16x128xf32>
    %cst_334 = arith.constant 0.327591091 : f32
    %958 = vector.broadcast %cst_334 : f32 to vector<16x128xf32>
    %959 = arith.mulf %958, %957 : vector<16x128xf32>
    %cst_335 = arith.constant 1.000000e+00 : f32
    %960 = vector.broadcast %cst_335 : f32 to vector<16x128xf32>
    %961 = arith.addf %960, %959 : vector<16x128xf32>
    %cst_336 = arith.constant 1.000000e+00 : f32
    %962 = vector.broadcast %cst_336 : f32 to vector<16x128xf32>
    %963 = arith.divf %962, %961 : vector<16x128xf32>
    %cst_337 = arith.constant 1.06140542 : f32
    %964 = vector.broadcast %cst_337 : f32 to vector<16x128xf32>
    %965 = arith.mulf %964, %963 : vector<16x128xf32>
    %cst_338 = arith.constant -1.45315206 : f32
    %966 = vector.broadcast %cst_338 : f32 to vector<16x128xf32>
    %967 = arith.addf %965, %966 : vector<16x128xf32>
    %968 = arith.mulf %967, %963 : vector<16x128xf32>
    %cst_339 = arith.constant 1.42141378 : f32
    %969 = vector.broadcast %cst_339 : f32 to vector<16x128xf32>
    %970 = arith.addf %968, %969 : vector<16x128xf32>
    %971 = arith.mulf %970, %963 : vector<16x128xf32>
    %cst_340 = arith.constant -0.284496725 : f32
    %972 = vector.broadcast %cst_340 : f32 to vector<16x128xf32>
    %973 = arith.addf %971, %972 : vector<16x128xf32>
    %974 = arith.mulf %973, %963 : vector<16x128xf32>
    %cst_341 = arith.constant 0.254829586 : f32
    %975 = vector.broadcast %cst_341 : f32 to vector<16x128xf32>
    %976 = arith.addf %974, %975 : vector<16x128xf32>
    %977 = arith.mulf %976, %963 : vector<16x128xf32>
    %cst_342 = arith.constant 0.000000e+00 : f32
    %978 = vector.broadcast %cst_342 : f32 to vector<16x128xf32>
    %979 = arith.subf %978, %957 : vector<16x128xf32>
    %980 = arith.mulf %979, %957 : vector<16x128xf32>
    %981 = math.exp %980 : vector<16x128xf32>
    %982 = arith.mulf %977, %981 : vector<16x128xf32>
    %cst_343 = arith.constant 1.000000e+00 : f32
    %983 = vector.broadcast %cst_343 : f32 to vector<16x128xf32>
    %984 = arith.subf %983, %982 : vector<16x128xf32>
    %cst_344 = arith.constant 0.000000e+00 : f32
    %985 = vector.broadcast %cst_344 : f32 to vector<16x128xf32>
    %986 = arith.cmpf oge, %956, %985 : vector<16x128xf32>
    %cst_345 = arith.constant 0.000000e+00 : f32
    %987 = vector.broadcast %cst_345 : f32 to vector<16x128xf32>
    %988 = arith.subf %987, %984 : vector<16x128xf32>
    %989 = arith.select %986, %984, %988 : vector<16x128xi1>, vector<16x128xf32>
    %cst_346 = arith.constant 1.000000e+00 : f32
    %990 = vector.broadcast %cst_346 : f32 to vector<16x128xf32>
    %991 = arith.addf %990, %989 : vector<16x128xf32>
    %992 = arith.mulf %954, %991 : vector<16x128xf32>
    %c176 = arith.constant 176 : index
    %c0_347 = arith.constant 0 : index
    %993 = vector.load %arg8[%c176, %c0_347] : memref<256x128xf32, #tpu.memory_space<vmem>>, vector<16x128xf32>
    tpu.vector_store %arg8[%c176, %c0_347], %992 {strides = array<i32>} : memref<256x128xf32, #tpu.memory_space<vmem>>, vector<16x128xf32>,
    %c12_348 = arith.constant 12 : index
    %c0_349 = arith.constant 0 : index
    %c0_350 = arith.constant 0 : index
    %994 = vector.load %arg7[%c12_348, %c0_349, %c0_350] : memref<18x24x128xf32, #tpu.memory_space<vmem>>, vector<1x24x128xf32>
    %995 = vector.shape_cast %994 : vector<1x24x128xf32> to vector<24x128xf32>
    %996 = vector.extract_strided_slice %995 {offsets = [0, 0], sizes = [16, 128], strides = [1, 1]} : vector<24x128xf32> to vector<16x128xf32>
    %997 = arith.mulf %996, %7 : vector<16x128xf32>
    %998 = arith.addf %34, %997 : vector<16x128xf32>
    %999 = vector.extract_strided_slice %995 {offsets = [1, 0], sizes = [16, 128], strides = [1, 1]} : vector<24x128xf32> to vector<16x128xf32>
    %1000 = arith.mulf %999, %10 : vector<16x128xf32>
    %1001 = arith.addf %998, %1000 : vector<16x128xf32>
    %1002 = vector.extract_strided_slice %995 {offsets = [2, 0], sizes = [16, 128], strides = [1, 1]} : vector<24x128xf32> to vector<16x128xf32>
    %1003 = arith.mulf %1002, %13 : vector<16x128xf32>
    %1004 = arith.addf %1001, %1003 : vector<16x128xf32>
    %c13_351 = arith.constant 13 : index
    %c0_352 = arith.constant 0 : index
    %c0_353 = arith.constant 0 : index
    %1005 = vector.load %arg7[%c13_351, %c0_352, %c0_353] : memref<18x24x128xf32, #tpu.memory_space<vmem>>, vector<1x24x128xf32>
    %1006 = vector.shape_cast %1005 : vector<1x24x128xf32> to vector<24x128xf32>
    %1007 = vector.extract_strided_slice %1006 {offsets = [0, 0], sizes = [16, 128], strides = [1, 1]} : vector<24x128xf32> to vector<16x128xf32>
    %1008 = arith.mulf %1007, %16 : vector<16x128xf32>
    %1009 = arith.addf %1004, %1008 : vector<16x128xf32>
    %1010 = vector.extract_strided_slice %1006 {offsets = [1, 0], sizes = [16, 128], strides = [1, 1]} : vector<24x128xf32> to vector<16x128xf32>
    %1011 = arith.mulf %1010, %19 : vector<16x128xf32>
    %1012 = arith.addf %1009, %1011 : vector<16x128xf32>
    %1013 = vector.extract_strided_slice %1006 {offsets = [2, 0], sizes = [16, 128], strides = [1, 1]} : vector<24x128xf32> to vector<16x128xf32>
    %1014 = arith.mulf %1013, %22 : vector<16x128xf32>
    %1015 = arith.addf %1012, %1014 : vector<16x128xf32>
    %c14_354 = arith.constant 14 : index
    %c0_355 = arith.constant 0 : index
    %c0_356 = arith.constant 0 : index
    %1016 = vector.load %arg7[%c14_354, %c0_355, %c0_356] : memref<18x24x128xf32, #tpu.memory_space<vmem>>, vector<1x24x128xf32>
    %1017 = vector.shape_cast %1016 : vector<1x24x128xf32> to vector<24x128xf32>
    %1018 = vector.extract_strided_slice %1017 {offsets = [0, 0], sizes = [16, 128], strides = [1, 1]} : vector<24x128xf32> to vector<16x128xf32>
    %1019 = arith.mulf %1018, %25 : vector<16x128xf32>
    %1020 = arith.addf %1015, %1019 : vector<16x128xf32>
    %1021 = vector.extract_strided_slice %1017 {offsets = [1, 0], sizes = [16, 128], strides = [1, 1]} : vector<24x128xf32> to vector<16x128xf32>
    %1022 = arith.mulf %1021, %28 : vector<16x128xf32>
    %1023 = arith.addf %1020, %1022 : vector<16x128xf32>
    %1024 = vector.extract_strided_slice %1017 {offsets = [2, 0], sizes = [16, 128], strides = [1, 1]} : vector<24x128xf32> to vector<16x128xf32>
    %1025 = arith.mulf %1024, %31 : vector<16x128xf32>
    %1026 = arith.addf %1023, %1025 : vector<16x128xf32>
    %cst_357 = arith.constant 5.000000e-01 : f32
    %1027 = vector.broadcast %cst_357 : f32 to vector<16x128xf32>
    %1028 = arith.mulf %1027, %1026 : vector<16x128xf32>
    %cst_358 = arith.constant 0.707106769 : f32
    %1029 = vector.broadcast %cst_358 : f32 to vector<16x128xf32>
    %1030 = arith.mulf %1026, %1029 : vector<16x128xf32>
    %1031 = math.absf %1030 : vector<16x128xf32>
    %cst_359 = arith.constant 0.327591091 : f32
    %1032 = vector.broadcast %cst_359 : f32 to vector<16x128xf32>
    %1033 = arith.mulf %1032, %1031 : vector<16x128xf32>
    %cst_360 = arith.constant 1.000000e+00 : f32
    %1034 = vector.broadcast %cst_360 : f32 to vector<16x128xf32>
    %1035 = arith.addf %1034, %1033 : vector<16x128xf32>
    %cst_361 = arith.constant 1.000000e+00 : f32
    %1036 = vector.broadcast %cst_361 : f32 to vector<16x128xf32>
    %1037 = arith.divf %1036, %1035 : vector<16x128xf32>
    %cst_362 = arith.constant 1.06140542 : f32
    %1038 = vector.broadcast %cst_362 : f32 to vector<16x128xf32>
    %1039 = arith.mulf %1038, %1037 : vector<16x128xf32>
    %cst_363 = arith.constant -1.45315206 : f32
    %1040 = vector.broadcast %cst_363 : f32 to vector<16x128xf32>
    %1041 = arith.addf %1039, %1040 : vector<16x128xf32>
    %1042 = arith.mulf %1041, %1037 : vector<16x128xf32>
    %cst_364 = arith.constant 1.42141378 : f32
    %1043 = vector.broadcast %cst_364 : f32 to vector<16x128xf32>
    %1044 = arith.addf %1042, %1043 : vector<16x128xf32>
    %1045 = arith.mulf %1044, %1037 : vector<16x128xf32>
    %cst_365 = arith.constant -0.284496725 : f32
    %1046 = vector.broadcast %cst_365 : f32 to vector<16x128xf32>
    %1047 = arith.addf %1045, %1046 : vector<16x128xf32>
    %1048 = arith.mulf %1047, %1037 : vector<16x128xf32>
    %cst_366 = arith.constant 0.254829586 : f32
    %1049 = vector.broadcast %cst_366 : f32 to vector<16x128xf32>
    %1050 = arith.addf %1048, %1049 : vector<16x128xf32>
    %1051 = arith.mulf %1050, %1037 : vector<16x128xf32>
    %cst_367 = arith.constant 0.000000e+00 : f32
    %1052 = vector.broadcast %cst_367 : f32 to vector<16x128xf32>
    %1053 = arith.subf %1052, %1031 : vector<16x128xf32>
    %1054 = arith.mulf %1053, %1031 : vector<16x128xf32>
    %1055 = math.exp %1054 : vector<16x128xf32>
    %1056 = arith.mulf %1051, %1055 : vector<16x128xf32>
    %cst_368 = arith.constant 1.000000e+00 : f32
    %1057 = vector.broadcast %cst_368 : f32 to vector<16x128xf32>
    %1058 = arith.subf %1057, %1056 : vector<16x128xf32>
    %cst_369 = arith.constant 0.000000e+00 : f32
    %1059 = vector.broadcast %cst_369 : f32 to vector<16x128xf32>
    %1060 = arith.cmpf oge, %1030, %1059 : vector<16x128xf32>
    %cst_370 = arith.constant 0.000000e+00 : f32
    %1061 = vector.broadcast %cst_370 : f32 to vector<16x128xf32>
    %1062 = arith.subf %1061, %1058 : vector<16x128xf32>
    %1063 = arith.select %1060, %1058, %1062 : vector<16x128xi1>, vector<16x128xf32>
    %cst_371 = arith.constant 1.000000e+00 : f32
    %1064 = vector.broadcast %cst_371 : f32 to vector<16x128xf32>
    %1065 = arith.addf %1064, %1063 : vector<16x128xf32>
    %1066 = arith.mulf %1028, %1065 : vector<16x128xf32>
    %c192 = arith.constant 192 : index
    %c0_372 = arith.constant 0 : index
    %1067 = vector.load %arg8[%c192, %c0_372] : memref<256x128xf32, #tpu.memory_space<vmem>>, vector<16x128xf32>
    tpu.vector_store %arg8[%c192, %c0_372], %1066 {strides = array<i32>} : memref<256x128xf32, #tpu.memory_space<vmem>>, vector<16x128xf32>,
    %c13_373 = arith.constant 13 : index
    %c0_374 = arith.constant 0 : index
    %c0_375 = arith.constant 0 : index
    %1068 = vector.load %arg7[%c13_373, %c0_374, %c0_375] : memref<18x24x128xf32, #tpu.memory_space<vmem>>, vector<1x24x128xf32>
    %1069 = vector.shape_cast %1068 : vector<1x24x128xf32> to vector<24x128xf32>
    %1070 = vector.extract_strided_slice %1069 {offsets = [0, 0], sizes = [16, 128], strides = [1, 1]} : vector<24x128xf32> to vector<16x128xf32>
    %1071 = arith.mulf %1070, %7 : vector<16x128xf32>
    %1072 = arith.addf %34, %1071 : vector<16x128xf32>
    %1073 = vector.extract_strided_slice %1069 {offsets = [1, 0], sizes = [16, 128], strides = [1, 1]} : vector<24x128xf32> to vector<16x128xf32>
    %1074 = arith.mulf %1073, %10 : vector<16x128xf32>
    %1075 = arith.addf %1072, %1074 : vector<16x128xf32>
    %1076 = vector.extract_strided_slice %1069 {offsets = [2, 0], sizes = [16, 128], strides = [1, 1]} : vector<24x128xf32> to vector<16x128xf32>
    %1077 = arith.mulf %1076, %13 : vector<16x128xf32>
    %1078 = arith.addf %1075, %1077 : vector<16x128xf32>
    %c14_376 = arith.constant 14 : index
    %c0_377 = arith.constant 0 : index
    %c0_378 = arith.constant 0 : index
    %1079 = vector.load %arg7[%c14_376, %c0_377, %c0_378] : memref<18x24x128xf32, #tpu.memory_space<vmem>>, vector<1x24x128xf32>
    %1080 = vector.shape_cast %1079 : vector<1x24x128xf32> to vector<24x128xf32>
    %1081 = vector.extract_strided_slice %1080 {offsets = [0, 0], sizes = [16, 128], strides = [1, 1]} : vector<24x128xf32> to vector<16x128xf32>
    %1082 = arith.mulf %1081, %16 : vector<16x128xf32>
    %1083 = arith.addf %1078, %1082 : vector<16x128xf32>
    %1084 = vector.extract_strided_slice %1080 {offsets = [1, 0], sizes = [16, 128], strides = [1, 1]} : vector<24x128xf32> to vector<16x128xf32>
    %1085 = arith.mulf %1084, %19 : vector<16x128xf32>
    %1086 = arith.addf %1083, %1085 : vector<16x128xf32>
    %1087 = vector.extract_strided_slice %1080 {offsets = [2, 0], sizes = [16, 128], strides = [1, 1]} : vector<24x128xf32> to vector<16x128xf32>
    %1088 = arith.mulf %1087, %22 : vector<16x128xf32>
    %1089 = arith.addf %1086, %1088 : vector<16x128xf32>
    %c15_379 = arith.constant 15 : index
    %c0_380 = arith.constant 0 : index
    %c0_381 = arith.constant 0 : index
    %1090 = vector.load %arg7[%c15_379, %c0_380, %c0_381] : memref<18x24x128xf32, #tpu.memory_space<vmem>>, vector<1x24x128xf32>
    %1091 = vector.shape_cast %1090 : vector<1x24x128xf32> to vector<24x128xf32>
    %1092 = vector.extract_strided_slice %1091 {offsets = [0, 0], sizes = [16, 128], strides = [1, 1]} : vector<24x128xf32> to vector<16x128xf32>
    %1093 = arith.mulf %1092, %25 : vector<16x128xf32>
    %1094 = arith.addf %1089, %1093 : vector<16x128xf32>
    %1095 = vector.extract_strided_slice %1091 {offsets = [1, 0], sizes = [16, 128], strides = [1, 1]} : vector<24x128xf32> to vector<16x128xf32>
    %1096 = arith.mulf %1095, %28 : vector<16x128xf32>
    %1097 = arith.addf %1094, %1096 : vector<16x128xf32>
    %1098 = vector.extract_strided_slice %1091 {offsets = [2, 0], sizes = [16, 128], strides = [1, 1]} : vector<24x128xf32> to vector<16x128xf32>
    %1099 = arith.mulf %1098, %31 : vector<16x128xf32>
    %1100 = arith.addf %1097, %1099 : vector<16x128xf32>
    %cst_382 = arith.constant 5.000000e-01 : f32
    %1101 = vector.broadcast %cst_382 : f32 to vector<16x128xf32>
    %1102 = arith.mulf %1101, %1100 : vector<16x128xf32>
    %cst_383 = arith.constant 0.707106769 : f32
    %1103 = vector.broadcast %cst_383 : f32 to vector<16x128xf32>
    %1104 = arith.mulf %1100, %1103 : vector<16x128xf32>
    %1105 = math.absf %1104 : vector<16x128xf32>
    %cst_384 = arith.constant 0.327591091 : f32
    %1106 = vector.broadcast %cst_384 : f32 to vector<16x128xf32>
    %1107 = arith.mulf %1106, %1105 : vector<16x128xf32>
    %cst_385 = arith.constant 1.000000e+00 : f32
    %1108 = vector.broadcast %cst_385 : f32 to vector<16x128xf32>
    %1109 = arith.addf %1108, %1107 : vector<16x128xf32>
    %cst_386 = arith.constant 1.000000e+00 : f32
    %1110 = vector.broadcast %cst_386 : f32 to vector<16x128xf32>
    %1111 = arith.divf %1110, %1109 : vector<16x128xf32>
    %cst_387 = arith.constant 1.06140542 : f32
    %1112 = vector.broadcast %cst_387 : f32 to vector<16x128xf32>
    %1113 = arith.mulf %1112, %1111 : vector<16x128xf32>
    %cst_388 = arith.constant -1.45315206 : f32
    %1114 = vector.broadcast %cst_388 : f32 to vector<16x128xf32>
    %1115 = arith.addf %1113, %1114 : vector<16x128xf32>
    %1116 = arith.mulf %1115, %1111 : vector<16x128xf32>
    %cst_389 = arith.constant 1.42141378 : f32
    %1117 = vector.broadcast %cst_389 : f32 to vector<16x128xf32>
    %1118 = arith.addf %1116, %1117 : vector<16x128xf32>
    %1119 = arith.mulf %1118, %1111 : vector<16x128xf32>
    %cst_390 = arith.constant -0.284496725 : f32
    %1120 = vector.broadcast %cst_390 : f32 to vector<16x128xf32>
    %1121 = arith.addf %1119, %1120 : vector<16x128xf32>
    %1122 = arith.mulf %1121, %1111 : vector<16x128xf32>
    %cst_391 = arith.constant 0.254829586 : f32
    %1123 = vector.broadcast %cst_391 : f32 to vector<16x128xf32>
    %1124 = arith.addf %1122, %1123 : vector<16x128xf32>
    %1125 = arith.mulf %1124, %1111 : vector<16x128xf32>
    %cst_392 = arith.constant 0.000000e+00 : f32
    %1126 = vector.broadcast %cst_392 : f32 to vector<16x128xf32>
    %1127 = arith.subf %1126, %1105 : vector<16x128xf32>
    %1128 = arith.mulf %1127, %1105 : vector<16x128xf32>
    %1129 = math.exp %1128 : vector<16x128xf32>
    %1130 = arith.mulf %1125, %1129 : vector<16x128xf32>
    %cst_393 = arith.constant 1.000000e+00 : f32
    %1131 = vector.broadcast %cst_393 : f32 to vector<16x128xf32>
    %1132 = arith.subf %1131, %1130 : vector<16x128xf32>
    %cst_394 = arith.constant 0.000000e+00 : f32
    %1133 = vector.broadcast %cst_394 : f32 to vector<16x128xf32>
    %1134 = arith.cmpf oge, %1104, %1133 : vector<16x128xf32>
    %cst_395 = arith.constant 0.000000e+00 : f32
    %1135 = vector.broadcast %cst_395 : f32 to vector<16x128xf32>
    %1136 = arith.subf %1135, %1132 : vector<16x128xf32>
    %1137 = arith.select %1134, %1132, %1136 : vector<16x128xi1>, vector<16x128xf32>
    %cst_396 = arith.constant 1.000000e+00 : f32
    %1138 = vector.broadcast %cst_396 : f32 to vector<16x128xf32>
    %1139 = arith.addf %1138, %1137 : vector<16x128xf32>
    %1140 = arith.mulf %1102, %1139 : vector<16x128xf32>
    %c208 = arith.constant 208 : index
    %c0_397 = arith.constant 0 : index
    %1141 = vector.load %arg8[%c208, %c0_397] : memref<256x128xf32, #tpu.memory_space<vmem>>, vector<16x128xf32>
    tpu.vector_store %arg8[%c208, %c0_397], %1140 {strides = array<i32>} : memref<256x128xf32, #tpu.memory_space<vmem>>, vector<16x128xf32>,
    %c14_398 = arith.constant 14 : index
    %c0_399 = arith.constant 0 : index
    %c0_400 = arith.constant 0 : index
    %1142 = vector.load %arg7[%c14_398, %c0_399, %c0_400] : memref<18x24x128xf32, #tpu.memory_space<vmem>>, vector<1x24x128xf32>
    %1143 = vector.shape_cast %1142 : vector<1x24x128xf32> to vector<24x128xf32>
    %1144 = vector.extract_strided_slice %1143 {offsets = [0, 0], sizes = [16, 128], strides = [1, 1]} : vector<24x128xf32> to vector<16x128xf32>
    %1145 = arith.mulf %1144, %7 : vector<16x128xf32>
    %1146 = arith.addf %34, %1145 : vector<16x128xf32>
    %1147 = vector.extract_strided_slice %1143 {offsets = [1, 0], sizes = [16, 128], strides = [1, 1]} : vector<24x128xf32> to vector<16x128xf32>
    %1148 = arith.mulf %1147, %10 : vector<16x128xf32>
    %1149 = arith.addf %1146, %1148 : vector<16x128xf32>
    %1150 = vector.extract_strided_slice %1143 {offsets = [2, 0], sizes = [16, 128], strides = [1, 1]} : vector<24x128xf32> to vector<16x128xf32>
    %1151 = arith.mulf %1150, %13 : vector<16x128xf32>
    %1152 = arith.addf %1149, %1151 : vector<16x128xf32>
    %c15_401 = arith.constant 15 : index
    %c0_402 = arith.constant 0 : index
    %c0_403 = arith.constant 0 : index
    %1153 = vector.load %arg7[%c15_401, %c0_402, %c0_403] : memref<18x24x128xf32, #tpu.memory_space<vmem>>, vector<1x24x128xf32>
    %1154 = vector.shape_cast %1153 : vector<1x24x128xf32> to vector<24x128xf32>
    %1155 = vector.extract_strided_slice %1154 {offsets = [0, 0], sizes = [16, 128], strides = [1, 1]} : vector<24x128xf32> to vector<16x128xf32>
    %1156 = arith.mulf %1155, %16 : vector<16x128xf32>
    %1157 = arith.addf %1152, %1156 : vector<16x128xf32>
    %1158 = vector.extract_strided_slice %1154 {offsets = [1, 0], sizes = [16, 128], strides = [1, 1]} : vector<24x128xf32> to vector<16x128xf32>
    %1159 = arith.mulf %1158, %19 : vector<16x128xf32>
    %1160 = arith.addf %1157, %1159 : vector<16x128xf32>
    %1161 = vector.extract_strided_slice %1154 {offsets = [2, 0], sizes = [16, 128], strides = [1, 1]} : vector<24x128xf32> to vector<16x128xf32>
    %1162 = arith.mulf %1161, %22 : vector<16x128xf32>
    %1163 = arith.addf %1160, %1162 : vector<16x128xf32>
    %c16_404 = arith.constant 16 : index
    %c0_405 = arith.constant 0 : index
    %c0_406 = arith.constant 0 : index
    %1164 = vector.load %arg7[%c16_404, %c0_405, %c0_406] : memref<18x24x128xf32, #tpu.memory_space<vmem>>, vector<1x24x128xf32>
    %1165 = vector.shape_cast %1164 : vector<1x24x128xf32> to vector<24x128xf32>
    %1166 = vector.extract_strided_slice %1165 {offsets = [0, 0], sizes = [16, 128], strides = [1, 1]} : vector<24x128xf32> to vector<16x128xf32>
    %1167 = arith.mulf %1166, %25 : vector<16x128xf32>
    %1168 = arith.addf %1163, %1167 : vector<16x128xf32>
    %1169 = vector.extract_strided_slice %1165 {offsets = [1, 0], sizes = [16, 128], strides = [1, 1]} : vector<24x128xf32> to vector<16x128xf32>
    %1170 = arith.mulf %1169, %28 : vector<16x128xf32>
    %1171 = arith.addf %1168, %1170 : vector<16x128xf32>
    %1172 = vector.extract_strided_slice %1165 {offsets = [2, 0], sizes = [16, 128], strides = [1, 1]} : vector<24x128xf32> to vector<16x128xf32>
    %1173 = arith.mulf %1172, %31 : vector<16x128xf32>
    %1174 = arith.addf %1171, %1173 : vector<16x128xf32>
    %cst_407 = arith.constant 5.000000e-01 : f32
    %1175 = vector.broadcast %cst_407 : f32 to vector<16x128xf32>
    %1176 = arith.mulf %1175, %1174 : vector<16x128xf32>
    %cst_408 = arith.constant 0.707106769 : f32
    %1177 = vector.broadcast %cst_408 : f32 to vector<16x128xf32>
    %1178 = arith.mulf %1174, %1177 : vector<16x128xf32>
    %1179 = math.absf %1178 : vector<16x128xf32>
    %cst_409 = arith.constant 0.327591091 : f32
    %1180 = vector.broadcast %cst_409 : f32 to vector<16x128xf32>
    %1181 = arith.mulf %1180, %1179 : vector<16x128xf32>
    %cst_410 = arith.constant 1.000000e+00 : f32
    %1182 = vector.broadcast %cst_410 : f32 to vector<16x128xf32>
    %1183 = arith.addf %1182, %1181 : vector<16x128xf32>
    %cst_411 = arith.constant 1.000000e+00 : f32
    %1184 = vector.broadcast %cst_411 : f32 to vector<16x128xf32>
    %1185 = arith.divf %1184, %1183 : vector<16x128xf32>
    %cst_412 = arith.constant 1.06140542 : f32
    %1186 = vector.broadcast %cst_412 : f32 to vector<16x128xf32>
    %1187 = arith.mulf %1186, %1185 : vector<16x128xf32>
    %cst_413 = arith.constant -1.45315206 : f32
    %1188 = vector.broadcast %cst_413 : f32 to vector<16x128xf32>
    %1189 = arith.addf %1187, %1188 : vector<16x128xf32>
    %1190 = arith.mulf %1189, %1185 : vector<16x128xf32>
    %cst_414 = arith.constant 1.42141378 : f32
    %1191 = vector.broadcast %cst_414 : f32 to vector<16x128xf32>
    %1192 = arith.addf %1190, %1191 : vector<16x128xf32>
    %1193 = arith.mulf %1192, %1185 : vector<16x128xf32>
    %cst_415 = arith.constant -0.284496725 : f32
    %1194 = vector.broadcast %cst_415 : f32 to vector<16x128xf32>
    %1195 = arith.addf %1193, %1194 : vector<16x128xf32>
    %1196 = arith.mulf %1195, %1185 : vector<16x128xf32>
    %cst_416 = arith.constant 0.254829586 : f32
    %1197 = vector.broadcast %cst_416 : f32 to vector<16x128xf32>
    %1198 = arith.addf %1196, %1197 : vector<16x128xf32>
    %1199 = arith.mulf %1198, %1185 : vector<16x128xf32>
    %cst_417 = arith.constant 0.000000e+00 : f32
    %1200 = vector.broadcast %cst_417 : f32 to vector<16x128xf32>
    %1201 = arith.subf %1200, %1179 : vector<16x128xf32>
    %1202 = arith.mulf %1201, %1179 : vector<16x128xf32>
    %1203 = math.exp %1202 : vector<16x128xf32>
    %1204 = arith.mulf %1199, %1203 : vector<16x128xf32>
    %cst_418 = arith.constant 1.000000e+00 : f32
    %1205 = vector.broadcast %cst_418 : f32 to vector<16x128xf32>
    %1206 = arith.subf %1205, %1204 : vector<16x128xf32>
    %cst_419 = arith.constant 0.000000e+00 : f32
    %1207 = vector.broadcast %cst_419 : f32 to vector<16x128xf32>
    %1208 = arith.cmpf oge, %1178, %1207 : vector<16x128xf32>
    %cst_420 = arith.constant 0.000000e+00 : f32
    %1209 = vector.broadcast %cst_420 : f32 to vector<16x128xf32>
    %1210 = arith.subf %1209, %1206 : vector<16x128xf32>
    %1211 = arith.select %1208, %1206, %1210 : vector<16x128xi1>, vector<16x128xf32>
    %cst_421 = arith.constant 1.000000e+00 : f32
    %1212 = vector.broadcast %cst_421 : f32 to vector<16x128xf32>
    %1213 = arith.addf %1212, %1211 : vector<16x128xf32>
    %1214 = arith.mulf %1176, %1213 : vector<16x128xf32>
    %c224 = arith.constant 224 : index
    %c0_422 = arith.constant 0 : index
    %1215 = vector.load %arg8[%c224, %c0_422] : memref<256x128xf32, #tpu.memory_space<vmem>>, vector<16x128xf32>
    tpu.vector_store %arg8[%c224, %c0_422], %1214 {strides = array<i32>} : memref<256x128xf32, #tpu.memory_space<vmem>>, vector<16x128xf32>,
    %c15_423 = arith.constant 15 : index
    %c0_424 = arith.constant 0 : index
    %c0_425 = arith.constant 0 : index
    %1216 = vector.load %arg7[%c15_423, %c0_424, %c0_425] : memref<18x24x128xf32, #tpu.memory_space<vmem>>, vector<1x24x128xf32>
    %1217 = vector.shape_cast %1216 : vector<1x24x128xf32> to vector<24x128xf32>
    %1218 = vector.extract_strided_slice %1217 {offsets = [0, 0], sizes = [16, 128], strides = [1, 1]} : vector<24x128xf32> to vector<16x128xf32>
    %1219 = arith.mulf %1218, %7 : vector<16x128xf32>
    %1220 = arith.addf %34, %1219 : vector<16x128xf32>
    %1221 = vector.extract_strided_slice %1217 {offsets = [1, 0], sizes = [16, 128], strides = [1, 1]} : vector<24x128xf32> to vector<16x128xf32>
    %1222 = arith.mulf %1221, %10 : vector<16x128xf32>
    %1223 = arith.addf %1220, %1222 : vector<16x128xf32>
    %1224 = vector.extract_strided_slice %1217 {offsets = [2, 0], sizes = [16, 128], strides = [1, 1]} : vector<24x128xf32> to vector<16x128xf32>
    %1225 = arith.mulf %1224, %13 : vector<16x128xf32>
    %1226 = arith.addf %1223, %1225 : vector<16x128xf32>
    %c16_426 = arith.constant 16 : index
    %c0_427 = arith.constant 0 : index
    %c0_428 = arith.constant 0 : index
    %1227 = vector.load %arg7[%c16_426, %c0_427, %c0_428] : memref<18x24x128xf32, #tpu.memory_space<vmem>>, vector<1x24x128xf32>
    %1228 = vector.shape_cast %1227 : vector<1x24x128xf32> to vector<24x128xf32>
    %1229 = vector.extract_strided_slice %1228 {offsets = [0, 0], sizes = [16, 128], strides = [1, 1]} : vector<24x128xf32> to vector<16x128xf32>
    %1230 = arith.mulf %1229, %16 : vector<16x128xf32>
    %1231 = arith.addf %1226, %1230 : vector<16x128xf32>
    %1232 = vector.extract_strided_slice %1228 {offsets = [1, 0], sizes = [16, 128], strides = [1, 1]} : vector<24x128xf32> to vector<16x128xf32>
    %1233 = arith.mulf %1232, %19 : vector<16x128xf32>
    %1234 = arith.addf %1231, %1233 : vector<16x128xf32>
    %1235 = vector.extract_strided_slice %1228 {offsets = [2, 0], sizes = [16, 128], strides = [1, 1]} : vector<24x128xf32> to vector<16x128xf32>
    %1236 = arith.mulf %1235, %22 : vector<16x128xf32>
    %1237 = arith.addf %1234, %1236 : vector<16x128xf32>
    %c17 = arith.constant 17 : index
    %c0_429 = arith.constant 0 : index
    %c0_430 = arith.constant 0 : index
    %1238 = vector.load %arg7[%c17, %c0_429, %c0_430] : memref<18x24x128xf32, #tpu.memory_space<vmem>>, vector<1x24x128xf32>
    %1239 = vector.shape_cast %1238 : vector<1x24x128xf32> to vector<24x128xf32>
    %1240 = vector.extract_strided_slice %1239 {offsets = [0, 0], sizes = [16, 128], strides = [1, 1]} : vector<24x128xf32> to vector<16x128xf32>
    %1241 = arith.mulf %1240, %25 : vector<16x128xf32>
    %1242 = arith.addf %1237, %1241 : vector<16x128xf32>
    %1243 = vector.extract_strided_slice %1239 {offsets = [1, 0], sizes = [16, 128], strides = [1, 1]} : vector<24x128xf32> to vector<16x128xf32>
    %1244 = arith.mulf %1243, %28 : vector<16x128xf32>
    %1245 = arith.addf %1242, %1244 : vector<16x128xf32>
    %1246 = vector.extract_strided_slice %1239 {offsets = [2, 0], sizes = [16, 128], strides = [1, 1]} : vector<24x128xf32> to vector<16x128xf32>
    %1247 = arith.mulf %1246, %31 : vector<16x128xf32>
    %1248 = arith.addf %1245, %1247 : vector<16x128xf32>
    %cst_431 = arith.constant 5.000000e-01 : f32
    %1249 = vector.broadcast %cst_431 : f32 to vector<16x128xf32>
    %1250 = arith.mulf %1249, %1248 : vector<16x128xf32>
    %cst_432 = arith.constant 0.707106769 : f32
    %1251 = vector.broadcast %cst_432 : f32 to vector<16x128xf32>
    %1252 = arith.mulf %1248, %1251 : vector<16x128xf32>
    %1253 = math.absf %1252 : vector<16x128xf32>
    %cst_433 = arith.constant 0.327591091 : f32
    %1254 = vector.broadcast %cst_433 : f32 to vector<16x128xf32>
    %1255 = arith.mulf %1254, %1253 : vector<16x128xf32>
    %cst_434 = arith.constant 1.000000e+00 : f32
    %1256 = vector.broadcast %cst_434 : f32 to vector<16x128xf32>
    %1257 = arith.addf %1256, %1255 : vector<16x128xf32>
    %cst_435 = arith.constant 1.000000e+00 : f32
    %1258 = vector.broadcast %cst_435 : f32 to vector<16x128xf32>
    %1259 = arith.divf %1258, %1257 : vector<16x128xf32>
    %cst_436 = arith.constant 1.06140542 : f32
    %1260 = vector.broadcast %cst_436 : f32 to vector<16x128xf32>
    %1261 = arith.mulf %1260, %1259 : vector<16x128xf32>
    %cst_437 = arith.constant -1.45315206 : f32
    %1262 = vector.broadcast %cst_437 : f32 to vector<16x128xf32>
    %1263 = arith.addf %1261, %1262 : vector<16x128xf32>
    %1264 = arith.mulf %1263, %1259 : vector<16x128xf32>
    %cst_438 = arith.constant 1.42141378 : f32
    %1265 = vector.broadcast %cst_438 : f32 to vector<16x128xf32>
    %1266 = arith.addf %1264, %1265 : vector<16x128xf32>
    %1267 = arith.mulf %1266, %1259 : vector<16x128xf32>
    %cst_439 = arith.constant -0.284496725 : f32
    %1268 = vector.broadcast %cst_439 : f32 to vector<16x128xf32>
    %1269 = arith.addf %1267, %1268 : vector<16x128xf32>
    %1270 = arith.mulf %1269, %1259 : vector<16x128xf32>
    %cst_440 = arith.constant 0.254829586 : f32
    %1271 = vector.broadcast %cst_440 : f32 to vector<16x128xf32>
    %1272 = arith.addf %1270, %1271 : vector<16x128xf32>
    %1273 = arith.mulf %1272, %1259 : vector<16x128xf32>
    %cst_441 = arith.constant 0.000000e+00 : f32
    %1274 = vector.broadcast %cst_441 : f32 to vector<16x128xf32>
    %1275 = arith.subf %1274, %1253 : vector<16x128xf32>
    %1276 = arith.mulf %1275, %1253 : vector<16x128xf32>
    %1277 = math.exp %1276 : vector<16x128xf32>
    %1278 = arith.mulf %1273, %1277 : vector<16x128xf32>
    %cst_442 = arith.constant 1.000000e+00 : f32
    %1279 = vector.broadcast %cst_442 : f32 to vector<16x128xf32>
    %1280 = arith.subf %1279, %1278 : vector<16x128xf32>
    %cst_443 = arith.constant 0.000000e+00 : f32
    %1281 = vector.broadcast %cst_443 : f32 to vector<16x128xf32>
    %1282 = arith.cmpf oge, %1252, %1281 : vector<16x128xf32>
    %cst_444 = arith.constant 0.000000e+00 : f32
    %1283 = vector.broadcast %cst_444 : f32 to vector<16x128xf32>
    %1284 = arith.subf %1283, %1280 : vector<16x128xf32>
    %1285 = arith.select %1282, %1280, %1284 : vector<16x128xi1>, vector<16x128xf32>
    %cst_445 = arith.constant 1.000000e+00 : f32
    %1286 = vector.broadcast %cst_445 : f32 to vector<16x128xf32>
    %1287 = arith.addf %1286, %1285 : vector<16x128xf32>
    %1288 = arith.mulf %1250, %1287 : vector<16x128xf32>
    %c240 = arith.constant 240 : index
    %c0_446 = arith.constant 0 : index
    %1289 = vector.load %arg8[%c240, %c0_446] : memref<256x128xf32, #tpu.memory_space<vmem>>, vector<16x128xf32>
    tpu.vector_store %arg8[%c240, %c0_446], %1288 {strides = array<i32>} : memref<256x128xf32, #tpu.memory_space<vmem>>, vector<16x128xf32>,
    %c0_447 = arith.constant 0 : index
    %c0_448 = arith.constant 0 : index
    %1290 = vector.load %arg8[%c0_447, %c0_448] : memref<256x128xf32, #tpu.memory_space<vmem>>, vector<256x128xf32>
    %cst_449 = arith.constant dense<0.000000e+00> : vector<256x32xf32>
    %1291 = tpu.matmul %1290, %1, %cst_449 {dimension_numbers = #tpu.dot_dimension_numbers<[1], [0], [0], [1], [0, 0, 1, 1], [], []>} : vector<256x128xf32>, vector<128x32xf32>, vector<256x32xf32> -> vector<256x32xf32>
    %1292 = vector.broadcast %2 : vector<1x32xf32> to vector<256x32xf32>
    %1293 = arith.addf %1291, %1292 : vector<256x32xf32>
    %c0_450 = arith.constant 0 : index
    %c0_451 = arith.constant 0 : index
    %c0_452 = arith.constant 0 : index
    %1294 = vector.load %arg6[%c0_450, %c0_451, %c0_452] : memref<1x256x32xf32, #tpu.memory_space<vmem>>, vector<1x256x32xf32>
    %1295 = vector.shape_cast %1294 : vector<1x256x32xf32> to vector<256x32xf32>
    %1296 = vector.shape_cast %1293 : vector<256x32xf32> to vector<1x256x32xf32>
    tpu.vector_store %arg6[%c0_450, %c0_451, %c0_452], %1296 {strides = array<i32>} : memref<1x256x32xf32, #tpu.memory_space<vmem>>, vector<1x256x32xf32>,
    return
  }
  func.func @transform_0(%arg0: i32) -> (i32, i32, i32) {
    %c0_i32 = arith.constant 0 : i32
    %c0_i32_0 = arith.constant 0 : i32
    %c0_i32_1 = arith.constant 0 : i32
    return %arg0, %c0_i32, %c0_i32_0 : i32, i32, i32
  }
  func.func @transform_1(%arg0: i32) -> (i32, i32) {
    %c0_i32 = arith.constant 0 : i32
    %c0_i32_0 = arith.constant 0 : i32
    %c0_i32_1 = arith.constant 0 : i32
    return %c0_i32, %c0_i32_0 : i32, i32
  }
  func.func @transform_2(%arg0: i32) -> (i32, i32) {
    %c0_i32 = arith.constant 0 : i32
    %c0_i32_0 = arith.constant 0 : i32
    %c0_i32_1 = arith.constant 0 : i32
    return %c0_i32, %c0_i32_0 : i32, i32
  }
  func.func @transform_3(%arg0: i32) -> (i32, i32) {
    %c0_i32 = arith.constant 0 : i32
    %c0_i32_0 = arith.constant 0 : i32
    %c0_i32_1 = arith.constant 0 : i32
    return %c0_i32, %c0_i32_0 : i32, i32
  }
  func.func @transform_4(%arg0: i32) -> (i32, i32) {
    %c0_i32 = arith.constant 0 : i32
    %c0_i32_0 = arith.constant 0 : i32
    %c0_i32_1 = arith.constant 0 : i32
    return %c0_i32, %c0_i32_0 : i32, i32
  }
  func.func @transform_5(%arg0: i32) -> (i32, i32, i32) {
    %c0_i32 = arith.constant 0 : i32
    %c0_i32_0 = arith.constant 0 : i32
    %c0_i32_1 = arith.constant 0 : i32
    return %arg0, %c0_i32, %c0_i32_0 : i32, i32, i32
  }
}

</mosaic_0001>

<llo_original>
// kernel: tpu_custom_call.1
$region0: #{tpu_custom_call.1}
  #allocation0 [shape = 'u32[]', space=smem, size = 0x4, offset = 0x4, fixed_abs, tag = 'smem constant byte address 0x4 - core index']
  #allocation1 [shape = 'u32[144,128]{1,0:T(1,128)}', space=vmem, size = 0x12000, scoped, tag = 'internal scratch']
  #allocation2 [shape = 'f32[18,24,128]{2,1,0:T(8,128)}', space=vmem, size = 0x36000, scoped, tag = 'scratch operand']
  #allocation3 [shape = 'f32[256,128]{1,0:T(8,128)}', space=vmem, size = 0x20000, scoped, tag = 'scratch operand']
  %s0 = inlined_call_operand.vmem [shape: f32[2,256,32], index: 0, kind: input, shape index: {}]
  %s1 = inlined_call_operand.vmem [shape: f32[32,128], index: 1, kind: input, shape index: {}]
  %s2 = inlined_call_operand.vmem [shape: f32[128,32], index: 2, kind: input, shape index: {}]
  %s3 = inlined_call_operand.vmem [shape: f32[11,128], index: 3, kind: input, shape index: {}]
  %s4 = inlined_call_operand.vmem [shape: f32[1,32], index: 4, kind: input, shape index: {}]
  %s5 = inlined_call_operand.vmem [shape: f32[2,256,32], index: 5, kind: output, shape index: {}]
  %s6 = sld [smem:[#allocation0]]
  $region53: #{tpu_custom_call.1} parent=0
    _
  %s8 = ssub.s32 1, %s6
  %s9 = scalar_select 0, %s8, %s6
  loop: start=0, step=1, limit=4
  $region2: #{tpu_custom_call.1} parent=0 // loop_pre_header
    _
  $region3: #{tpu_custom_call.1} parent=0 // loop_header
    %s11 = sphi 0, %s15
    %p12 = scmp.ge.s32.totalorder %s11, 4
    %s21 = sphi 0, %s23
    %s24 = sphi 0, %s21
    %s25 = sphi 0, %s24
    %s41 = sphi 0, %s25
    %s45 = sphi 0, %s45
    %s47 = sphi 0, %s45
    %s48 = sphi 0, %s47
    %s62 = sphi 0, %s48
    %s66 = sphi 0, %s66
    %s68 = sphi 0, %s66
    %s69 = sphi 0, %s68
    %s83 = sphi 0, %s69
    %s87 = sphi 0, %s87
    %s89 = sphi 0, %s87
    %s90 = sphi 0, %s89
    %s104 = sphi 0, %s90
    %s108 = sphi 0, %s108
    %s110 = sphi 0, %s108
    %s111 = sphi 0, %s110
    %s125 = sphi 0, %s111
    %s131 = sphi 0, %s133
    %s134 = sphi 0, %s131
    %s135 = sphi 0, %s134
    %s151 = sphi 0, %s135
  $region4: #{tpu_custom_call.1} parent=0 // loop_header_branch
    %14 = sbr.rel (%p12) target = $region8
  $region5: #{tpu_custom_call.1} parent=0 // loop_body
    %s16 = ssub.s32 %s11, 1
    %s17 = ssub.s32 %s11, 2
    %s18 = sadd.s32 %s11, 1
    %s19 = ssub.s32 %s11, %s18
    %p20 = scmp.eq.s32.totalorder %s19, 0
    %s22 = sadd.s32 %s21, 1
    %s23 = scalar_select %p20, %s21, %s22
    %p26 = pneg %p20
    %p27 = scmp.eq.s32.totalorder %s11, 1
    %p28 = por %p26, %p27
    %p29 = scmp.ne.s32.totalorder %s21, %s24
    %p30 = scmp.eq.s32.totalorder %s11, 0
    %p31 = por %p29, %p30
    %p32 = scmp.ne.s32.totalorder %s21, %s24
    %p33 = scmp.eq.s32.totalorder %s16, 1
    %p34 = por %p32, %p33
    %p35 = scmp.ne.s32.totalorder %s24, %s25
    %p36 = scmp.eq.s32.totalorder %s16, 0
    %p37 = por %p35, %p36
    %p38 = scmp.ne.s32.totalorder %s24, %s25
    %p39 = scmp.eq.s32.totalorder %s17, 1
    %p40 = por %p38, %p39
    %p42 = scmp.ne.s32.totalorder %s25, %s41
    %p43 = scmp.eq.s32.totalorder %s17, 0
    %p44 = por %p42, %p43
    %s46 = sadd.s32 %s45, 1
    %p49 = scmp.eq.s32.totalorder %s11, 1
    %p50 = scmp.ne.s32.totalorder %s45, %s47
    %p51 = scmp.eq.s32.totalorder %s11, 0
    %p52 = por %p50, %p51
    %p53 = scmp.ne.s32.totalorder %s45, %s47
    %p54 = scmp.eq.s32.totalorder %s16, 1
    %p55 = por %p53, %p54
    %p56 = scmp.ne.s32.totalorder %s47, %s48
    %p57 = scmp.eq.s32.totalorder %s16, 0
    %p58 = por %p56, %p57
    %p59 = scmp.ne.s32.totalorder %s47, %s48
    %p60 = scmp.eq.s32.totalorder %s17, 1
    %p61 = por %p59, %p60
    %p63 = scmp.ne.s32.totalorder %s48, %s62
    %p64 = scmp.eq.s32.totalorder %s17, 0
    %p65 = por %p63, %p64
    %s67 = sadd.s32 %s66, 1
    %p70 = scmp.eq.s32.totalorder %s11, 1
    %p71 = scmp.ne.s32.totalorder %s66, %s68
    %p72 = scmp.eq.s32.totalorder %s11, 0
    %p73 = por %p71, %p72
    %p74 = scmp.ne.s32.totalorder %s66, %s68
    %p75 = scmp.eq.s32.totalorder %s16, 1
    %p76 = por %p74, %p75
    %p77 = scmp.ne.s32.totalorder %s68, %s69
    %p78 = scmp.eq.s32.totalorder %s16, 0
    %p79 = por %p77, %p78
    %p80 = scmp.ne.s32.totalorder %s68, %s69
    %p81 = scmp.eq.s32.totalorder %s17, 1
    %p82 = por %p80, %p81
    %p84 = scmp.ne.s32.totalorder %s69, %s83
    %p85 = scmp.eq.s32.totalorder %s17, 0
    %p86 = por %p84, %p85
    %s88 = sadd.s32 %s87, 1
    %p91 = scmp.eq.s32.totalorder %s11, 1
    %p92 = scmp.ne.s32.totalorder %s87, %s89
    %p93 = scmp.eq.s32.totalorder %s11, 0
    %p94 = por %p92, %p93
    %p95 = scmp.ne.s32.totalorder %s87, %s89
    %p96 = scmp.eq.s32.totalorder %s16, 1
    %p97 = por %p95, %p96
    %p98 = scmp.ne.s32.totalorder %s89, %s90
    %p99 = scmp.eq.s32.totalorder %s16, 0
    %p100 = por %p98, %p99
    %p101 = scmp.ne.s32.totalorder %s89, %s90
    %p102 = scmp.eq.s32.totalorder %s17, 1
    %p103 = por %p101, %p102
    %p105 = scmp.ne.s32.totalorder %s90, %s104
    %p106 = scmp.eq.s32.totalorder %s17, 0
    %p107 = por %p105, %p106
    %s109 = sadd.s32 %s108, 1
    %p112 = scmp.eq.s32.totalorder %s11, 1
    %p113 = scmp.ne.s32.totalorder %s108, %s110
    %p114 = scmp.eq.s32.totalorder %s11, 0
    %p115 = por %p113, %p114
    %p116 = scmp.ne.s32.totalorder %s108, %s110
    %p117 = scmp.eq.s32.totalorder %s16, 1
    %p118 = por %p116, %p117
    %p119 = scmp.ne.s32.totalorder %s110, %s111
    %p120 = scmp.eq.s32.totalorder %s16, 0
    %p121 = por %p119, %p120
    %p122 = scmp.ne.s32.totalorder %s110, %s111
    %p123 = scmp.eq.s32.totalorder %s17, 1
    %p124 = por %p122, %p123
    %p126 = scmp.ne.s32.totalorder %s111, %s125
    %p127 = scmp.eq.s32.totalorder %s17, 0
    %p128 = por %p126, %p127
    %s129 = ssub.s32 %s11, %s18
    %p130 = scmp.eq.s32.totalorder %s129, 0
    %s132 = sadd.s32 %s131, 1
    %s133 = scalar_select %p130, %s131, %s132
    %p136 = pneg %p130
    %p137 = scmp.eq.s32.totalorder %s11, 1
    %p138 = por %p136, %p137
    %p139 = scmp.ne.s32.totalorder %s131, %s134
    %p140 = scmp.eq.s32.totalorder %s11, 0
    %p141 = por %p139, %p140
    %p142 = scmp.ne.s32.totalorder %s131, %s134
    %p143 = scmp.eq.s32.totalorder %s16, 1
    %p144 = por %p142, %p143
    %p145 = scmp.ne.s32.totalorder %s134, %s135
    %p146 = scmp.eq.s32.totalorder %s16, 0
    %p147 = por %p145, %p146
    %p148 = scmp.ne.s32.totalorder %s134, %s135
    %p149 = scmp.eq.s32.totalorder %s17, 1
    %p150 = por %p148, %p149
    %p152 = scmp.ne.s32.totalorder %s135, %s151
    %p153 = scmp.eq.s32.totalorder %s17, 0
    %p154 = por %p152, %p153
    %p155 = scmp.le.s32.totalorder 1, %s11
    %p156 = scmp.lt.s32.totalorder %s11, 3
    %p157 = pnand %p155, %p156
    %p158 = pneg %p157
    // Predicated region
    $region9: #{tpu_custom_call.1} parent=5 // pred_check
      _
    $region10: #{tpu_custom_call.1} parent=5 // pred_check_branch
      %160 = sbr.rel (%p157) target = $region12
    $region11: #{tpu_custom_call.1} parent=5 // pred_region
      %s161 = ssub.s32 %s11, 1
      // Predicated region
      $region13: #{tpu_custom_call.1} parent=11 // pred_check
        %p162 = pneg %p58
      $region14: #{tpu_custom_call.1} parent=11 // pred_check_branch
        %164 = sbr.rel (%p162) target = $region16
      $region15: #{tpu_custom_call.1} parent=11 // pred_region
        _
      $region16: #{tpu_custom_call.1} parent=11 // pred_fallthru
        _
      // Predicated region
      $region17: #{tpu_custom_call.1} parent=11 // pred_check
        %p165 = pneg %p79
      $region18: #{tpu_custom_call.1} parent=11 // pred_check_branch
        %167 = sbr.rel (%p165) target = $region20
      $region19: #{tpu_custom_call.1} parent=11 // pred_region
        _
      $region20: #{tpu_custom_call.1} parent=11 // pred_fallthru
        _
      // Predicated region
      $region21: #{tpu_custom_call.1} parent=11 // pred_check
        %p168 = pneg %p100
      $region22: #{tpu_custom_call.1} parent=11 // pred_check_branch
        %170 = sbr.rel (%p168) target = $region24
      $region23: #{tpu_custom_call.1} parent=11 // pred_region
        _
      $region24: #{tpu_custom_call.1} parent=11 // pred_fallthru
        _
      // Predicated region
      $region25: #{tpu_custom_call.1} parent=11 // pred_check
        %p171 = pneg %p121
      $region26: #{tpu_custom_call.1} parent=11 // pred_check_branch
        %173 = sbr.rel (%p171) target = $region28
      $region27: #{tpu_custom_call.1} parent=11 // pred_region
        _
      $region28: #{tpu_custom_call.1} parent=11 // pred_fallthru
        _
    $region12: #{tpu_custom_call.1} parent=5 // pred_fallthru
      _
    %p174 = scmp.lt.s32.totalorder %s11, 2
    // Predicated region
    $region29: #{tpu_custom_call.1} parent=5 // pred_check
      %p175 = pneg %p174
    $region30: #{tpu_custom_call.1} parent=5 // pred_check_branch
      %177 = sbr.rel (%p175) target = $region32
    $region31: #{tpu_custom_call.1} parent=5 // pred_region
      // Predicated region
      $region33: #{tpu_custom_call.1} parent=31 // pred_check
        %p178 = pneg %p31
      $region34: #{tpu_custom_call.1} parent=31 // pred_check_branch
        %180 = sbr.rel (%p178) target = $region36
      $region35: #{tpu_custom_call.1} parent=31 // pred_region
        %p181 = scmp.lt.s32.totalorder %s11, 1
        %s182 = scalar_select %p181, %s11, 1
        %s183 = smul.addr %s182, 32
        %s184 = smul.addr %s183, 8
        %s185 = scalar_lea.vmem %s0, %s184
      $region36: #{tpu_custom_call.1} parent=31 // pred_fallthru
        _
    $region32: #{tpu_custom_call.1} parent=5 // pred_fallthru
      _
    %p186 = scmp.le.s32.totalorder 1, %s11
    %p187 = scmp.lt.s32.totalorder %s11, 3
    %p188 = pnand %p186, %p187
    %p189 = pneg %p188
    // Predicated region
    $region37: #{tpu_custom_call.1} parent=5 // pred_check
      _
    $region38: #{tpu_custom_call.1} parent=5 // pred_check_branch
      %191 = sbr.rel (%p188) target = $region40
    $region39: #{tpu_custom_call.1} parent=5 // pred_region
      %s192 = ssub.s32 %s11, 1
      %p193 = scmp.lt.s32.totalorder %s16, 1
      %s194 = scalar_select %p193, %s16, 1
      %s195 = smul.addr %s194, 32
      %s196 = smul.addr %s195, 8
      %s197 = scalar_lea.vmem %s0, %s196
      %p198 = pneg %p37
      %p199 = pneg %p34
      %p200 = pneg %p58
      %p201 = pneg %p55
      %p202 = pneg %p79
      %p203 = pneg %p76
      %p204 = pneg %p100
      %p205 = pneg %p97
      %p206 = pneg %p121
      %p207 = pneg %p118
      %p208 = pneg %p147
      %p209 = pneg %p144
      %p210 = scmp.lt.s32.totalorder %s16, 1
      %s211 = scalar_select %p210, %s16, 1
      %s212 = smul.addr %s211, 32
      %s213 = smul.addr %s212, 8
      %s214 = scalar_lea.vmem %s5, %s213
      %p215 = scmp.lt.s32.totalorder %s16, 1
      %s216 = scalar_select %p215, %s16, 1
      %s217 = smul.addr %s216, 32
      %s218 = smul.addr %s217, 8
      %s219 = scalar_lea.vmem %s0, %s218
      %p220 = scmp.lt.s32.totalorder %s16, 1
      %s221 = scalar_select %p220, %s16, 1
      %s222 = smul.addr %s221, 32
      %s223 = smul.addr %s222, 8
      %s224 = scalar_lea.vmem %s5, %s223
      %v225 = vld [vmem:[%s1] sm:$0xff]
      %v226 = vld [vmem:[%s1 + $0x8] sm:$0xff]
      %v227 = vld [vmem:[%s1 + $0x10] sm:$0xff]
      %v228 = vld [vmem:[%s1 + $0x18] sm:$0xff]
      %v229 = vld [vmem:[%s2] sm:$0xff]
      %v230 = vld [vmem:[%s2 + $0x8] sm:$0xff]
      %v231 = vld [vmem:[%s2 + $0x10] sm:$0xff]
      %v232 = vld [vmem:[%s2 + $0x18] sm:$0xff]
      %v233 = vld [vmem:[%s2 + $0x20] sm:$0xff]
      %v234 = vld [vmem:[%s2 + $0x28] sm:$0xff]
      %v235 = vld [vmem:[%s2 + $0x30] sm:$0xff]
      %v236 = vld [vmem:[%s2 + $0x38] sm:$0xff]
      %v237 = vld [vmem:[%s2 + $0x40] sm:$0xff]
      %v238 = vld [vmem:[%s2 + $0x48] sm:$0xff]
      %v239 = vld [vmem:[%s2 + $0x50] sm:$0xff]
      %v240 = vld [vmem:[%s2 + $0x58] sm:$0xff]
      %v241 = vld [vmem:[%s2 + $0x60] sm:$0xff]
      %v242 = vld [vmem:[%s2 + $0x68] sm:$0xff]
      %v243 = vld [vmem:[%s2 + $0x70] sm:$0xff]
      %v244 = vld [vmem:[%s2 + $0x78] sm:$0xff]
      %v245 = vld [vmem:[%s4] sm:$0x1]
      %v246 = vld [vmem:[%s3] sm:$0xff]
      %v247 = vld [vmem:[%s3 + $0x8] sm:$0x7]
      %v248 = vlaneseq
      %v249 = vshrl.u32 %v248, 7
      %v250 = vsub.s32 1, %v249
      %v251 = vrot.slane %v246, %v250
      %v252 = vlaneseq
      %v253 = vshrl.u32 %v252, 7
      %v254 = vsub.s32 2, %v253
      %v255 = vrot.slane %v246, %v254
      %v256 = vlaneseq
      %v257 = vshrl.u32 %v256, 7
      %v258 = vsub.s32 3, %v257
      %v259 = vrot.slane %v246, %v258
      %v260 = vlaneseq
      %v261 = vshrl.u32 %v260, 7
      %v262 = vsub.s32 4, %v261
      %v263 = vrot.slane %v246, %v262
      %v264 = vlaneseq
      %v265 = vshrl.u32 %v264, 7
      %v266 = vsub.s32 5, %v265
      %v267 = vrot.slane %v246, %v266
      %v268 = vlaneseq
      %v269 = vshrl.u32 %v268, 7
      %v270 = vsub.s32 6, %v269
      %v271 = vrot.slane %v246, %v270
      %v272 = vlaneseq
      %v273 = vshrl.u32 %v272, 7
      %v274 = vsub.s32 7, %v273
      %v275 = vrot.slane %v246, %v274
      %v276 = vlaneseq
      %v277 = vshrl.u32 %v276, 7
      %v278 = vsub.s32 0, %v277
      %v279 = vrot.slane %v247, %v278
      %v280 = vlaneseq
      %v281 = vshrl.u32 %v280, 7
      %v282 = vsub.s32 1, %v281
      %v283 = vrot.slane %v247, %v282
      %v284 = vlaneseq
      %v285 = vshrl.u32 %v284, 7
      %v286 = vsub.s32 2, %v285
      %v287 = vrot.slane %v247, %v286
      %288 = vst [vmem:[#allocation2] sm:$0xff] 0.0
      %289 = vst [vmem:[#allocation2 + $0x8] sm:$0xff] 0.0
      %290 = vst [vmem:[#allocation2 + $0x10] sm:$0xff] 0.0
      %291 = vst [vmem:[#allocation2 + $0x18] sm:$0xff] 0.0
      %292 = vst [vmem:[#allocation2 + $0x20] sm:$0xff] 0.0
      %293 = vst [vmem:[#allocation2 + $0x28] sm:$0xff] 0.0
      %294 = vst [vmem:[#allocation2 + $0x30] sm:$0xff] 0.0
      %295 = vst [vmem:[#allocation2 + $0x38] sm:$0xff] 0.0
      %296 = vst [vmem:[#allocation2 + $0x40] sm:$0xff] 0.0
      %297 = vst [vmem:[#allocation2 + $0x48] sm:$0xff] 0.0
      %298 = vst [vmem:[#allocation2 + $0x50] sm:$0xff] 0.0
      %299 = vst [vmem:[#allocation2 + $0x58] sm:$0xff] 0.0
      %300 = vst [vmem:[#allocation2 + $0x60] sm:$0xff] 0.0
      %301 = vst [vmem:[#allocation2 + $0x68] sm:$0xff] 0.0
      %302 = vst [vmem:[#allocation2 + $0x70] sm:$0xff] 0.0
      %303 = vst [vmem:[#allocation2 + $0x78] sm:$0xff] 0.0
      %304 = vst [vmem:[#allocation2 + $0x80] sm:$0xff] 0.0
      %305 = vst [vmem:[#allocation2 + $0x88] sm:$0xff] 0.0
      %306 = vst [vmem:[#allocation2 + $0x90] sm:$0xff] 0.0
      %307 = vst [vmem:[#allocation2 + $0x98] sm:$0xff] 0.0
      %308 = vst [vmem:[#allocation2 + $0xa0] sm:$0xff] 0.0
      %309 = vst [vmem:[#allocation2 + $0xa8] sm:$0xff] 0.0
      %310 = vst [vmem:[#allocation2 + $0xb0] sm:$0xff] 0.0
      %311 = vst [vmem:[#allocation2 + $0xb8] sm:$0xff] 0.0
      %312 = vst [vmem:[#allocation2 + $0xc0] sm:$0xff] 0.0
      %313 = vst [vmem:[#allocation2 + $0xc8] sm:$0xff] 0.0
      %314 = vst [vmem:[#allocation2 + $0xd0] sm:$0xff] 0.0
      %315 = vst [vmem:[#allocation2 + $0xd8] sm:$0xff] 0.0
      %316 = vst [vmem:[#allocation2 + $0xe0] sm:$0xff] 0.0
      %317 = vst [vmem:[#allocation2 + $0xe8] sm:$0xff] 0.0
      %318 = vst [vmem:[#allocation2 + $0xf0] sm:$0xff] 0.0
      %319 = vst [vmem:[#allocation2 + $0xf8] sm:$0xff] 0.0
      %320 = vst [vmem:[#allocation2 + $0x100] sm:$0xff] 0.0
      %321 = vst [vmem:[#allocation2 + $0x108] sm:$0xff] 0.0
      %322 = vst [vmem:[#allocation2 + $0x110] sm:$0xff] 0.0
      %323 = vst [vmem:[#allocation2 + $0x118] sm:$0xff] 0.0
      %324 = vst [vmem:[#allocation2 + $0x120] sm:$0xff] 0.0
      %325 = vst [vmem:[#allocation2 + $0x128] sm:$0xff] 0.0
      %326 = vst [vmem:[#allocation2 + $0x130] sm:$0xff] 0.0
      %327 = vst [vmem:[#allocation2 + $0x138] sm:$0xff] 0.0
      %328 = vst [vmem:[#allocation2 + $0x140] sm:$0xff] 0.0
      %329 = vst [vmem:[#allocation2 + $0x148] sm:$0xff] 0.0
      %330 = vst [vmem:[#allocation2 + $0x150] sm:$0xff] 0.0
      %331 = vst [vmem:[#allocation2 + $0x158] sm:$0xff] 0.0
      %332 = vst [vmem:[#allocation2 + $0x160] sm:$0xff] 0.0
      %333 = vst [vmem:[#allocation2 + $0x168] sm:$0xff] 0.0
      %334 = vst [vmem:[#allocation2 + $0x170] sm:$0xff] 0.0
      %335 = vst [vmem:[#allocation2 + $0x178] sm:$0xff] 0.0
      %336 = vst [vmem:[#allocation2 + $0x180] sm:$0xff] 0.0
      %337 = vst [vmem:[#allocation2 + $0x188] sm:$0xff] 0.0
      %338 = vst [vmem:[#allocation2 + $0x190] sm:$0xff] 0.0
      %339 = vst [vmem:[#allocation2 + $0x198] sm:$0xff] 0.0
      %340 = vst [vmem:[#allocation2 + $0x1a0] sm:$0xff] 0.0
      %341 = vst [vmem:[#allocation2 + $0x1a8] sm:$0xff] 0.0
      %v342 = vld [vmem:[%s219] sm:$0xff]
      %v343 = vld [vmem:[%s219 + $0x8] sm:$0xff]
      %v344 = vld [vmem:[%s219 + $0x10] sm:$0xff]
      %v345 = vld [vmem:[%s219 + $0x18] sm:$0xff]
      %v346 = vld [vmem:[%s219 + $0x20] sm:$0xff]
      %v347 = vld [vmem:[%s219 + $0x28] sm:$0xff]
      %v348 = vld [vmem:[%s219 + $0x30] sm:$0xff]
      %v349 = vld [vmem:[%s219 + $0x38] sm:$0xff]
      %v350 = vld [vmem:[%s219 + $0x40] sm:$0xff]
      %v351 = vld [vmem:[%s219 + $0x48] sm:$0xff]
      %v352 = vld [vmem:[%s219 + $0x50] sm:$0xff]
      %v353 = vld [vmem:[%s219 + $0x58] sm:$0xff]
      %v354 = vld [vmem:[%s219 + $0x60] sm:$0xff]
      %v355 = vld [vmem:[%s219 + $0x68] sm:$0xff]
      %v356 = vld [vmem:[%s219 + $0x70] sm:$0xff]
      %v357 = vld [vmem:[%s219 + $0x78] sm:$0xff]
      %v358 = vld [vmem:[%s219 + $0x80] sm:$0xff]
      %v359 = vld [vmem:[%s219 + $0x88] sm:$0xff]
      %v360 = vld [vmem:[%s219 + $0x90] sm:$0xff]
      %v361 = vld [vmem:[%s219 + $0x98] sm:$0xff]
      %v362 = vld [vmem:[%s219 + $0xa0] sm:$0xff]
      %v363 = vld [vmem:[%s219 + $0xa8] sm:$0xff]
      %v364 = vld [vmem:[%s219 + $0xb0] sm:$0xff]
      %v365 = vld [vmem:[%s219 + $0xb8] sm:$0xff]
      %v366 = vld [vmem:[%s219 + $0xc0] sm:$0xff]
      %v367 = vld [vmem:[%s219 + $0xc8] sm:$0xff]
      %v368 = vld [vmem:[%s219 + $0xd0] sm:$0xff]
      %v369 = vld [vmem:[%s219 + $0xd8] sm:$0xff]
      %v370 = vld [vmem:[%s219 + $0xe0] sm:$0xff]
      %v371 = vld [vmem:[%s219 + $0xe8] sm:$0xff]
      %v372 = vld [vmem:[%s219 + $0xf0] sm:$0xff]
      %v373 = vld [vmem:[%s219 + $0xf8] sm:$0xff]
      %v374 = vlaneseq
      %v375 = vshrl.u32 %v374, 7
      %v376 = vsub.s32 0, %v375
      %v377 = vrot.slane %v246, %v376
      %vm378 = vcmask 261120
      %v380 = vsel %vm378, %v342, 0
      %v383 = vsel %vm378, %v343, 0
      %v386 = vsel %vm378, %v344, 0
      %v389 = vsel %vm378, %v345, 0
      %v392 = vsel %vm378, %v346, 0
      %v395 = vsel %vm378, %v347, 0
      %v398 = vsel %vm378, %v348, 0
      %v401 = vsel %vm378, %v349, 0
      %v404 = vsel %vm378, %v350, 0
      %v407 = vsel %vm378, %v351, 0
      %v410 = vsel %vm378, %v352, 0
      %v413 = vsel %vm378, %v353, 0
      %v416 = vsel %vm378, %v354, 0
      %v419 = vsel %vm378, %v355, 0
      %v422 = vsel %vm378, %v356, 0
      %v425 = vsel %vm378, %v357, 0
      %v428 = vsel %vm378, %v358, 0
      %v431 = vsel %vm378, %v359, 0
      %v434 = vsel %vm378, %v360, 0
      %v437 = vsel %vm378, %v361, 0
      %v440 = vsel %vm378, %v362, 0
      %v443 = vsel %vm378, %v363, 0
      %v446 = vsel %vm378, %v364, 0
      %v449 = vsel %vm378, %v365, 0
      %v452 = vsel %vm378, %v366, 0
      %v455 = vsel %vm378, %v367, 0
      %v458 = vsel %vm378, %v368, 0
      %v461 = vsel %vm378, %v369, 0
      %v464 = vsel %vm378, %v370, 0
      %v467 = vsel %vm378, %v371, 0
      %v470 = vsel %vm378, %v372, 0
      %v473 = vsel %vm378, %v373, 0
      %475 = vmatprep.subr.mxu0 0.0
      %476 = vmatpush1.msra.mxu0 %v225
      %477 = vmatprep.subr.mxu0 0.0
      %478 = vmatpush1.msra.mxu0 %v226
      %479 = vmatprep.subr.mxu0 0.0
      %480 = vmatpush1.msra.mxu0 %v227
      %481 = vmatprep.subr.mxu0 0.0
      %482 = vmatpush1.msra.mxu0 %v228
      %483 = vmatprep.subr.mxu0 0.0
      %484 = vmatpush1.msra.mxu0 0.0
      %485 = vmatprep.subr.mxu0 0.0
      %486 = vmatpush1.msra.mxu0 0.0
      %487 = vmatprep.subr.mxu0 0.0
      %488 = vmatpush1.msra.mxu0 0.0
      %489 = vmatprep.subr.mxu0 0.0
      %490 = vmatpush1.msra.mxu0 0.0
      %491 = vmatprep.subr.mxu0 0.0
      %492 = vmatpush1.msra.mxu0 0.0
      %493 = vmatprep.subr.mxu0 0.0
      %494 = vmatpush1.msra.mxu0 0.0
      %495 = vmatprep.subr.mxu0 0.0
      %496 = vmatpush1.msra.mxu0 0.0
      %497 = vmatprep.subr.mxu0 0.0
      %498 = vmatpush1.msra.mxu0 0.0
      %499 = vmatprep.subr.mxu0 0.0
      %500 = vmatpush1.msra.mxu0 0.0
      %501 = vmatprep.subr.mxu0 0.0
      %502 = vmatpush1.msra.mxu0 0.0
      %503 = vmatprep.subr.mxu0 0.0
      %504 = vmatpush1.msra.mxu0 0.0
      %505 = vmatprep.subr.mxu0 0.0
      %506 = vmatpush1.msra.mxu0 0.0
      %507 = vmatprep.subr.mxu0 0.0
      %508 = vmatpush1.msra.mxu0 0.0
      %509 = vmatprep.subr.mxu0 0.0
      %510 = vmatpush1.msra.mxu0 0.0
      %511 = vmatprep.subr.mxu0 0.0
      %512 = vmatpush1.msra.mxu0 0.0
      %513 = vmatprep.subr.mxu0 0.0
      %514 = vmatpush1.msra.mxu0 0.0
      %515 = vmatprep.subr.mxu0 0.0
      %516 = vmatpush1.msra.mxu0 0.0
      %517 = vmatprep.subr.mxu0 0.0
      %518 = vmatpush1.msra.mxu0 0.0
      %519 = vmatprep.subr.mxu0 0.0
      %520 = vmatpush1.msra.mxu0 0.0
      %521 = vmatprep.subr.mxu0 0.0
      %522 = vmatpush1.msra.mxu0 0.0
      %523 = vmatprep.subr.mxu0 0.0
      %524 = vmatpush1.msra.mxu0 0.0
      %525 = vmatprep.subr.mxu0 0.0
      %526 = vmatpush1.msra.mxu0 0.0
      %527 = vmatprep.subr.mxu0 0.0
      %528 = vmatpush1.msra.mxu0 0.0
      %529 = vmatprep.subr.mxu0 0.0
      %530 = vmatpush1.msra.mxu0 0.0
      %531 = vmatprep.subr.mxu0 0.0
      %532 = vmatpush1.msra.mxu0 0.0
      %533 = vmatprep.subr.mxu0 0.0
      %534 = vmatpush1.msra.mxu0 0.0
      %535 = vmatprep.subr.mxu0 0.0
      %536 = vmatpush1.msra.mxu0 0.0
      %537 = vmatprep.subr.mxu0 0.0
      %538 = vmatpush1.msra.mxu0 0.0
      %539 = vmatprep.mubr.f32.mxu0 0.0
      %540 = vmatmul.mubr.f32.gmra.mrb[0].mxu0 %v380
      %v541 = vpop.f32.mrb[0].mxu0
      %v542 = vadd.f32 %v377, %v541
      %v543 = vpop.f32.mrb[0].mxu0
      %544 = vmatprep.mubr.f32.mxu0 0.0
      %545 = vmatmul.mubr.f32.gmra.mrb[0].mxu0 %v383
      %v546 = vpop.f32.mrb[0].mxu0
      %v547 = vadd.f32 %v377, %v546
      %v548 = vpop.f32.mrb[0].mxu0
      %549 = vmatprep.mubr.f32.mxu0 0.0
      %550 = vmatmul.mubr.f32.gmra.mrb[0].mxu0 %v386
      %v551 = vpop.f32.mrb[0].mxu0
      %v552 = vadd.f32 %v377, %v551
      %v553 = vpop.f32.mrb[0].mxu0
      %554 = vmatprep.mubr.f32.mxu0 0.0
      %555 = vmatmul.mubr.f32.gmra.mrb[0].mxu0 %v389
      %v556 = vpop.f32.mrb[0].mxu0
      %v557 = vadd.f32 %v377, %v556
      %v558 = vpop.f32.mrb[0].mxu0
      %559 = vmatprep.mubr.f32.mxu0 0.0
      %560 = vmatmul.mubr.f32.gmra.mrb[0].mxu0 %v392
      %v561 = vpop.f32.mrb[0].mxu0
      %v562 = vadd.f32 %v377, %v561
      %v563 = vpop.f32.mrb[0].mxu0
      %564 = vmatprep.mubr.f32.mxu0 0.0
      %565 = vmatmul.mubr.f32.gmra.mrb[0].mxu0 %v395
      %v566 = vpop.f32.mrb[0].mxu0
      %v567 = vadd.f32 %v377, %v566
      %v568 = vpop.f32.mrb[0].mxu0
      %569 = vmatprep.mubr.f32.mxu0 0.0
      %570 = vmatmul.mubr.f32.gmra.mrb[0].mxu0 %v398
      %v571 = vpop.f32.mrb[0].mxu0
      %v572 = vadd.f32 %v377, %v571
      %v573 = vpop.f32.mrb[0].mxu0
      %574 = vmatprep.mubr.f32.mxu0 0.0
      %575 = vmatmul.mubr.f32.gmra.mrb[0].mxu0 %v401
      %v576 = vpop.f32.mrb[0].mxu0
      %v577 = vadd.f32 %v377, %v576
      %v578 = vpop.f32.mrb[0].mxu0
      %579 = vmatprep.mubr.f32.mxu0 0.0
      %580 = vmatmul.mubr.f32.gmra.mrb[0].mxu0 %v404
      %v581 = vpop.f32.mrb[0].mxu0
      %v582 = vadd.f32 %v377, %v581
      %v583 = vpop.f32.mrb[0].mxu0
      %584 = vmatprep.mubr.f32.mxu0 0.0
      %585 = vmatmul.mubr.f32.gmra.mrb[0].mxu0 %v407
      %v586 = vpop.f32.mrb[0].mxu0
      %v587 = vadd.f32 %v377, %v586
      %v588 = vpop.f32.mrb[0].mxu0
      %589 = vmatprep.mubr.f32.mxu0 0.0
      %590 = vmatmul.mubr.f32.gmra.mrb[0].mxu0 %v410
      %v591 = vpop.f32.mrb[0].mxu0
      %v592 = vadd.f32 %v377, %v591
      %v593 = vpop.f32.mrb[0].mxu0
      %594 = vmatprep.mubr.f32.mxu0 0.0
      %595 = vmatmul.mubr.f32.gmra.mrb[0].mxu0 %v413
      %v596 = vpop.f32.mrb[0].mxu0
      %v597 = vadd.f32 %v377, %v596
      %v598 = vpop.f32.mrb[0].mxu0
      %599 = vmatprep.mubr.f32.mxu0 0.0
      %600 = vmatmul.mubr.f32.gmra.mrb[0].mxu0 %v416
      %v601 = vpop.f32.mrb[0].mxu0
      %v602 = vadd.f32 %v377, %v601
      %v603 = vpop.f32.mrb[0].mxu0
      %604 = vmatprep.mubr.f32.mxu0 0.0
      %605 = vmatmul.mubr.f32.gmra.mrb[0].mxu0 %v419
      %v606 = vpop.f32.mrb[0].mxu0
      %v607 = vadd.f32 %v377, %v606
      %v608 = vpop.f32.mrb[0].mxu0
      %609 = vmatprep.mubr.f32.mxu0 0.0
      %610 = vmatmul.mubr.f32.gmra.mrb[0].mxu0 %v422
      %v611 = vpop.f32.mrb[0].mxu0
      %v612 = vadd.f32 %v377, %v611
      %v613 = vpop.f32.mrb[0].mxu0
      %614 = vmatprep.mubr.f32.mxu0 0.0
      %615 = vmatmul.mubr.f32.gmra.mrb[0].mxu0 %v425
      %v616 = vpop.f32.mrb[0].mxu0
      %v617 = vadd.f32 %v377, %v616
      %v618 = vpop.f32.mrb[0].mxu0
      %619 = vmatprep.mubr.f32.mxu0 0.0
      %620 = vmatmul.mubr.f32.gmra.mrb[0].mxu0 %v428
      %v621 = vpop.f32.mrb[0].mxu0
      %v622 = vadd.f32 %v377, %v621
      %v623 = vpop.f32.mrb[0].mxu0
      %624 = vmatprep.mubr.f32.mxu0 0.0
      %625 = vmatmul.mubr.f32.gmra.mrb[0].mxu0 %v431
      %v626 = vpop.f32.mrb[0].mxu0
      %v627 = vadd.f32 %v377, %v626
      %v628 = vpop.f32.mrb[0].mxu0
      %629 = vmatprep.mubr.f32.mxu0 0.0
      %630 = vmatmul.mubr.f32.gmra.mrb[0].mxu0 %v434
      %v631 = vpop.f32.mrb[0].mxu0
      %v632 = vadd.f32 %v377, %v631
      %v633 = vpop.f32.mrb[0].mxu0
      %634 = vmatprep.mubr.f32.mxu0 0.0
      %635 = vmatmul.mubr.f32.gmra.mrb[0].mxu0 %v437
      %v636 = vpop.f32.mrb[0].mxu0
      %v637 = vadd.f32 %v377, %v636
      %v638 = vpop.f32.mrb[0].mxu0
      %639 = vmatprep.mubr.f32.mxu0 0.0
      %640 = vmatmul.mubr.f32.gmra.mrb[0].mxu0 %v440
      %v641 = vpop.f32.mrb[0].mxu0
      %v642 = vadd.f32 %v377, %v641
      %v643 = vpop.f32.mrb[0].mxu0
      %644 = vmatprep.mubr.f32.mxu0 0.0
      %645 = vmatmul.mubr.f32.gmra.mrb[0].mxu0 %v443
      %v646 = vpop.f32.mrb[0].mxu0
      %v647 = vadd.f32 %v377, %v646
      %v648 = vpop.f32.mrb[0].mxu0
      %649 = vmatprep.mubr.f32.mxu0 0.0
      %650 = vmatmul.mubr.f32.gmra.mrb[0].mxu0 %v446
      %v651 = vpop.f32.mrb[0].mxu0
      %v652 = vadd.f32 %v377, %v651
      %v653 = vpop.f32.mrb[0].mxu0
      %654 = vmatprep.mubr.f32.mxu0 0.0
      %655 = vmatmul.mubr.f32.gmra.mrb[0].mxu0 %v449
      %v656 = vpop.f32.mrb[0].mxu0
      %v657 = vadd.f32 %v377, %v656
      %v658 = vpop.f32.mrb[0].mxu0
      %659 = vmatprep.mubr.f32.mxu0 0.0
      %660 = vmatmul.mubr.f32.gmra.mrb[0].mxu0 %v452
      %v661 = vpop.f32.mrb[0].mxu0
      %v662 = vadd.f32 %v377, %v661
      %v663 = vpop.f32.mrb[0].mxu0
      %664 = vmatprep.mubr.f32.mxu0 0.0
      %665 = vmatmul.mubr.f32.gmra.mrb[0].mxu0 %v455
      %v666 = vpop.f32.mrb[0].mxu0
      %v667 = vadd.f32 %v377, %v666
      %v668 = vpop.f32.mrb[0].mxu0
      %669 = vmatprep.mubr.f32.mxu0 0.0
      %670 = vmatmul.mubr.f32.gmra.mrb[0].mxu0 %v458
      %v671 = vpop.f32.mrb[0].mxu0
      %v672 = vadd.f32 %v377, %v671
      %v673 = vpop.f32.mrb[0].mxu0
      %674 = vmatprep.mubr.f32.mxu0 0.0
      %675 = vmatmul.mubr.f32.gmra.mrb[0].mxu0 %v461
      %v676 = vpop.f32.mrb[0].mxu0
      %v677 = vadd.f32 %v377, %v676
      %v678 = vpop.f32.mrb[0].mxu0
      %679 = vmatprep.mubr.f32.mxu0 0.0
      %680 = vmatmul.mubr.f32.gmra.mrb[0].mxu0 %v464
      %v681 = vpop.f32.mrb[0].mxu0
      %v682 = vadd.f32 %v377, %v681
      %v683 = vpop.f32.mrb[0].mxu0
      %684 = vmatprep.mubr.f32.mxu0 0.0
      %685 = vmatmul.mubr.f32.gmra.mrb[0].mxu0 %v467
      %v686 = vpop.f32.mrb[0].mxu0
      %v687 = vadd.f32 %v377, %v686
      %v688 = vpop.f32.mrb[0].mxu0
      %689 = vmatprep.mubr.f32.mxu0 0.0
      %690 = vmatmul.mubr.f32.gmra.mrb[0].mxu0 %v470
      %v691 = vpop.f32.mrb[0].mxu0
      %v692 = vadd.f32 %v377, %v691
      %v693 = vpop.f32.mrb[0].mxu0
      %694 = vmatprep.mubr.f32.mxu0 0.0
      %695 = vmatmul.mubr.f32.gmra.mrb[0].mxu0 %v473
      %v696 = vpop.f32.mrb[0].mxu0
      %v697 = vadd.f32 %v377, %v696
      %v698 = vpop.f32.mrb[0].mxu0
      %699 = vdwg.mxu0
      %s700 = scalar_lea.vmem [#allocation2], 24
      %701 = vst [vmem:[%s700 + $0x1] sm:$0xff] %v542
      %702 = vst [vmem:[%s700 + $0x9] sm:$0xff] %v547
      %s703 = scalar_lea.vmem [#allocation2], 48
      %704 = vst [vmem:[%s703 + $0x1] sm:$0xff] %v552
      %705 = vst [vmem:[%s703 + $0x9] sm:$0xff] %v557
      %s706 = scalar_lea.vmem [#allocation2], 72
      %707 = vst [vmem:[%s706 + $0x1] sm:$0xff] %v562
      %708 = vst [vmem:[%s706 + $0x9] sm:$0xff] %v567
      %s709 = scalar_lea.vmem [#allocation2], 96
      %710 = vst [vmem:[%s709 + $0x1] sm:$0xff] %v572
      %711 = vst [vmem:[%s709 + $0x9] sm:$0xff] %v577
      %s712 = scalar_lea.vmem [#allocation2], 120
      %713 = vst [vmem:[%s712 + $0x1] sm:$0xff] %v582
      %714 = vst [vmem:[%s712 + $0x9] sm:$0xff] %v587
      %s715 = scalar_lea.vmem [#allocation2], 144
      %716 = vst [vmem:[%s715 + $0x1] sm:$0xff] %v592
      %717 = vst [vmem:[%s715 + $0x9] sm:$0xff] %v597
      %s718 = scalar_lea.vmem [#allocation2], 168
      %719 = vst [vmem:[%s718 + $0x1] sm:$0xff] %v602
      %720 = vst [vmem:[%s718 + $0x9] sm:$0xff] %v607
      %s721 = scalar_lea.vmem [#allocation2], 192
      %722 = vst [vmem:[%s721 + $0x1] sm:$0xff] %v612
      %723 = vst [vmem:[%s721 + $0x9] sm:$0xff] %v617
      %s724 = scalar_lea.vmem [#allocation2], 216
      %725 = vst [vmem:[%s724 + $0x1] sm:$0xff] %v622
      %726 = vst [vmem:[%s724 + $0x9] sm:$0xff] %v627
      %s727 = scalar_lea.vmem [#allocation2], 240
      %728 = vst [vmem:[%s727 + $0x1] sm:$0xff] %v632
      %729 = vst [vmem:[%s727 + $0x9] sm:$0xff] %v637
      %s730 = scalar_lea.vmem [#allocation2], 264
      %731 = vst [vmem:[%s730 + $0x1] sm:$0xff] %v642
      %732 = vst [vmem:[%s730 + $0x9] sm:$0xff] %v647
      %s733 = scalar_lea.vmem [#allocation2], 288
      %734 = vst [vmem:[%s733 + $0x1] sm:$0xff] %v652
      %735 = vst [vmem:[%s733 + $0x9] sm:$0xff] %v657
      %s736 = scalar_lea.vmem [#allocation2], 312
      %737 = vst [vmem:[%s736 + $0x1] sm:$0xff] %v662
      %738 = vst [vmem:[%s736 + $0x9] sm:$0xff] %v667
      %s739 = scalar_lea.vmem [#allocation2], 336
      %740 = vst [vmem:[%s739 + $0x1] sm:$0xff] %v672
      %741 = vst [vmem:[%s739 + $0x9] sm:$0xff] %v677
      %s742 = scalar_lea.vmem [#allocation2], 360
      %743 = vst [vmem:[%s742 + $0x1] sm:$0xff] %v682
      %744 = vst [vmem:[%s742 + $0x9] sm:$0xff] %v687
      %s745 = scalar_lea.vmem [#allocation2], 384
      %746 = vst [vmem:[%s745 + $0x1] sm:$0xff] %v692
      %747 = vst [vmem:[%s745 + $0x9] sm:$0xff] %v697
      %v748 = vld [vmem:[#allocation2] sm:$0xff]
      %v749 = vld [vmem:[#allocation2 + $0x8] sm:$0xff]
      %v750 = vld [vmem:[#allocation2 + $0x10] sm:$0xff]
      %v751 = vmul.f32 %v748, %v251
      %v752 = vmul.f32 %v749, %v251
      %v753 = vadd.f32 %v287, %v751
      %v754 = vadd.f32 %v287, %v752
      %v755 = vmul.f32 %v748, %v255
      %v756 = vmul.f32 %v749, %v255
      %v757 = vmul.f32 %v750, %v255
      %vm761 = vcmask 1046528
      %v762 = vrot.slane %v755, 1
      %v763 = vrot.slane %v756, 1
      %v764 = vsel %vm761, %v762, %v763
      %v765 = vrot.slane %v757, 1
      %v766 = vsel %vm761, %v763, %v765
      %v769 = vadd.f32 %v753, %v764
      %v770 = vadd.f32 %v754, %v766
      %v771 = vmul.f32 %v748, %v259
      %v772 = vmul.f32 %v749, %v259
      %v773 = vmul.f32 %v750, %v259
      %vm777 = vcmask 1045504
      %v778 = vrot.slane %v771, 2
      %v779 = vrot.slane %v772, 2
      %v780 = vsel %vm777, %v778, %v779
      %v781 = vrot.slane %v773, 2
      %v782 = vsel %vm777, %v779, %v781
      %v785 = vadd.f32 %v769, %v780
      %v786 = vadd.f32 %v770, %v782
      %v787 = vld [vmem:[%s700] sm:$0xff]
      %v788 = vld [vmem:[%s700 + $0x8] sm:$0xff]
      %v789 = vld [vmem:[%s700 + $0x10] sm:$0xff]
      %v790 = vmul.f32 %v787, %v263
      %v791 = vmul.f32 %v788, %v263
      %v792 = vadd.f32 %v785, %v790
      %v793 = vadd.f32 %v786, %v791
      %v794 = vmul.f32 %v787, %v267
      %v795 = vmul.f32 %v788, %v267
      %v796 = vmul.f32 %v789, %v267
      %v800 = vrot.slane %v794, 1
      %v801 = vrot.slane %v795, 1
      %v802 = vsel %vm761, %v800, %v801
      %v803 = vrot.slane %v796, 1
      %v804 = vsel %vm761, %v801, %v803
      %v807 = vadd.f32 %v792, %v802
      %v808 = vadd.f32 %v793, %v804
      %v809 = vmul.f32 %v787, %v271
      %v810 = vmul.f32 %v788, %v271
      %v811 = vmul.f32 %v789, %v271
      %v815 = vrot.slane %v809, 2
      %v816 = vrot.slane %v810, 2
      %v817 = vsel %vm777, %v815, %v816
      %v818 = vrot.slane %v811, 2
      %v819 = vsel %vm777, %v816, %v818
      %v822 = vadd.f32 %v807, %v817
      %v823 = vadd.f32 %v808, %v819
      %v824 = vld [vmem:[%s703] sm:$0xff]
      %v825 = vld [vmem:[%s703 + $0x8] sm:$0xff]
      %v826 = vld [vmem:[%s703 + $0x10] sm:$0xff]
      %v827 = vmul.f32 %v824, %v275
      %v828 = vmul.f32 %v825, %v275
      %v829 = vadd.f32 %v822, %v827
      %v830 = vadd.f32 %v823, %v828
      %v831 = vmul.f32 %v824, %v279
      %v832 = vmul.f32 %v825, %v279
      %v833 = vmul.f32 %v826, %v279
      %v837 = vrot.slane %v831, 1
      %v838 = vrot.slane %v832, 1
      %v839 = vsel %vm761, %v837, %v838
      %v840 = vrot.slane %v833, 1
      %v841 = vsel %vm761, %v838, %v840
      %v844 = vadd.f32 %v829, %v839
      %v845 = vadd.f32 %v830, %v841
      %v846 = vmul.f32 %v824, %v283
      %v847 = vmul.f32 %v825, %v283
      %v848 = vmul.f32 %v826, %v283
      %v852 = vrot.slane %v846, 2
      %v853 = vrot.slane %v847, 2
      %v854 = vsel %vm777, %v852, %v853
      %v855 = vrot.slane %v848, 2
      %v856 = vsel %vm777, %v853, %v855
      %v859 = vadd.f32 %v844, %v854
      %v860 = vadd.f32 %v845, %v856
      %v861 = vmul.f32 %v859, 0.5
      %v862 = vmul.f32 %v860, 0.5
      %v863 = vmul.f32 %v859, 0.70710677
      %v864 = vmul.f32 %v860, 0.70710677
      %v865 = vand.u32 2147483647, %v863
      %v866 = vand.u32 2147483647, %v864
      %v867 = vmul.f32 %v865, 0.3275911
      %v868 = vmul.f32 %v866, 0.3275911
      %v869 = vadd.f32 %v867, 1.0
      %v870 = vadd.f32 %v868, 1.0
      %v871 = vrcp.pop %v869
      %v872 = vmul.f32 1.0, %v871
      %v873 = vrcp.pop %v870
      %v874 = vmul.f32 1.0, %v873
      %v875 = vmul.f32 %v872, 1.0614054
      %v876 = vmul.f32 %v874, 1.0614054
      %v877 = vadd.f32 %v875, -1.4531521
      %v878 = vadd.f32 %v876, -1.4531521
      %v879 = vmul.f32 %v877, %v872
      %v880 = vmul.f32 %v878, %v874
      %v881 = vadd.f32 %v879, 1.4214138
      %v882 = vadd.f32 %v880, 1.4214138
      %v883 = vmul.f32 %v881, %v872
      %v884 = vmul.f32 %v882, %v874
      %v885 = vadd.f32 %v883, -0.28449672
      %v886 = vadd.f32 %v884, -0.28449672
      %v887 = vmul.f32 %v885, %v872
      %v888 = vmul.f32 %v886, %v874
      %v889 = vadd.f32 %v887, 0.2548296
      %v890 = vadd.f32 %v888, 0.2548296
      %v891 = vmul.f32 %v889, %v872
      %v892 = vmul.f32 %v890, %v874
      %v893 = vsub.f32 0.0, %v865
      %v894 = vsub.f32 0.0, %v866
      %v895 = vmul.f32 %v893, %v865
      %v896 = vmul.f32 %v894, %v866
      %v897 = vmul.f32 %v895, 1.442695
      %v898 = vpow.pop %v897
      %v899 = vmul.f32 %v896, 1.442695
      %v900 = vpow.pop %v899
      %v901 = vmul.f32 %v891, %v898
      %v902 = vmul.f32 %v892, %v900
      %v903 = vsub.f32 1.0, %v901
      %v904 = vsub.f32 1.0, %v902
      %vm905 = vcmp.ge.f32.partialorder %v863, 0.0
      %vm906 = vcmp.ge.f32.partialorder %v864, 0.0
      %v907 = vsub.f32 0.0, %v903
      %v908 = vsub.f32 0.0, %v904
      %v909 = vsel %vm905, %v903, %v907
      %v910 = vsel %vm906, %v904, %v908
      %v911 = vadd.f32 %v909, 1.0
      %v912 = vadd.f32 %v910, 1.0
      %v913 = vmul.f32 %v861, %v911
      %v914 = vmul.f32 %v862, %v912
      %915 = vst [vmem:[#allocation3] sm:$0xff] %v913
      %916 = vst [vmem:[#allocation3 + $0x8] sm:$0xff] %v914
      %v917 = vld [vmem:[%s700] sm:$0xff]
      %v918 = vld [vmem:[%s700 + $0x8] sm:$0xff]
      %v919 = vld [vmem:[%s700 + $0x10] sm:$0xff]
      %v920 = vmul.f32 %v917, %v251
      %v921 = vmul.f32 %v918, %v251
      %v922 = vadd.f32 %v287, %v920
      %v923 = vadd.f32 %v287, %v921
      %v924 = vmul.f32 %v917, %v255
      %v925 = vmul.f32 %v918, %v255
      %v926 = vmul.f32 %v919, %v255
      %v930 = vrot.slane %v924, 1
      %v931 = vrot.slane %v925, 1
      %v932 = vsel %vm761, %v930, %v931
      %v933 = vrot.slane %v926, 1
      %v934 = vsel %vm761, %v931, %v933
      %v937 = vadd.f32 %v922, %v932
      %v938 = vadd.f32 %v923, %v934
      %v939 = vmul.f32 %v917, %v259
      %v940 = vmul.f32 %v918, %v259
      %v941 = vmul.f32 %v919, %v259
      %v945 = vrot.slane %v939, 2
      %v946 = vrot.slane %v940, 2
      %v947 = vsel %vm777, %v945, %v946
      %v948 = vrot.slane %v941, 2
      %v949 = vsel %vm777, %v946, %v948
      %v952 = vadd.f32 %v937, %v947
      %v953 = vadd.f32 %v938, %v949
      %v954 = vld [vmem:[%s703] sm:$0xff]
      %v955 = vld [vmem:[%s703 + $0x8] sm:$0xff]
      %v956 = vld [vmem:[%s703 + $0x10] sm:$0xff]
      %v957 = vmul.f32 %v954, %v263
      %v958 = vmul.f32 %v955, %v263
      %v959 = vadd.f32 %v952, %v957
      %v960 = vadd.f32 %v953, %v958
      %v961 = vmul.f32 %v954, %v267
      %v962 = vmul.f32 %v955, %v267
      %v963 = vmul.f32 %v956, %v267
      %v967 = vrot.slane %v961, 1
      %v968 = vrot.slane %v962, 1
      %v969 = vsel %vm761, %v967, %v968
      %v970 = vrot.slane %v963, 1
      %v971 = vsel %vm761, %v968, %v970
      %v974 = vadd.f32 %v959, %v969
      %v975 = vadd.f32 %v960, %v971
      %v976 = vmul.f32 %v954, %v271
      %v977 = vmul.f32 %v955, %v271
      %v978 = vmul.f32 %v956, %v271
      %v982 = vrot.slane %v976, 2
      %v983 = vrot.slane %v977, 2
      %v984 = vsel %vm777, %v982, %v983
      %v985 = vrot.slane %v978, 2
      %v986 = vsel %vm777, %v983, %v985
      %v989 = vadd.f32 %v974, %v984
      %v990 = vadd.f32 %v975, %v986
      %v991 = vld [vmem:[%s706] sm:$0xff]
      %v992 = vld [vmem:[%s706 + $0x8] sm:$0xff]
      %v993 = vld [vmem:[%s706 + $0x10] sm:$0xff]
      %v994 = vmul.f32 %v991, %v275
      %v995 = vmul.f32 %v992, %v275
      %v996 = vadd.f32 %v989, %v994
      %v997 = vadd.f32 %v990, %v995
      %v998 = vmul.f32 %v991, %v279
      %v999 = vmul.f32 %v992, %v279
      %v1000 = vmul.f32 %v993, %v279
      %v1004 = vrot.slane %v998, 1
      %v1005 = vrot.slane %v999, 1
      %v1006 = vsel %vm761, %v1004, %v1005
      %v1007 = vrot.slane %v1000, 1
      %v1008 = vsel %vm761, %v1005, %v1007
      %v1011 = vadd.f32 %v996, %v1006
      %v1012 = vadd.f32 %v997, %v1008
      %v1013 = vmul.f32 %v991, %v283
      %v1014 = vmul.f32 %v992, %v283
      %v1015 = vmul.f32 %v993, %v283
      %v1019 = vrot.slane %v1013, 2
      %v1020 = vrot.slane %v1014, 2
      %v1021 = vsel %vm777, %v1019, %v1020
      %v1022 = vrot.slane %v1015, 2
      %v1023 = vsel %vm777, %v1020, %v1022
      %v1026 = vadd.f32 %v1011, %v1021
      %v1027 = vadd.f32 %v1012, %v1023
      %v1028 = vmul.f32 %v1026, 0.5
      %v1029 = vmul.f32 %v1027, 0.5
      %v1030 = vmul.f32 %v1026, 0.70710677
      %v1031 = vmul.f32 %v1027, 0.70710677
      %v1032 = vand.u32 2147483647, %v1030
      %v1033 = vand.u32 2147483647, %v1031
      %v1034 = vmul.f32 %v1032, 0.3275911
      %v1035 = vmul.f32 %v1033, 0.3275911
      %v1036 = vadd.f32 %v1034, 1.0
      %v1037 = vadd.f32 %v1035, 1.0
      %v1038 = vrcp.pop %v1036
      %v1039 = vmul.f32 1.0, %v1038
      %v1040 = vrcp.pop %v1037
      %v1041 = vmul.f32 1.0, %v1040
      %v1042 = vmul.f32 %v1039, 1.0614054
      %v1043 = vmul.f32 %v1041, 1.0614054
      %v1044 = vadd.f32 %v1042, -1.4531521
      %v1045 = vadd.f32 %v1043, -1.4531521
      %v1046 = vmul.f32 %v1044, %v1039
      %v1047 = vmul.f32 %v1045, %v1041
      %v1048 = vadd.f32 %v1046, 1.4214138
      %v1049 = vadd.f32 %v1047, 1.4214138
      %v1050 = vmul.f32 %v1048, %v1039
      %v1051 = vmul.f32 %v1049, %v1041
      %v1052 = vadd.f32 %v1050, -0.28449672
      %v1053 = vadd.f32 %v1051, -0.28449672
      %v1054 = vmul.f32 %v1052, %v1039
      %v1055 = vmul.f32 %v1053, %v1041
      %v1056 = vadd.f32 %v1054, 0.2548296
      %v1057 = vadd.f32 %v1055, 0.2548296
      %v1058 = vmul.f32 %v1056, %v1039
      %v1059 = vmul.f32 %v1057, %v1041
      %v1060 = vsub.f32 0.0, %v1032
      %v1061 = vsub.f32 0.0, %v1033
      %v1062 = vmul.f32 %v1060, %v1032
      %v1063 = vmul.f32 %v1061, %v1033
      %v1064 = vmul.f32 %v1062, 1.442695
      %v1065 = vpow.pop %v1064
      %v1066 = vmul.f32 %v1063, 1.442695
      %v1067 = vpow.pop %v1066
      %v1068 = vmul.f32 %v1058, %v1065
      %v1069 = vmul.f32 %v1059, %v1067
      %v1070 = vsub.f32 1.0, %v1068
      %v1071 = vsub.f32 1.0, %v1069
      %vm1072 = vcmp.ge.f32.partialorder %v1030, 0.0
      %vm1073 = vcmp.ge.f32.partialorder %v1031, 0.0
      %v1074 = vsub.f32 0.0, %v1070
      %v1075 = vsub.f32 0.0, %v1071
      %v1076 = vsel %vm1072, %v1070, %v1074
      %v1077 = vsel %vm1073, %v1071, %v1075
      %v1078 = vadd.f32 %v1076, 1.0
      %v1079 = vadd.f32 %v1077, 1.0
      %v1080 = vmul.f32 %v1028, %v1078
      %v1081 = vmul.f32 %v1029, %v1079
      %1082 = vst [vmem:[#allocation3 + $0x10] sm:$0xff] %v1080
      %1083 = vst [vmem:[#allocation3 + $0x18] sm:$0xff] %v1081
      %v1084 = vld [vmem:[%s703] sm:$0xff]
      %v1085 = vld [vmem:[%s703 + $0x8] sm:$0xff]
      %v1086 = vld [vmem:[%s703 + $0x10] sm:$0xff]
      %v1087 = vmul.f32 %v1084, %v251
      %v1088 = vmul.f32 %v1085, %v251
      %v1089 = vadd.f32 %v287, %v1087
      %v1090 = vadd.f32 %v287, %v1088
      %v1091 = vmul.f32 %v1084, %v255
      %v1092 = vmul.f32 %v1085, %v255
      %v1093 = vmul.f32 %v1086, %v255
      %v1097 = vrot.slane %v1091, 1
      %v1098 = vrot.slane %v1092, 1
      %v1099 = vsel %vm761, %v1097, %v1098
      %v1100 = vrot.slane %v1093, 1
      %v1101 = vsel %vm761, %v1098, %v1100
      %v1104 = vadd.f32 %v1089, %v1099
      %v1105 = vadd.f32 %v1090, %v1101
      %v1106 = vmul.f32 %v1084, %v259
      %v1107 = vmul.f32 %v1085, %v259
      %v1108 = vmul.f32 %v1086, %v259
      %v1112 = vrot.slane %v1106, 2
      %v1113 = vrot.slane %v1107, 2
      %v1114 = vsel %vm777, %v1112, %v1113
      %v1115 = vrot.slane %v1108, 2
      %v1116 = vsel %vm777, %v1113, %v1115
      %v1119 = vadd.f32 %v1104, %v1114
      %v1120 = vadd.f32 %v1105, %v1116
      %v1121 = vld [vmem:[%s706] sm:$0xff]
      %v1122 = vld [vmem:[%s706 + $0x8] sm:$0xff]
      %v1123 = vld [vmem:[%s706 + $0x10] sm:$0xff]
      %v1124 = vmul.f32 %v1121, %v263
      %v1125 = vmul.f32 %v1122, %v263
      %v1126 = vadd.f32 %v1119, %v1124
      %v1127 = vadd.f32 %v1120, %v1125
      %v1128 = vmul.f32 %v1121, %v267
      %v1129 = vmul.f32 %v1122, %v267
      %v1130 = vmul.f32 %v1123, %v267
      %v1134 = vrot.slane %v1128, 1
      %v1135 = vrot.slane %v1129, 1
      %v1136 = vsel %vm761, %v1134, %v1135
      %v1137 = vrot.slane %v1130, 1
      %v1138 = vsel %vm761, %v1135, %v1137
      %v1141 = vadd.f32 %v1126, %v1136
      %v1142 = vadd.f32 %v1127, %v1138
      %v1143 = vmul.f32 %v1121, %v271
      %v1144 = vmul.f32 %v1122, %v271
      %v1145 = vmul.f32 %v1123, %v271
      %v1149 = vrot.slane %v1143, 2
      %v1150 = vrot.slane %v1144, 2
      %v1151 = vsel %vm777, %v1149, %v1150
      %v1152 = vrot.slane %v1145, 2
      %v1153 = vsel %vm777, %v1150, %v1152
      %v1156 = vadd.f32 %v1141, %v1151
      %v1157 = vadd.f32 %v1142, %v1153
      %v1158 = vld [vmem:[%s709] sm:$0xff]
      %v1159 = vld [vmem:[%s709 + $0x8] sm:$0xff]
      %v1160 = vld [vmem:[%s709 + $0x10] sm:$0xff]
      %v1161 = vmul.f32 %v1158, %v275
      %v1162 = vmul.f32 %v1159, %v275
      %v1163 = vadd.f32 %v1156, %v1161
      %v1164 = vadd.f32 %v1157, %v1162
      %v1165 = vmul.f32 %v1158, %v279
      %v1166 = vmul.f32 %v1159, %v279
      %v1167 = vmul.f32 %v1160, %v279
      %v1171 = vrot.slane %v1165, 1
      %v1172 = vrot.slane %v1166, 1
      %v1173 = vsel %vm761, %v1171, %v1172
      %v1174 = vrot.slane %v1167, 1
      %v1175 = vsel %vm761, %v1172, %v1174
      %v1178 = vadd.f32 %v1163, %v1173
      %v1179 = vadd.f32 %v1164, %v1175
      %v1180 = vmul.f32 %v1158, %v283
      %v1181 = vmul.f32 %v1159, %v283
      %v1182 = vmul.f32 %v1160, %v283
      %v1186 = vrot.slane %v1180, 2
      %v1187 = vrot.slane %v1181, 2
      %v1188 = vsel %vm777, %v1186, %v1187
      %v1189 = vrot.slane %v1182, 2
      %v1190 = vsel %vm777, %v1187, %v1189
      %v1193 = vadd.f32 %v1178, %v1188
      %v1194 = vadd.f32 %v1179, %v1190
      %v1195 = vmul.f32 %v1193, 0.5
      %v1196 = vmul.f32 %v1194, 0.5
      %v1197 = vmul.f32 %v1193, 0.70710677
      %v1198 = vmul.f32 %v1194, 0.70710677
      %v1199 = vand.u32 2147483647, %v1197
      %v1200 = vand.u32 2147483647, %v1198
      %v1201 = vmul.f32 %v1199, 0.3275911
      %v1202 = vmul.f32 %v1200, 0.3275911
      %v1203 = vadd.f32 %v1201, 1.0
      %v1204 = vadd.f32 %v1202, 1.0
      %v1205 = vrcp.pop %v1203
      %v1206 = vmul.f32 1.0, %v1205
      %v1207 = vrcp.pop %v1204
      %v1208 = vmul.f32 1.0, %v1207
      %v1209 = vmul.f32 %v1206, 1.0614054
      %v1210 = vmul.f32 %v1208, 1.0614054
      %v1211 = vadd.f32 %v1209, -1.4531521
      %v1212 = vadd.f32 %v1210, -1.4531521
      %v1213 = vmul.f32 %v1211, %v1206
      %v1214 = vmul.f32 %v1212, %v1208
      %v1215 = vadd.f32 %v1213, 1.4214138
      %v1216 = vadd.f32 %v1214, 1.4214138
      %v1217 = vmul.f32 %v1215, %v1206
      %v1218 = vmul.f32 %v1216, %v1208
      %v1219 = vadd.f32 %v1217, -0.28449672
      %v1220 = vadd.f32 %v1218, -0.28449672
      %v1221 = vmul.f32 %v1219, %v1206
      %v1222 = vmul.f32 %v1220, %v1208
      %v1223 = vadd.f32 %v1221, 0.2548296
      %v1224 = vadd.f32 %v1222, 0.2548296
      %v1225 = vmul.f32 %v1223, %v1206
      %v1226 = vmul.f32 %v1224, %v1208
      %v1227 = vsub.f32 0.0, %v1199
      %v1228 = vsub.f32 0.0, %v1200
      %v1229 = vmul.f32 %v1227, %v1199
      %v1230 = vmul.f32 %v1228, %v1200
      %v1231 = vmul.f32 %v1229, 1.442695
      %v1232 = vpow.pop %v1231
      %v1233 = vmul.f32 %v1230, 1.442695
      %v1234 = vpow.pop %v1233
      %v1235 = vmul.f32 %v1225, %v1232
      %v1236 = vmul.f32 %v1226, %v1234
      %v1237 = vsub.f32 1.0, %v1235
      %v1238 = vsub.f32 1.0, %v1236
      %vm1239 = vcmp.ge.f32.partialorder %v1197, 0.0
      %vm1240 = vcmp.ge.f32.partialorder %v1198, 0.0
      %v1241 = vsub.f32 0.0, %v1237
      %v1242 = vsub.f32 0.0, %v1238
      %v1243 = vsel %vm1239, %v1237, %v1241
      %v1244 = vsel %vm1240, %v1238, %v1242
      %v1245 = vadd.f32 %v1243, 1.0
      %v1246 = vadd.f32 %v1244, 1.0
      %v1247 = vmul.f32 %v1195, %v1245
      %v1248 = vmul.f32 %v1196, %v1246
      %1249 = vst [vmem:[#allocation3 + $0x20] sm:$0xff] %v1247
      %1250 = vst [vmem:[#allocation3 + $0x28] sm:$0xff] %v1248
      %v1251 = vld [vmem:[%s706] sm:$0xff]
      %v1252 = vld [vmem:[%s706 + $0x8] sm:$0xff]
      %v1253 = vld [vmem:[%s706 + $0x10] sm:$0xff]
      %v1254 = vmul.f32 %v1251, %v251
      %v1255 = vmul.f32 %v1252, %v251
      %v1256 = vadd.f32 %v287, %v1254
      %v1257 = vadd.f32 %v287, %v1255
      %v1258 = vmul.f32 %v1251, %v255
      %v1259 = vmul.f32 %v1252, %v255
      %v1260 = vmul.f32 %v1253, %v255
      %v1264 = vrot.slane %v1258, 1
      %v1265 = vrot.slane %v1259, 1
      %v1266 = vsel %vm761, %v1264, %v1265
      %v1267 = vrot.slane %v1260, 1
      %v1268 = vsel %vm761, %v1265, %v1267
      %v1271 = vadd.f32 %v1256, %v1266
      %v1272 = vadd.f32 %v1257, %v1268
      %v1273 = vmul.f32 %v1251, %v259
      %v1274 = vmul.f32 %v1252, %v259
      %v1275 = vmul.f32 %v1253, %v259
      %v1279 = vrot.slane %v1273, 2
      %v1280 = vrot.slane %v1274, 2
      %v1281 = vsel %vm777, %v1279, %v1280
      %v1282 = vrot.slane %v1275, 2
      %v1283 = vsel %vm777, %v1280, %v1282
      %v1286 = vadd.f32 %v1271, %v1281
      %v1287 = vadd.f32 %v1272, %v1283
      %v1288 = vld [vmem:[%s709] sm:$0xff]
      %v1289 = vld [vmem:[%s709 + $0x8] sm:$0xff]
      %v1290 = vld [vmem:[%s709 + $0x10] sm:$0xff]
      %v1291 = vmul.f32 %v1288, %v263
      %v1292 = vmul.f32 %v1289, %v263
      %v1293 = vadd.f32 %v1286, %v1291
      %v1294 = vadd.f32 %v1287, %v1292
      %v1295 = vmul.f32 %v1288, %v267
      %v1296 = vmul.f32 %v1289, %v267
      %v1297 = vmul.f32 %v1290, %v267
      %v1301 = vrot.slane %v1295, 1
      %v1302 = vrot.slane %v1296, 1
      %v1303 = vsel %vm761, %v1301, %v1302
      %v1304 = vrot.slane %v1297, 1
      %v1305 = vsel %vm761, %v1302, %v1304
      %v1308 = vadd.f32 %v1293, %v1303
      %v1309 = vadd.f32 %v1294, %v1305
      %v1310 = vmul.f32 %v1288, %v271
      %v1311 = vmul.f32 %v1289, %v271
      %v1312 = vmul.f32 %v1290, %v271
      %v1316 = vrot.slane %v1310, 2
      %v1317 = vrot.slane %v1311, 2
      %v1318 = vsel %vm777, %v1316, %v1317
      %v1319 = vrot.slane %v1312, 2
      %v1320 = vsel %vm777, %v1317, %v1319
      %v1323 = vadd.f32 %v1308, %v1318
      %v1324 = vadd.f32 %v1309, %v1320
      %v1325 = vld [vmem:[%s712] sm:$0xff]
      %v1326 = vld [vmem:[%s712 + $0x8] sm:$0xff]
      %v1327 = vld [vmem:[%s712 + $0x10] sm:$0xff]
      %v1328 = vmul.f32 %v1325, %v275
      %v1329 = vmul.f32 %v1326, %v275
      %v1330 = vadd.f32 %v1323, %v1328
      %v1331 = vadd.f32 %v1324, %v1329
      %v1332 = vmul.f32 %v1325, %v279
      %v1333 = vmul.f32 %v1326, %v279
      %v1334 = vmul.f32 %v1327, %v279
      %v1338 = vrot.slane %v1332, 1
      %v1339 = vrot.slane %v1333, 1
      %v1340 = vsel %vm761, %v1338, %v1339
      %v1341 = vrot.slane %v1334, 1
      %v1342 = vsel %vm761, %v1339, %v1341
      %v1345 = vadd.f32 %v1330, %v1340
      %v1346 = vadd.f32 %v1331, %v1342
      %v1347 = vmul.f32 %v1325, %v283
      %v1348 = vmul.f32 %v1326, %v283
      %v1349 = vmul.f32 %v1327, %v283
      %v1353 = vrot.slane %v1347, 2
      %v1354 = vrot.slane %v1348, 2
      %v1355 = vsel %vm777, %v1353, %v1354
      %v1356 = vrot.slane %v1349, 2
      %v1357 = vsel %vm777, %v1354, %v1356
      %v1360 = vadd.f32 %v1345, %v1355
      %v1361 = vadd.f32 %v1346, %v1357
      %v1362 = vmul.f32 %v1360, 0.5
      %v1363 = vmul.f32 %v1361, 0.5
      %v1364 = vmul.f32 %v1360, 0.70710677
      %v1365 = vmul.f32 %v1361, 0.70710677
      %v1366 = vand.u32 2147483647, %v1364
      %v1367 = vand.u32 2147483647, %v1365
      %v1368 = vmul.f32 %v1366, 0.3275911
      %v1369 = vmul.f32 %v1367, 0.3275911
      %v1370 = vadd.f32 %v1368, 1.0
      %v1371 = vadd.f32 %v1369, 1.0
      %v1372 = vrcp.pop %v1370
      %v1373 = vmul.f32 1.0, %v1372
      %v1374 = vrcp.pop %v1371
      %v1375 = vmul.f32 1.0, %v1374
      %v1376 = vmul.f32 %v1373, 1.0614054
      %v1377 = vmul.f32 %v1375, 1.0614054
      %v1378 = vadd.f32 %v1376, -1.4531521
      %v1379 = vadd.f32 %v1377, -1.4531521
      %v1380 = vmul.f32 %v1378, %v1373
      %v1381 = vmul.f32 %v1379, %v1375
      %v1382 = vadd.f32 %v1380, 1.4214138
      %v1383 = vadd.f32 %v1381, 1.4214138
      %v1384 = vmul.f32 %v1382, %v1373
      %v1385 = vmul.f32 %v1383, %v1375
      %v1386 = vadd.f32 %v1384, -0.28449672
      %v1387 = vadd.f32 %v1385, -0.28449672
      %v1388 = vmul.f32 %v1386, %v1373
      %v1389 = vmul.f32 %v1387, %v1375
      %v1390 = vadd.f32 %v1388, 0.2548296
      %v1391 = vadd.f32 %v1389, 0.2548296
      %v1392 = vmul.f32 %v1390, %v1373
      %v1393 = vmul.f32 %v1391, %v1375
      %v1394 = vsub.f32 0.0, %v1366
      %v1395 = vsub.f32 0.0, %v1367
      %v1396 = vmul.f32 %v1394, %v1366
      %v1397 = vmul.f32 %v1395, %v1367
      %v1398 = vmul.f32 %v1396, 1.442695
      %v1399 = vpow.pop %v1398
      %v1400 = vmul.f32 %v1397, 1.442695
      %v1401 = vpow.pop %v1400
      %v1402 = vmul.f32 %v1392, %v1399
      %v1403 = vmul.f32 %v1393, %v1401
      %v1404 = vsub.f32 1.0, %v1402
      %v1405 = vsub.f32 1.0, %v1403
      %vm1406 = vcmp.ge.f32.partialorder %v1364, 0.0
      %vm1407 = vcmp.ge.f32.partialorder %v1365, 0.0
      %v1408 = vsub.f32 0.0, %v1404
      %v1409 = vsub.f32 0.0, %v1405
      %v1410 = vsel %vm1406, %v1404, %v1408
      %v1411 = vsel %vm1407, %v1405, %v1409
      %v1412 = vadd.f32 %v1410, 1.0
      %v1413 = vadd.f32 %v1411, 1.0
      %v1414 = vmul.f32 %v1362, %v1412
      %v1415 = vmul.f32 %v1363, %v1413
      %1416 = vst [vmem:[#allocation3 + $0x30] sm:$0xff] %v1414
      %1417 = vst [vmem:[#allocation3 + $0x38] sm:$0xff] %v1415
      %v1418 = vld [vmem:[%s709] sm:$0xff]
      %v1419 = vld [vmem:[%s709 + $0x8] sm:$0xff]
      %v1420 = vld [vmem:[%s709 + $0x10] sm:$0xff]
      %v1421 = vmul.f32 %v1418, %v251
      %v1422 = vmul.f32 %v1419, %v251
      %v1423 = vadd.f32 %v287, %v1421
      %v1424 = vadd.f32 %v287, %v1422
      %v1425 = vmul.f32 %v1418, %v255
      %v1426 = vmul.f32 %v1419, %v255
      %v1427 = vmul.f32 %v1420, %v255
      %v1431 = vrot.slane %v1425, 1
      %v1432 = vrot.slane %v1426, 1
      %v1433 = vsel %vm761, %v1431, %v1432
      %v1434 = vrot.slane %v1427, 1
      %v1435 = vsel %vm761, %v1432, %v1434
      %v1438 = vadd.f32 %v1423, %v1433
      %v1439 = vadd.f32 %v1424, %v1435
      %v1440 = vmul.f32 %v1418, %v259
      %v1441 = vmul.f32 %v1419, %v259
      %v1442 = vmul.f32 %v1420, %v259
      %v1446 = vrot.slane %v1440, 2
      %v1447 = vrot.slane %v1441, 2
      %v1448 = vsel %vm777, %v1446, %v1447
      %v1449 = vrot.slane %v1442, 2
      %v1450 = vsel %vm777, %v1447, %v1449
      %v1453 = vadd.f32 %v1438, %v1448
      %v1454 = vadd.f32 %v1439, %v1450
      %v1455 = vld [vmem:[%s712] sm:$0xff]
      %v1456 = vld [vmem:[%s712 + $0x8] sm:$0xff]
      %v1457 = vld [vmem:[%s712 + $0x10] sm:$0xff]
      %v1458 = vmul.f32 %v1455, %v263
      %v1459 = vmul.f32 %v1456, %v263
      %v1460 = vadd.f32 %v1453, %v1458
      %v1461 = vadd.f32 %v1454, %v1459
      %v1462 = vmul.f32 %v1455, %v267
      %v1463 = vmul.f32 %v1456, %v267
      %v1464 = vmul.f32 %v1457, %v267
      %v1468 = vrot.slane %v1462, 1
      %v1469 = vrot.slane %v1463, 1
      %v1470 = vsel %vm761, %v1468, %v1469
      %v1471 = vrot.slane %v1464, 1
      %v1472 = vsel %vm761, %v1469, %v1471
      %v1475 = vadd.f32 %v1460, %v1470
      %v1476 = vadd.f32 %v1461, %v1472
      %v1477 = vmul.f32 %v1455, %v271
      %v1478 = vmul.f32 %v1456, %v271
      %v1479 = vmul.f32 %v1457, %v271
      %v1483 = vrot.slane %v1477, 2
      %v1484 = vrot.slane %v1478, 2
      %v1485 = vsel %vm777, %v1483, %v1484
      %v1486 = vrot.slane %v1479, 2
      %v1487 = vsel %vm777, %v1484, %v1486
      %v1490 = vadd.f32 %v1475, %v1485
      %v1491 = vadd.f32 %v1476, %v1487
      %v1492 = vld [vmem:[%s715] sm:$0xff]
      %v1493 = vld [vmem:[%s715 + $0x8] sm:$0xff]
      %v1494 = vld [vmem:[%s715 + $0x10] sm:$0xff]
      %v1495 = vmul.f32 %v1492, %v275
      %v1496 = vmul.f32 %v1493, %v275
      %v1497 = vadd.f32 %v1490, %v1495
      %v1498 = vadd.f32 %v1491, %v1496
      %v1499 = vmul.f32 %v1492, %v279
      %v1500 = vmul.f32 %v1493, %v279
      %v1501 = vmul.f32 %v1494, %v279
      %v1505 = vrot.slane %v1499, 1
      %v1506 = vrot.slane %v1500, 1
      %v1507 = vsel %vm761, %v1505, %v1506
      %v1508 = vrot.slane %v1501, 1
      %v1509 = vsel %vm761, %v1506, %v1508
      %v1512 = vadd.f32 %v1497, %v1507
      %v1513 = vadd.f32 %v1498, %v1509
      %v1514 = vmul.f32 %v1492, %v283
      %v1515 = vmul.f32 %v1493, %v283
      %v1516 = vmul.f32 %v1494, %v283
      %v1520 = vrot.slane %v1514, 2
      %v1521 = vrot.slane %v1515, 2
      %v1522 = vsel %vm777, %v1520, %v1521
      %v1523 = vrot.slane %v1516, 2
      %v1524 = vsel %vm777, %v1521, %v1523
      %v1527 = vadd.f32 %v1512, %v1522
      %v1528 = vadd.f32 %v1513, %v1524
      %v1529 = vmul.f32 %v1527, 0.5
      %v1530 = vmul.f32 %v1528, 0.5
      %v1531 = vmul.f32 %v1527, 0.70710677
      %v1532 = vmul.f32 %v1528, 0.70710677
      %v1533 = vand.u32 2147483647, %v1531
      %v1534 = vand.u32 2147483647, %v1532
      %v1535 = vmul.f32 %v1533, 0.3275911
      %v1536 = vmul.f32 %v1534, 0.3275911
      %v1537 = vadd.f32 %v1535, 1.0
      %v1538 = vadd.f32 %v1536, 1.0
      %v1539 = vrcp.pop %v1537
      %v1540 = vmul.f32 1.0, %v1539
      %v1541 = vrcp.pop %v1538
      %v1542 = vmul.f32 1.0, %v1541
      %v1543 = vmul.f32 %v1540, 1.0614054
      %v1544 = vmul.f32 %v1542, 1.0614054
      %v1545 = vadd.f32 %v1543, -1.4531521
      %v1546 = vadd.f32 %v1544, -1.4531521
      %v1547 = vmul.f32 %v1545, %v1540
      %v1548 = vmul.f32 %v1546, %v1542
      %v1549 = vadd.f32 %v1547, 1.4214138
      %v1550 = vadd.f32 %v1548, 1.4214138
      %v1551 = vmul.f32 %v1549, %v1540
      %v1552 = vmul.f32 %v1550, %v1542
      %v1553 = vadd.f32 %v1551, -0.28449672
      %v1554 = vadd.f32 %v1552, -0.28449672
      %v1555 = vmul.f32 %v1553, %v1540
      %v1556 = vmul.f32 %v1554, %v1542
      %v1557 = vadd.f32 %v1555, 0.2548296
      %v1558 = vadd.f32 %v1556, 0.2548296
      %v1559 = vmul.f32 %v1557, %v1540
      %v1560 = vmul.f32 %v1558, %v1542
      %v1561 = vsub.f32 0.0, %v1533
      %v1562 = vsub.f32 0.0, %v1534
      %v1563 = vmul.f32 %v1561, %v1533
      %v1564 = vmul.f32 %v1562, %v1534
      %v1565 = vmul.f32 %v1563, 1.442695
      %v1566 = vpow.pop %v1565
      %v1567 = vmul.f32 %v1564, 1.442695
      %v1568 = vpow.pop %v1567
      %v1569 = vmul.f32 %v1559, %v1566
      %v1570 = vmul.f32 %v1560, %v1568
      %v1571 = vsub.f32 1.0, %v1569
      %v1572 = vsub.f32 1.0, %v1570
      %vm1573 = vcmp.ge.f32.partialorder %v1531, 0.0
      %vm1574 = vcmp.ge.f32.partialorder %v1532, 0.0
      %v1575 = vsub.f32 0.0, %v1571
      %v1576 = vsub.f32 0.0, %v1572
      %v1577 = vsel %vm1573, %v1571, %v1575
      %v1578 = vsel %vm1574, %v1572, %v1576
      %v1579 = vadd.f32 %v1577, 1.0
      %v1580 = vadd.f32 %v1578, 1.0
      %v1581 = vmul.f32 %v1529, %v1579
      %v1582 = vmul.f32 %v1530, %v1580
      %1583 = vst [vmem:[#allocation3 + $0x40] sm:$0xff] %v1581
      %1584 = vst [vmem:[#allocation3 + $0x48] sm:$0xff] %v1582
      %v1585 = vld [vmem:[%s712] sm:$0xff]
      %v1586 = vld [vmem:[%s712 + $0x8] sm:$0xff]
      %v1587 = vld [vmem:[%s712 + $0x10] sm:$0xff]
      %v1588 = vmul.f32 %v1585, %v251
      %v1589 = vmul.f32 %v1586, %v251
      %v1590 = vadd.f32 %v287, %v1588
      %v1591 = vadd.f32 %v287, %v1589
      %v1592 = vmul.f32 %v1585, %v255
      %v1593 = vmul.f32 %v1586, %v255
      %v1594 = vmul.f32 %v1587, %v255
      %v1598 = vrot.slane %v1592, 1
      %v1599 = vrot.slane %v1593, 1
      %v1600 = vsel %vm761, %v1598, %v1599
      %v1601 = vrot.slane %v1594, 1
      %v1602 = vsel %vm761, %v1599, %v1601
      %v1605 = vadd.f32 %v1590, %v1600
      %v1606 = vadd.f32 %v1591, %v1602
      %v1607 = vmul.f32 %v1585, %v259
      %v1608 = vmul.f32 %v1586, %v259
      %v1609 = vmul.f32 %v1587, %v259
      %v1613 = vrot.slane %v1607, 2
      %v1614 = vrot.slane %v1608, 2
      %v1615 = vsel %vm777, %v1613, %v1614
      %v1616 = vrot.slane %v1609, 2
      %v1617 = vsel %vm777, %v1614, %v1616
      %v1620 = vadd.f32 %v1605, %v1615
      %v1621 = vadd.f32 %v1606, %v1617
      %v1622 = vld [vmem:[%s715] sm:$0xff]
      %v1623 = vld [vmem:[%s715 + $0x8] sm:$0xff]
      %v1624 = vld [vmem:[%s715 + $0x10] sm:$0xff]
      %v1625 = vmul.f32 %v1622, %v263
      %v1626 = vmul.f32 %v1623, %v263
      %v1627 = vadd.f32 %v1620, %v1625
      %v1628 = vadd.f32 %v1621, %v1626
      %v1629 = vmul.f32 %v1622, %v267
      %v1630 = vmul.f32 %v1623, %v267
      %v1631 = vmul.f32 %v1624, %v267
      %v1635 = vrot.slane %v1629, 1
      %v1636 = vrot.slane %v1630, 1
      %v1637 = vsel %vm761, %v1635, %v1636
      %v1638 = vrot.slane %v1631, 1
      %v1639 = vsel %vm761, %v1636, %v1638
      %v1642 = vadd.f32 %v1627, %v1637
      %v1643 = vadd.f32 %v1628, %v1639
      %v1644 = vmul.f32 %v1622, %v271
      %v1645 = vmul.f32 %v1623, %v271
      %v1646 = vmul.f32 %v1624, %v271
      %v1650 = vrot.slane %v1644, 2
      %v1651 = vrot.slane %v1645, 2
      %v1652 = vsel %vm777, %v1650, %v1651
      %v1653 = vrot.slane %v1646, 2
      %v1654 = vsel %vm777, %v1651, %v1653
      %v1657 = vadd.f32 %v1642, %v1652
      %v1658 = vadd.f32 %v1643, %v1654
      %v1659 = vld [vmem:[%s718] sm:$0xff]
      %v1660 = vld [vmem:[%s718 + $0x8] sm:$0xff]
      %v1661 = vld [vmem:[%s718 + $0x10] sm:$0xff]
      %v1662 = vmul.f32 %v1659, %v275
      %v1663 = vmul.f32 %v1660, %v275
      %v1664 = vadd.f32 %v1657, %v1662
      %v1665 = vadd.f32 %v1658, %v1663
      %v1666 = vmul.f32 %v1659, %v279
      %v1667 = vmul.f32 %v1660, %v279
      %v1668 = vmul.f32 %v1661, %v279
      %v1672 = vrot.slane %v1666, 1
      %v1673 = vrot.slane %v1667, 1
      %v1674 = vsel %vm761, %v1672, %v1673
      %v1675 = vrot.slane %v1668, 1
      %v1676 = vsel %vm761, %v1673, %v1675
      %v1679 = vadd.f32 %v1664, %v1674
      %v1680 = vadd.f32 %v1665, %v1676
      %v1681 = vmul.f32 %v1659, %v283
      %v1682 = vmul.f32 %v1660, %v283
      %v1683 = vmul.f32 %v1661, %v283
      %v1687 = vrot.slane %v1681, 2
      %v1688 = vrot.slane %v1682, 2
      %v1689 = vsel %vm777, %v1687, %v1688
      %v1690 = vrot.slane %v1683, 2
      %v1691 = vsel %vm777, %v1688, %v1690
      %v1694 = vadd.f32 %v1679, %v1689
      %v1695 = vadd.f32 %v1680, %v1691
      %v1696 = vmul.f32 %v1694, 0.5
      %v1697 = vmul.f32 %v1695, 0.5
      %v1698 = vmul.f32 %v1694, 0.70710677
      %v1699 = vmul.f32 %v1695, 0.70710677
      %v1700 = vand.u32 2147483647, %v1698
      %v1701 = vand.u32 2147483647, %v1699
      %v1702 = vmul.f32 %v1700, 0.3275911
      %v1703 = vmul.f32 %v1701, 0.3275911
      %v1704 = vadd.f32 %v1702, 1.0
      %v1705 = vadd.f32 %v1703, 1.0
      %v1706 = vrcp.pop %v1704
      %v1707 = vmul.f32 1.0, %v1706
      %v1708 = vrcp.pop %v1705
      %v1709 = vmul.f32 1.0, %v1708
      %v1710 = vmul.f32 %v1707, 1.0614054
      %v1711 = vmul.f32 %v1709, 1.0614054
      %v1712 = vadd.f32 %v1710, -1.4531521
      %v1713 = vadd.f32 %v1711, -1.4531521
      %v1714 = vmul.f32 %v1712, %v1707
      %v1715 = vmul.f32 %v1713, %v1709
      %v1716 = vadd.f32 %v1714, 1.4214138
      %v1717 = vadd.f32 %v1715, 1.4214138
      %v1718 = vmul.f32 %v1716, %v1707
      %v1719 = vmul.f32 %v1717, %v1709
      %v1720 = vadd.f32 %v1718, -0.28449672
      %v1721 = vadd.f32 %v1719, -0.28449672
      %v1722 = vmul.f32 %v1720, %v1707
      %v1723 = vmul.f32 %v1721, %v1709
      %v1724 = vadd.f32 %v1722, 0.2548296
      %v1725 = vadd.f32 %v1723, 0.2548296
      %v1726 = vmul.f32 %v1724, %v1707
      %v1727 = vmul.f32 %v1725, %v1709
      %v1728 = vsub.f32 0.0, %v1700
      %v1729 = vsub.f32 0.0, %v1701
      %v1730 = vmul.f32 %v1728, %v1700
      %v1731 = vmul.f32 %v1729, %v1701
      %v1732 = vmul.f32 %v1730, 1.442695
      %v1733 = vpow.pop %v1732
      %v1734 = vmul.f32 %v1731, 1.442695
      %v1735 = vpow.pop %v1734
      %v1736 = vmul.f32 %v1726, %v1733
      %v1737 = vmul.f32 %v1727, %v1735
      %v1738 = vsub.f32 1.0, %v1736
      %v1739 = vsub.f32 1.0, %v1737
      %vm1740 = vcmp.ge.f32.partialorder %v1698, 0.0
      %vm1741 = vcmp.ge.f32.partialorder %v1699, 0.0
      %v1742 = vsub.f32 0.0, %v1738
      %v1743 = vsub.f32 0.0, %v1739
      %v1744 = vsel %vm1740, %v1738, %v1742
      %v1745 = vsel %vm1741, %v1739, %v1743
      %v1746 = vadd.f32 %v1744, 1.0
      %v1747 = vadd.f32 %v1745, 1.0
      %v1748 = vmul.f32 %v1696, %v1746
      %v1749 = vmul.f32 %v1697, %v1747
      %1750 = vst [vmem:[#allocation3 + $0x50] sm:$0xff] %v1748
      %1751 = vst [vmem:[#allocation3 + $0x58] sm:$0xff] %v1749
      %v1752 = vld [vmem:[%s715] sm:$0xff]
      %v1753 = vld [vmem:[%s715 + $0x8] sm:$0xff]
      %v1754 = vld [vmem:[%s715 + $0x10] sm:$0xff]
      %v1755 = vmul.f32 %v1752, %v251
      %v1756 = vmul.f32 %v1753, %v251
      %v1757 = vadd.f32 %v287, %v1755
      %v1758 = vadd.f32 %v287, %v1756
      %v1759 = vmul.f32 %v1752, %v255
      %v1760 = vmul.f32 %v1753, %v255
      %v1761 = vmul.f32 %v1754, %v255
      %v1765 = vrot.slane %v1759, 1
      %v1766 = vrot.slane %v1760, 1
      %v1767 = vsel %vm761, %v1765, %v1766
      %v1768 = vrot.slane %v1761, 1
      %v1769 = vsel %vm761, %v1766, %v1768
      %v1772 = vadd.f32 %v1757, %v1767
      %v1773 = vadd.f32 %v1758, %v1769
      %v1774 = vmul.f32 %v1752, %v259
      %v1775 = vmul.f32 %v1753, %v259
      %v1776 = vmul.f32 %v1754, %v259
      %v1780 = vrot.slane %v1774, 2
      %v1781 = vrot.slane %v1775, 2
      %v1782 = vsel %vm777, %v1780, %v1781
      %v1783 = vrot.slane %v1776, 2
      %v1784 = vsel %vm777, %v1781, %v1783
      %v1787 = vadd.f32 %v1772, %v1782
      %v1788 = vadd.f32 %v1773, %v1784
      %v1789 = vld [vmem:[%s718] sm:$0xff]
      %v1790 = vld [vmem:[%s718 + $0x8] sm:$0xff]
      %v1791 = vld [vmem:[%s718 + $0x10] sm:$0xff]
      %v1792 = vmul.f32 %v1789, %v263
      %v1793 = vmul.f32 %v1790, %v263
      %v1794 = vadd.f32 %v1787, %v1792
      %v1795 = vadd.f32 %v1788, %v1793
      %v1796 = vmul.f32 %v1789, %v267
      %v1797 = vmul.f32 %v1790, %v267
      %v1798 = vmul.f32 %v1791, %v267
      %v1802 = vrot.slane %v1796, 1
      %v1803 = vrot.slane %v1797, 1
      %v1804 = vsel %vm761, %v1802, %v1803
      %v1805 = vrot.slane %v1798, 1
      %v1806 = vsel %vm761, %v1803, %v1805
      %v1809 = vadd.f32 %v1794, %v1804
      %v1810 = vadd.f32 %v1795, %v1806
      %v1811 = vmul.f32 %v1789, %v271
      %v1812 = vmul.f32 %v1790, %v271
      %v1813 = vmul.f32 %v1791, %v271
      %v1817 = vrot.slane %v1811, 2
      %v1818 = vrot.slane %v1812, 2
      %v1819 = vsel %vm777, %v1817, %v1818
      %v1820 = vrot.slane %v1813, 2
      %v1821 = vsel %vm777, %v1818, %v1820
      %v1824 = vadd.f32 %v1809, %v1819
      %v1825 = vadd.f32 %v1810, %v1821
      %v1826 = vld [vmem:[%s721] sm:$0xff]
      %v1827 = vld [vmem:[%s721 + $0x8] sm:$0xff]
      %v1828 = vld [vmem:[%s721 + $0x10] sm:$0xff]
      %v1829 = vmul.f32 %v1826, %v275
      %v1830 = vmul.f32 %v1827, %v275
      %v1831 = vadd.f32 %v1824, %v1829
      %v1832 = vadd.f32 %v1825, %v1830
      %v1833 = vmul.f32 %v1826, %v279
      %v1834 = vmul.f32 %v1827, %v279
      %v1835 = vmul.f32 %v1828, %v279
      %v1839 = vrot.slane %v1833, 1
      %v1840 = vrot.slane %v1834, 1
      %v1841 = vsel %vm761, %v1839, %v1840
      %v1842 = vrot.slane %v1835, 1
      %v1843 = vsel %vm761, %v1840, %v1842
      %v1846 = vadd.f32 %v1831, %v1841
      %v1847 = vadd.f32 %v1832, %v1843
      %v1848 = vmul.f32 %v1826, %v283
      %v1849 = vmul.f32 %v1827, %v283
      %v1850 = vmul.f32 %v1828, %v283
      %v1854 = vrot.slane %v1848, 2
      %v1855 = vrot.slane %v1849, 2
      %v1856 = vsel %vm777, %v1854, %v1855
      %v1857 = vrot.slane %v1850, 2
      %v1858 = vsel %vm777, %v1855, %v1857
      %v1861 = vadd.f32 %v1846, %v1856
      %v1862 = vadd.f32 %v1847, %v1858
      %v1863 = vmul.f32 %v1861, 0.5
      %v1864 = vmul.f32 %v1862, 0.5
      %v1865 = vmul.f32 %v1861, 0.70710677
      %v1866 = vmul.f32 %v1862, 0.70710677
      %v1867 = vand.u32 2147483647, %v1865
      %v1868 = vand.u32 2147483647, %v1866
      %v1869 = vmul.f32 %v1867, 0.3275911
      %v1870 = vmul.f32 %v1868, 0.3275911
      %v1871 = vadd.f32 %v1869, 1.0
      %v1872 = vadd.f32 %v1870, 1.0
      %v1873 = vrcp.pop %v1871
      %v1874 = vmul.f32 1.0, %v1873
      %v1875 = vrcp.pop %v1872
      %v1876 = vmul.f32 1.0, %v1875
      %v1877 = vmul.f32 %v1874, 1.0614054
      %v1878 = vmul.f32 %v1876, 1.0614054
      %v1879 = vadd.f32 %v1877, -1.4531521
      %v1880 = vadd.f32 %v1878, -1.4531521
      %v1881 = vmul.f32 %v1879, %v1874
      %v1882 = vmul.f32 %v1880, %v1876
      %v1883 = vadd.f32 %v1881, 1.4214138
      %v1884 = vadd.f32 %v1882, 1.4214138
      %v1885 = vmul.f32 %v1883, %v1874
      %v1886 = vmul.f32 %v1884, %v1876
      %v1887 = vadd.f32 %v1885, -0.28449672
      %v1888 = vadd.f32 %v1886, -0.28449672
      %v1889 = vmul.f32 %v1887, %v1874
      %v1890 = vmul.f32 %v1888, %v1876
      %v1891 = vadd.f32 %v1889, 0.2548296
      %v1892 = vadd.f32 %v1890, 0.2548296
      %v1893 = vmul.f32 %v1891, %v1874
      %v1894 = vmul.f32 %v1892, %v1876
      %v1895 = vsub.f32 0.0, %v1867
      %v1896 = vsub.f32 0.0, %v1868
      %v1897 = vmul.f32 %v1895, %v1867
      %v1898 = vmul.f32 %v1896, %v1868
      %v1899 = vmul.f32 %v1897, 1.442695
      %v1900 = vpow.pop %v1899
      %v1901 = vmul.f32 %v1898, 1.442695
      %v1902 = vpow.pop %v1901
      %v1903 = vmul.f32 %v1893, %v1900
      %v1904 = vmul.f32 %v1894, %v1902
      %v1905 = vsub.f32 1.0, %v1903
      %v1906 = vsub.f32 1.0, %v1904
      %vm1907 = vcmp.ge.f32.partialorder %v1865, 0.0
      %vm1908 = vcmp.ge.f32.partialorder %v1866, 0.0
      %v1909 = vsub.f32 0.0, %v1905
      %v1910 = vsub.f32 0.0, %v1906
      %v1911 = vsel %vm1907, %v1905, %v1909
      %v1912 = vsel %vm1908, %v1906, %v1910
      %v1913 = vadd.f32 %v1911, 1.0
      %v1914 = vadd.f32 %v1912, 1.0
      %v1915 = vmul.f32 %v1863, %v1913
      %v1916 = vmul.f32 %v1864, %v1914
      %1917 = vst [vmem:[#allocation3 + $0x60] sm:$0xff] %v1915
      %1918 = vst [vmem:[#allocation3 + $0x68] sm:$0xff] %v1916
      %v1919 = vld [vmem:[%s718] sm:$0xff]
      %v1920 = vld [vmem:[%s718 + $0x8] sm:$0xff]
      %v1921 = vld [vmem:[%s718 + $0x10] sm:$0xff]
      %v1922 = vmul.f32 %v1919, %v251
      %v1923 = vmul.f32 %v1920, %v251
      %v1924 = vadd.f32 %v287, %v1922
      %v1925 = vadd.f32 %v287, %v1923
      %v1926 = vmul.f32 %v1919, %v255
      %v1927 = vmul.f32 %v1920, %v255
      %v1928 = vmul.f32 %v1921, %v255
      %v1932 = vrot.slane %v1926, 1
      %v1933 = vrot.slane %v1927, 1
      %v1934 = vsel %vm761, %v1932, %v1933
      %v1935 = vrot.slane %v1928, 1
      %v1936 = vsel %vm761, %v1933, %v1935
      %v1939 = vadd.f32 %v1924, %v1934
      %v1940 = vadd.f32 %v1925, %v1936
      %v1941 = vmul.f32 %v1919, %v259
      %v1942 = vmul.f32 %v1920, %v259
      %v1943 = vmul.f32 %v1921, %v259
      %v1947 = vrot.slane %v1941, 2
      %v1948 = vrot.slane %v1942, 2
      %v1949 = vsel %vm777, %v1947, %v1948
      %v1950 = vrot.slane %v1943, 2
      %v1951 = vsel %vm777, %v1948, %v1950
      %v1954 = vadd.f32 %v1939, %v1949
      %v1955 = vadd.f32 %v1940, %v1951
      %v1956 = vld [vmem:[%s721] sm:$0xff]
      %v1957 = vld [vmem:[%s721 + $0x8] sm:$0xff]
      %v1958 = vld [vmem:[%s721 + $0x10] sm:$0xff]
      %v1959 = vmul.f32 %v1956, %v263
      %v1960 = vmul.f32 %v1957, %v263
      %v1961 = vadd.f32 %v1954, %v1959
      %v1962 = vadd.f32 %v1955, %v1960
      %v1963 = vmul.f32 %v1956, %v267
      %v1964 = vmul.f32 %v1957, %v267
      %v1965 = vmul.f32 %v1958, %v267
      %v1969 = vrot.slane %v1963, 1
      %v1970 = vrot.slane %v1964, 1
      %v1971 = vsel %vm761, %v1969, %v1970
      %v1972 = vrot.slane %v1965, 1
      %v1973 = vsel %vm761, %v1970, %v1972
      %v1976 = vadd.f32 %v1961, %v1971
      %v1977 = vadd.f32 %v1962, %v1973
      %v1978 = vmul.f32 %v1956, %v271
      %v1979 = vmul.f32 %v1957, %v271
      %v1980 = vmul.f32 %v1958, %v271
      %v1984 = vrot.slane %v1978, 2
      %v1985 = vrot.slane %v1979, 2
      %v1986 = vsel %vm777, %v1984, %v1985
      %v1987 = vrot.slane %v1980, 2
      %v1988 = vsel %vm777, %v1985, %v1987
      %v1991 = vadd.f32 %v1976, %v1986
      %v1992 = vadd.f32 %v1977, %v1988
      %v1993 = vld [vmem:[%s724] sm:$0xff]
      %v1994 = vld [vmem:[%s724 + $0x8] sm:$0xff]
      %v1995 = vld [vmem:[%s724 + $0x10] sm:$0xff]
      %v1996 = vmul.f32 %v1993, %v275
      %v1997 = vmul.f32 %v1994, %v275
      %v1998 = vadd.f32 %v1991, %v1996
      %v1999 = vadd.f32 %v1992, %v1997
      %v2000 = vmul.f32 %v1993, %v279
      %v2001 = vmul.f32 %v1994, %v279
      %v2002 = vmul.f32 %v1995, %v279
      %v2006 = vrot.slane %v2000, 1
      %v2007 = vrot.slane %v2001, 1
      %v2008 = vsel %vm761, %v2006, %v2007
      %v2009 = vrot.slane %v2002, 1
      %v2010 = vsel %vm761, %v2007, %v2009
      %v2013 = vadd.f32 %v1998, %v2008
      %v2014 = vadd.f32 %v1999, %v2010
      %v2015 = vmul.f32 %v1993, %v283
      %v2016 = vmul.f32 %v1994, %v283
      %v2017 = vmul.f32 %v1995, %v283
      %v2021 = vrot.slane %v2015, 2
      %v2022 = vrot.slane %v2016, 2
      %v2023 = vsel %vm777, %v2021, %v2022
      %v2024 = vrot.slane %v2017, 2
      %v2025 = vsel %vm777, %v2022, %v2024
      %v2028 = vadd.f32 %v2013, %v2023
      %v2029 = vadd.f32 %v2014, %v2025
      %v2030 = vmul.f32 %v2028, 0.5
      %v2031 = vmul.f32 %v2029, 0.5
      %v2032 = vmul.f32 %v2028, 0.70710677
      %v2033 = vmul.f32 %v2029, 0.70710677
      %v2034 = vand.u32 2147483647, %v2032
      %v2035 = vand.u32 2147483647, %v2033
      %v2036 = vmul.f32 %v2034, 0.3275911
      %v2037 = vmul.f32 %v2035, 0.3275911
      %v2038 = vadd.f32 %v2036, 1.0
      %v2039 = vadd.f32 %v2037, 1.0
      %v2040 = vrcp.pop %v2038
      %v2041 = vmul.f32 1.0, %v2040
      %v2042 = vrcp.pop %v2039
      %v2043 = vmul.f32 1.0, %v2042
      %v2044 = vmul.f32 %v2041, 1.0614054
      %v2045 = vmul.f32 %v2043, 1.0614054
      %v2046 = vadd.f32 %v2044, -1.4531521
      %v2047 = vadd.f32 %v2045, -1.4531521
      %v2048 = vmul.f32 %v2046, %v2041
      %v2049 = vmul.f32 %v2047, %v2043
      %v2050 = vadd.f32 %v2048, 1.4214138
      %v2051 = vadd.f32 %v2049, 1.4214138
      %v2052 = vmul.f32 %v2050, %v2041
      %v2053 = vmul.f32 %v2051, %v2043
      %v2054 = vadd.f32 %v2052, -0.28449672
      %v2055 = vadd.f32 %v2053, -0.28449672
      %v2056 = vmul.f32 %v2054, %v2041
      %v2057 = vmul.f32 %v2055, %v2043
      %v2058 = vadd.f32 %v2056, 0.2548296
      %v2059 = vadd.f32 %v2057, 0.2548296
      %v2060 = vmul.f32 %v2058, %v2041
      %v2061 = vmul.f32 %v2059, %v2043
      %v2062 = vsub.f32 0.0, %v2034
      %v2063 = vsub.f32 0.0, %v2035
      %v2064 = vmul.f32 %v2062, %v2034
      %v2065 = vmul.f32 %v2063, %v2035
      %v2066 = vmul.f32 %v2064, 1.442695
      %v2067 = vpow.pop %v2066
      %v2068 = vmul.f32 %v2065, 1.442695
      %v2069 = vpow.pop %v2068
      %v2070 = vmul.f32 %v2060, %v2067
      %v2071 = vmul.f32 %v2061, %v2069
      %v2072 = vsub.f32 1.0, %v2070
      %v2073 = vsub.f32 1.0, %v2071
      %vm2074 = vcmp.ge.f32.partialorder %v2032, 0.0
      %vm2075 = vcmp.ge.f32.partialorder %v2033, 0.0
      %v2076 = vsub.f32 0.0, %v2072
      %v2077 = vsub.f32 0.0, %v2073
      %v2078 = vsel %vm2074, %v2072, %v2076
      %v2079 = vsel %vm2075, %v2073, %v2077
      %v2080 = vadd.f32 %v2078, 1.0
      %v2081 = vadd.f32 %v2079, 1.0
      %v2082 = vmul.f32 %v2030, %v2080
      %v2083 = vmul.f32 %v2031, %v2081
      %2084 = vst [vmem:[#allocation3 + $0x70] sm:$0xff] %v2082
      %2085 = vst [vmem:[#allocation3 + $0x78] sm:$0xff] %v2083
      %v2086 = vld [vmem:[%s721] sm:$0xff]
      %v2087 = vld [vmem:[%s721 + $0x8] sm:$0xff]
      %v2088 = vld [vmem:[%s721 + $0x10] sm:$0xff]
      %v2089 = vmul.f32 %v2086, %v251
      %v2090 = vmul.f32 %v2087, %v251
      %v2091 = vadd.f32 %v287, %v2089
      %v2092 = vadd.f32 %v287, %v2090
      %v2093 = vmul.f32 %v2086, %v255
      %v2094 = vmul.f32 %v2087, %v255
      %v2095 = vmul.f32 %v2088, %v255
      %v2099 = vrot.slane %v2093, 1
      %v2100 = vrot.slane %v2094, 1
      %v2101 = vsel %vm761, %v2099, %v2100
      %v2102 = vrot.slane %v2095, 1
      %v2103 = vsel %vm761, %v2100, %v2102
      %v2106 = vadd.f32 %v2091, %v2101
      %v2107 = vadd.f32 %v2092, %v2103
      %v2108 = vmul.f32 %v2086, %v259
      %v2109 = vmul.f32 %v2087, %v259
      %v2110 = vmul.f32 %v2088, %v259
      %v2114 = vrot.slane %v2108, 2
      %v2115 = vrot.slane %v2109, 2
      %v2116 = vsel %vm777, %v2114, %v2115
      %v2117 = vrot.slane %v2110, 2
      %v2118 = vsel %vm777, %v2115, %v2117
      %v2121 = vadd.f32 %v2106, %v2116
      %v2122 = vadd.f32 %v2107, %v2118
      %v2123 = vld [vmem:[%s724] sm:$0xff]
      %v2124 = vld [vmem:[%s724 + $0x8] sm:$0xff]
      %v2125 = vld [vmem:[%s724 + $0x10] sm:$0xff]
      %v2126 = vmul.f32 %v2123, %v263
      %v2127 = vmul.f32 %v2124, %v263
      %v2128 = vadd.f32 %v2121, %v2126
      %v2129 = vadd.f32 %v2122, %v2127
      %v2130 = vmul.f32 %v2123, %v267
      %v2131 = vmul.f32 %v2124, %v267
      %v2132 = vmul.f32 %v2125, %v267
      %v2136 = vrot.slane %v2130, 1
      %v2137 = vrot.slane %v2131, 1
      %v2138 = vsel %vm761, %v2136, %v2137
      %v2139 = vrot.slane %v2132, 1
      %v2140 = vsel %vm761, %v2137, %v2139
      %v2143 = vadd.f32 %v2128, %v2138
      %v2144 = vadd.f32 %v2129, %v2140
      %v2145 = vmul.f32 %v2123, %v271
      %v2146 = vmul.f32 %v2124, %v271
      %v2147 = vmul.f32 %v2125, %v271
      %v2151 = vrot.slane %v2145, 2
      %v2152 = vrot.slane %v2146, 2
      %v2153 = vsel %vm777, %v2151, %v2152
      %v2154 = vrot.slane %v2147, 2
      %v2155 = vsel %vm777, %v2152, %v2154
      %v2158 = vadd.f32 %v2143, %v2153
      %v2159 = vadd.f32 %v2144, %v2155
      %v2160 = vld [vmem:[%s727] sm:$0xff]
      %v2161 = vld [vmem:[%s727 + $0x8] sm:$0xff]
      %v2162 = vld [vmem:[%s727 + $0x10] sm:$0xff]
      %v2163 = vmul.f32 %v2160, %v275
      %v2164 = vmul.f32 %v2161, %v275
      %v2165 = vadd.f32 %v2158, %v2163
      %v2166 = vadd.f32 %v2159, %v2164
      %v2167 = vmul.f32 %v2160, %v279
      %v2168 = vmul.f32 %v2161, %v279
      %v2169 = vmul.f32 %v2162, %v279
      %v2173 = vrot.slane %v2167, 1
      %v2174 = vrot.slane %v2168, 1
      %v2175 = vsel %vm761, %v2173, %v2174
      %v2176 = vrot.slane %v2169, 1
      %v2177 = vsel %vm761, %v2174, %v2176
      %v2180 = vadd.f32 %v2165, %v2175
      %v2181 = vadd.f32 %v2166, %v2177
      %v2182 = vmul.f32 %v2160, %v283
      %v2183 = vmul.f32 %v2161, %v283
      %v2184 = vmul.f32 %v2162, %v283
      %v2188 = vrot.slane %v2182, 2
      %v2189 = vrot.slane %v2183, 2
      %v2190 = vsel %vm777, %v2188, %v2189
      %v2191 = vrot.slane %v2184, 2
      %v2192 = vsel %vm777, %v2189, %v2191
      %v2195 = vadd.f32 %v2180, %v2190
      %v2196 = vadd.f32 %v2181, %v2192
      %v2197 = vmul.f32 %v2195, 0.5
      %v2198 = vmul.f32 %v2196, 0.5
      %v2199 = vmul.f32 %v2195, 0.70710677
      %v2200 = vmul.f32 %v2196, 0.70710677
      %v2201 = vand.u32 2147483647, %v2199
      %v2202 = vand.u32 2147483647, %v2200
      %v2203 = vmul.f32 %v2201, 0.3275911
      %v2204 = vmul.f32 %v2202, 0.3275911
      %v2205 = vadd.f32 %v2203, 1.0
      %v2206 = vadd.f32 %v2204, 1.0
      %v2207 = vrcp.pop %v2205
      %v2208 = vmul.f32 1.0, %v2207
      %v2209 = vrcp.pop %v2206
      %v2210 = vmul.f32 1.0, %v2209
      %v2211 = vmul.f32 %v2208, 1.0614054
      %v2212 = vmul.f32 %v2210, 1.0614054
      %v2213 = vadd.f32 %v2211, -1.4531521
      %v2214 = vadd.f32 %v2212, -1.4531521
      %v2215 = vmul.f32 %v2213, %v2208
      %v2216 = vmul.f32 %v2214, %v2210
      %v2217 = vadd.f32 %v2215, 1.4214138
      %v2218 = vadd.f32 %v2216, 1.4214138
      %v2219 = vmul.f32 %v2217, %v2208
      %v2220 = vmul.f32 %v2218, %v2210
      %v2221 = vadd.f32 %v2219, -0.28449672
      %v2222 = vadd.f32 %v2220, -0.28449672
      %v2223 = vmul.f32 %v2221, %v2208
      %v2224 = vmul.f32 %v2222, %v2210
      %v2225 = vadd.f32 %v2223, 0.2548296
      %v2226 = vadd.f32 %v2224, 0.2548296
      %v2227 = vmul.f32 %v2225, %v2208
      %v2228 = vmul.f32 %v2226, %v2210
      %v2229 = vsub.f32 0.0, %v2201
      %v2230 = vsub.f32 0.0, %v2202
      %v2231 = vmul.f32 %v2229, %v2201
      %v2232 = vmul.f32 %v2230, %v2202
      %v2233 = vmul.f32 %v2231, 1.442695
      %v2234 = vpow.pop %v2233
      %v2235 = vmul.f32 %v2232, 1.442695
      %v2236 = vpow.pop %v2235
      %v2237 = vmul.f32 %v2227, %v2234
      %v2238 = vmul.f32 %v2228, %v2236
      %v2239 = vsub.f32 1.0, %v2237
      %v2240 = vsub.f32 1.0, %v2238
      %vm2241 = vcmp.ge.f32.partialorder %v2199, 0.0
      %vm2242 = vcmp.ge.f32.partialorder %v2200, 0.0
      %v2243 = vsub.f32 0.0, %v2239
      %v2244 = vsub.f32 0.0, %v2240
      %v2245 = vsel %vm2241, %v2239, %v2243
      %v2246 = vsel %vm2242, %v2240, %v2244
      %v2247 = vadd.f32 %v2245, 1.0
      %v2248 = vadd.f32 %v2246, 1.0
      %v2249 = vmul.f32 %v2197, %v2247
      %v2250 = vmul.f32 %v2198, %v2248
      %2251 = vst [vmem:[#allocation3 + $0x80] sm:$0xff] %v2249
      %2252 = vst [vmem:[#allocation3 + $0x88] sm:$0xff] %v2250
      %v2253 = vld [vmem:[%s724] sm:$0xff]
      %v2254 = vld [vmem:[%s724 + $0x8] sm:$0xff]
      %v2255 = vld [vmem:[%s724 + $0x10] sm:$0xff]
      %v2256 = vmul.f32 %v2253, %v251
      %v2257 = vmul.f32 %v2254, %v251
      %v2258 = vadd.f32 %v287, %v2256
      %v2259 = vadd.f32 %v287, %v2257
      %v2260 = vmul.f32 %v2253, %v255
      %v2261 = vmul.f32 %v2254, %v255
      %v2262 = vmul.f32 %v2255, %v255
      %v2266 = vrot.slane %v2260, 1
      %v2267 = vrot.slane %v2261, 1
      %v2268 = vsel %vm761, %v2266, %v2267
      %v2269 = vrot.slane %v2262, 1
      %v2270 = vsel %vm761, %v2267, %v2269
      %v2273 = vadd.f32 %v2258, %v2268
      %v2274 = vadd.f32 %v2259, %v2270
      %v2275 = vmul.f32 %v2253, %v259
      %v2276 = vmul.f32 %v2254, %v259
      %v2277 = vmul.f32 %v2255, %v259
      %v2281 = vrot.slane %v2275, 2
      %v2282 = vrot.slane %v2276, 2
      %v2283 = vsel %vm777, %v2281, %v2282
      %v2284 = vrot.slane %v2277, 2
      %v2285 = vsel %vm777, %v2282, %v2284
      %v2288 = vadd.f32 %v2273, %v2283
      %v2289 = vadd.f32 %v2274, %v2285
      %v2290 = vld [vmem:[%s727] sm:$0xff]
      %v2291 = vld [vmem:[%s727 + $0x8] sm:$0xff]
      %v2292 = vld [vmem:[%s727 + $0x10] sm:$0xff]
      %v2293 = vmul.f32 %v2290, %v263
      %v2294 = vmul.f32 %v2291, %v263
      %v2295 = vadd.f32 %v2288, %v2293
      %v2296 = vadd.f32 %v2289, %v2294
      %v2297 = vmul.f32 %v2290, %v267
      %v2298 = vmul.f32 %v2291, %v267
      %v2299 = vmul.f32 %v2292, %v267
      %v2303 = vrot.slane %v2297, 1
      %v2304 = vrot.slane %v2298, 1
      %v2305 = vsel %vm761, %v2303, %v2304
      %v2306 = vrot.slane %v2299, 1
      %v2307 = vsel %vm761, %v2304, %v2306
      %v2310 = vadd.f32 %v2295, %v2305
      %v2311 = vadd.f32 %v2296, %v2307
      %v2312 = vmul.f32 %v2290, %v271
      %v2313 = vmul.f32 %v2291, %v271
      %v2314 = vmul.f32 %v2292, %v271
      %v2318 = vrot.slane %v2312, 2
      %v2319 = vrot.slane %v2313, 2
      %v2320 = vsel %vm777, %v2318, %v2319
      %v2321 = vrot.slane %v2314, 2
      %v2322 = vsel %vm777, %v2319, %v2321
      %v2325 = vadd.f32 %v2310, %v2320
      %v2326 = vadd.f32 %v2311, %v2322
      %v2327 = vld [vmem:[%s730] sm:$0xff]
      %v2328 = vld [vmem:[%s730 + $0x8] sm:$0xff]
      %v2329 = vld [vmem:[%s730 + $0x10] sm:$0xff]
      %v2330 = vmul.f32 %v2327, %v275
      %v2331 = vmul.f32 %v2328, %v275
      %v2332 = vadd.f32 %v2325, %v2330
      %v2333 = vadd.f32 %v2326, %v2331
      %v2334 = vmul.f32 %v2327, %v279
      %v2335 = vmul.f32 %v2328, %v279
      %v2336 = vmul.f32 %v2329, %v279
      %v2340 = vrot.slane %v2334, 1
      %v2341 = vrot.slane %v2335, 1
      %v2342 = vsel %vm761, %v2340, %v2341
      %v2343 = vrot.slane %v2336, 1
      %v2344 = vsel %vm761, %v2341, %v2343
      %v2347 = vadd.f32 %v2332, %v2342
      %v2348 = vadd.f32 %v2333, %v2344
      %v2349 = vmul.f32 %v2327, %v283
      %v2350 = vmul.f32 %v2328, %v283
      %v2351 = vmul.f32 %v2329, %v283
      %v2355 = vrot.slane %v2349, 2
      %v2356 = vrot.slane %v2350, 2
      %v2357 = vsel %vm777, %v2355, %v2356
      %v2358 = vrot.slane %v2351, 2
      %v2359 = vsel %vm777, %v2356, %v2358
      %v2362 = vadd.f32 %v2347, %v2357
      %v2363 = vadd.f32 %v2348, %v2359
      %v2364 = vmul.f32 %v2362, 0.5
      %v2365 = vmul.f32 %v2363, 0.5
      %v2366 = vmul.f32 %v2362, 0.70710677
      %v2367 = vmul.f32 %v2363, 0.70710677
      %v2368 = vand.u32 2147483647, %v2366
      %v2369 = vand.u32 2147483647, %v2367
      %v2370 = vmul.f32 %v2368, 0.3275911
      %v2371 = vmul.f32 %v2369, 0.3275911
      %v2372 = vadd.f32 %v2370, 1.0
      %v2373 = vadd.f32 %v2371, 1.0
      %v2374 = vrcp.pop %v2372
      %v2375 = vmul.f32 1.0, %v2374
      %v2376 = vrcp.pop %v2373
      %v2377 = vmul.f32 1.0, %v2376
      %v2378 = vmul.f32 %v2375, 1.0614054
      %v2379 = vmul.f32 %v2377, 1.0614054
      %v2380 = vadd.f32 %v2378, -1.4531521
      %v2381 = vadd.f32 %v2379, -1.4531521
      %v2382 = vmul.f32 %v2380, %v2375
      %v2383 = vmul.f32 %v2381, %v2377
      %v2384 = vadd.f32 %v2382, 1.4214138
      %v2385 = vadd.f32 %v2383, 1.4214138
      %v2386 = vmul.f32 %v2384, %v2375
      %v2387 = vmul.f32 %v2385, %v2377
      %v2388 = vadd.f32 %v2386, -0.28449672
      %v2389 = vadd.f32 %v2387, -0.28449672
      %v2390 = vmul.f32 %v2388, %v2375
      %v2391 = vmul.f32 %v2389, %v2377
      %v2392 = vadd.f32 %v2390, 0.2548296
      %v2393 = vadd.f32 %v2391, 0.2548296
      %v2394 = vmul.f32 %v2392, %v2375
      %v2395 = vmul.f32 %v2393, %v2377
      %v2396 = vsub.f32 0.0, %v2368
      %v2397 = vsub.f32 0.0, %v2369
      %v2398 = vmul.f32 %v2396, %v2368
      %v2399 = vmul.f32 %v2397, %v2369
      %v2400 = vmul.f32 %v2398, 1.442695
      %v2401 = vpow.pop %v2400
      %v2402 = vmul.f32 %v2399, 1.442695
      %v2403 = vpow.pop %v2402
      %v2404 = vmul.f32 %v2394, %v2401
      %v2405 = vmul.f32 %v2395, %v2403
      %v2406 = vsub.f32 1.0, %v2404
      %v2407 = vsub.f32 1.0, %v2405
      %vm2408 = vcmp.ge.f32.partialorder %v2366, 0.0
      %vm2409 = vcmp.ge.f32.partialorder %v2367, 0.0
      %v2410 = vsub.f32 0.0, %v2406
      %v2411 = vsub.f32 0.0, %v2407
      %v2412 = vsel %vm2408, %v2406, %v2410
      %v2413 = vsel %vm2409, %v2407, %v2411
      %v2414 = vadd.f32 %v2412, 1.0
      %v2415 = vadd.f32 %v2413, 1.0
      %v2416 = vmul.f32 %v2364, %v2414
      %v2417 = vmul.f32 %v2365, %v2415
      %2418 = vst [vmem:[#allocation3 + $0x90] sm:$0xff] %v2416
      %2419 = vst [vmem:[#allocation3 + $0x98] sm:$0xff] %v2417
      %v2420 = vld [vmem:[%s727] sm:$0xff]
      %v2421 = vld [vmem:[%s727 + $0x8] sm:$0xff]
      %v2422 = vld [vmem:[%s727 + $0x10] sm:$0xff]
      %v2423 = vmul.f32 %v2420, %v251
      %v2424 = vmul.f32 %v2421, %v251
      %v2425 = vadd.f32 %v287, %v2423
      %v2426 = vadd.f32 %v287, %v2424
      %v2427 = vmul.f32 %v2420, %v255
      %v2428 = vmul.f32 %v2421, %v255
      %v2429 = vmul.f32 %v2422, %v255
      %v2433 = vrot.slane %v2427, 1
      %v2434 = vrot.slane %v2428, 1
      %v2435 = vsel %vm761, %v2433, %v2434
      %v2436 = vrot.slane %v2429, 1
      %v2437 = vsel %vm761, %v2434, %v2436
      %v2440 = vadd.f32 %v2425, %v2435
      %v2441 = vadd.f32 %v2426, %v2437
      %v2442 = vmul.f32 %v2420, %v259
      %v2443 = vmul.f32 %v2421, %v259
      %v2444 = vmul.f32 %v2422, %v259
      %v2448 = vrot.slane %v2442, 2
      %v2449 = vrot.slane %v2443, 2
      %v2450 = vsel %vm777, %v2448, %v2449
      %v2451 = vrot.slane %v2444, 2
      %v2452 = vsel %vm777, %v2449, %v2451
      %v2455 = vadd.f32 %v2440, %v2450
      %v2456 = vadd.f32 %v2441, %v2452
      %v2457 = vld [vmem:[%s730] sm:$0xff]
      %v2458 = vld [vmem:[%s730 + $0x8] sm:$0xff]
      %v2459 = vld [vmem:[%s730 + $0x10] sm:$0xff]
      %v2460 = vmul.f32 %v2457, %v263
      %v2461 = vmul.f32 %v2458, %v263
      %v2462 = vadd.f32 %v2455, %v2460
      %v2463 = vadd.f32 %v2456, %v2461
      %v2464 = vmul.f32 %v2457, %v267
      %v2465 = vmul.f32 %v2458, %v267
      %v2466 = vmul.f32 %v2459, %v267
      %v2470 = vrot.slane %v2464, 1
      %v2471 = vrot.slane %v2465, 1
      %v2472 = vsel %vm761, %v2470, %v2471
      %v2473 = vrot.slane %v2466, 1
      %v2474 = vsel %vm761, %v2471, %v2473
      %v2477 = vadd.f32 %v2462, %v2472
      %v2478 = vadd.f32 %v2463, %v2474
      %v2479 = vmul.f32 %v2457, %v271
      %v2480 = vmul.f32 %v2458, %v271
      %v2481 = vmul.f32 %v2459, %v271
      %v2485 = vrot.slane %v2479, 2
      %v2486 = vrot.slane %v2480, 2
      %v2487 = vsel %vm777, %v2485, %v2486
      %v2488 = vrot.slane %v2481, 2
      %v2489 = vsel %vm777, %v2486, %v2488
      %v2492 = vadd.f32 %v2477, %v2487
      %v2493 = vadd.f32 %v2478, %v2489
      %v2494 = vld [vmem:[%s733] sm:$0xff]
      %v2495 = vld [vmem:[%s733 + $0x8] sm:$0xff]
      %v2496 = vld [vmem:[%s733 + $0x10] sm:$0xff]
      %v2497 = vmul.f32 %v2494, %v275
      %v2498 = vmul.f32 %v2495, %v275
      %v2499 = vadd.f32 %v2492, %v2497
      %v2500 = vadd.f32 %v2493, %v2498
      %v2501 = vmul.f32 %v2494, %v279
      %v2502 = vmul.f32 %v2495, %v279
      %v2503 = vmul.f32 %v2496, %v279
      %v2507 = vrot.slane %v2501, 1
      %v2508 = vrot.slane %v2502, 1
      %v2509 = vsel %vm761, %v2507, %v2508
      %v2510 = vrot.slane %v2503, 1
      %v2511 = vsel %vm761, %v2508, %v2510
      %v2514 = vadd.f32 %v2499, %v2509
      %v2515 = vadd.f32 %v2500, %v2511
      %v2516 = vmul.f32 %v2494, %v283
      %v2517 = vmul.f32 %v2495, %v283
      %v2518 = vmul.f32 %v2496, %v283
      %v2522 = vrot.slane %v2516, 2
      %v2523 = vrot.slane %v2517, 2
      %v2524 = vsel %vm777, %v2522, %v2523
      %v2525 = vrot.slane %v2518, 2
      %v2526 = vsel %vm777, %v2523, %v2525
      %v2529 = vadd.f32 %v2514, %v2524
      %v2530 = vadd.f32 %v2515, %v2526
      %v2531 = vmul.f32 %v2529, 0.5
      %v2532 = vmul.f32 %v2530, 0.5
      %v2533 = vmul.f32 %v2529, 0.70710677
      %v2534 = vmul.f32 %v2530, 0.70710677
      %v2535 = vand.u32 2147483647, %v2533
      %v2536 = vand.u32 2147483647, %v2534
      %v2537 = vmul.f32 %v2535, 0.3275911
      %v2538 = vmul.f32 %v2536, 0.3275911
      %v2539 = vadd.f32 %v2537, 1.0
      %v2540 = vadd.f32 %v2538, 1.0
      %v2541 = vrcp.pop %v2539
      %v2542 = vmul.f32 1.0, %v2541
      %v2543 = vrcp.pop %v2540
      %v2544 = vmul.f32 1.0, %v2543
      %v2545 = vmul.f32 %v2542, 1.0614054
      %v2546 = vmul.f32 %v2544, 1.0614054
      %v2547 = vadd.f32 %v2545, -1.4531521
      %v2548 = vadd.f32 %v2546, -1.4531521
      %v2549 = vmul.f32 %v2547, %v2542
      %v2550 = vmul.f32 %v2548, %v2544
      %v2551 = vadd.f32 %v2549, 1.4214138
      %v2552 = vadd.f32 %v2550, 1.4214138
      %v2553 = vmul.f32 %v2551, %v2542
      %v2554 = vmul.f32 %v2552, %v2544
      %v2555 = vadd.f32 %v2553, -0.28449672
      %v2556 = vadd.f32 %v2554, -0.28449672
      %v2557 = vmul.f32 %v2555, %v2542
      %v2558 = vmul.f32 %v2556, %v2544
      %v2559 = vadd.f32 %v2557, 0.2548296
      %v2560 = vadd.f32 %v2558, 0.2548296
      %v2561 = vmul.f32 %v2559, %v2542
      %v2562 = vmul.f32 %v2560, %v2544
      %v2563 = vsub.f32 0.0, %v2535
      %v2564 = vsub.f32 0.0, %v2536
      %v2565 = vmul.f32 %v2563, %v2535
      %v2566 = vmul.f32 %v2564, %v2536
      %v2567 = vmul.f32 %v2565, 1.442695
      %v2568 = vpow.pop %v2567
      %v2569 = vmul.f32 %v2566, 1.442695
      %v2570 = vpow.pop %v2569
      %v2571 = vmul.f32 %v2561, %v2568
      %v2572 = vmul.f32 %v2562, %v2570
      %v2573 = vsub.f32 1.0, %v2571
      %v2574 = vsub.f32 1.0, %v2572
      %vm2575 = vcmp.ge.f32.partialorder %v2533, 0.0
      %vm2576 = vcmp.ge.f32.partialorder %v2534, 0.0
      %v2577 = vsub.f32 0.0, %v2573
      %v2578 = vsub.f32 0.0, %v2574
      %v2579 = vsel %vm2575, %v2573, %v2577
      %v2580 = vsel %vm2576, %v2574, %v2578
      %v2581 = vadd.f32 %v2579, 1.0
      %v2582 = vadd.f32 %v2580, 1.0
      %v2583 = vmul.f32 %v2531, %v2581
      %v2584 = vmul.f32 %v2532, %v2582
      %2585 = vst [vmem:[#allocation3 + $0xa0] sm:$0xff] %v2583
      %2586 = vst [vmem:[#allocation3 + $0xa8] sm:$0xff] %v2584
      %v2587 = vld [vmem:[%s730] sm:$0xff]
      %v2588 = vld [vmem:[%s730 + $0x8] sm:$0xff]
      %v2589 = vld [vmem:[%s730 + $0x10] sm:$0xff]
      %v2590 = vmul.f32 %v2587, %v251
      %v2591 = vmul.f32 %v2588, %v251
      %v2592 = vadd.f32 %v287, %v2590
      %v2593 = vadd.f32 %v287, %v2591
      %v2594 = vmul.f32 %v2587, %v255
      %v2595 = vmul.f32 %v2588, %v255
      %v2596 = vmul.f32 %v2589, %v255
      %v2600 = vrot.slane %v2594, 1
      %v2601 = vrot.slane %v2595, 1
      %v2602 = vsel %vm761, %v2600, %v2601
      %v2603 = vrot.slane %v2596, 1
      %v2604 = vsel %vm761, %v2601, %v2603
      %v2607 = vadd.f32 %v2592, %v2602
      %v2608 = vadd.f32 %v2593, %v2604
      %v2609 = vmul.f32 %v2587, %v259
      %v2610 = vmul.f32 %v2588, %v259
      %v2611 = vmul.f32 %v2589, %v259
      %v2615 = vrot.slane %v2609, 2
      %v2616 = vrot.slane %v2610, 2
      %v2617 = vsel %vm777, %v2615, %v2616
      %v2618 = vrot.slane %v2611, 2
      %v2619 = vsel %vm777, %v2616, %v2618
      %v2622 = vadd.f32 %v2607, %v2617
      %v2623 = vadd.f32 %v2608, %v2619
      %v2624 = vld [vmem:[%s733] sm:$0xff]
      %v2625 = vld [vmem:[%s733 + $0x8] sm:$0xff]
      %v2626 = vld [vmem:[%s733 + $0x10] sm:$0xff]
      %v2627 = vmul.f32 %v2624, %v263
      %v2628 = vmul.f32 %v2625, %v263
      %v2629 = vadd.f32 %v2622, %v2627
      %v2630 = vadd.f32 %v2623, %v2628
      %v2631 = vmul.f32 %v2624, %v267
      %v2632 = vmul.f32 %v2625, %v267
      %v2633 = vmul.f32 %v2626, %v267
      %v2637 = vrot.slane %v2631, 1
      %v2638 = vrot.slane %v2632, 1
      %v2639 = vsel %vm761, %v2637, %v2638
      %v2640 = vrot.slane %v2633, 1
      %v2641 = vsel %vm761, %v2638, %v2640
      %v2644 = vadd.f32 %v2629, %v2639
      %v2645 = vadd.f32 %v2630, %v2641
      %v2646 = vmul.f32 %v2624, %v271
      %v2647 = vmul.f32 %v2625, %v271
      %v2648 = vmul.f32 %v2626, %v271
      %v2652 = vrot.slane %v2646, 2
      %v2653 = vrot.slane %v2647, 2
      %v2654 = vsel %vm777, %v2652, %v2653
      %v2655 = vrot.slane %v2648, 2
      %v2656 = vsel %vm777, %v2653, %v2655
      %v2659 = vadd.f32 %v2644, %v2654
      %v2660 = vadd.f32 %v2645, %v2656
      %v2661 = vld [vmem:[%s736] sm:$0xff]
      %v2662 = vld [vmem:[%s736 + $0x8] sm:$0xff]
      %v2663 = vld [vmem:[%s736 + $0x10] sm:$0xff]
      %v2664 = vmul.f32 %v2661, %v275
      %v2665 = vmul.f32 %v2662, %v275
      %v2666 = vadd.f32 %v2659, %v2664
      %v2667 = vadd.f32 %v2660, %v2665
      %v2668 = vmul.f32 %v2661, %v279
      %v2669 = vmul.f32 %v2662, %v279
      %v2670 = vmul.f32 %v2663, %v279
      %v2674 = vrot.slane %v2668, 1
      %v2675 = vrot.slane %v2669, 1
      %v2676 = vsel %vm761, %v2674, %v2675
      %v2677 = vrot.slane %v2670, 1
      %v2678 = vsel %vm761, %v2675, %v2677
      %v2681 = vadd.f32 %v2666, %v2676
      %v2682 = vadd.f32 %v2667, %v2678
      %v2683 = vmul.f32 %v2661, %v283
      %v2684 = vmul.f32 %v2662, %v283
      %v2685 = vmul.f32 %v2663, %v283
      %v2689 = vrot.slane %v2683, 2
      %v2690 = vrot.slane %v2684, 2
      %v2691 = vsel %vm777, %v2689, %v2690
      %v2692 = vrot.slane %v2685, 2
      %v2693 = vsel %vm777, %v2690, %v2692
      %v2696 = vadd.f32 %v2681, %v2691
      %v2697 = vadd.f32 %v2682, %v2693
      %v2698 = vmul.f32 %v2696, 0.5
      %v2699 = vmul.f32 %v2697, 0.5
      %v2700 = vmul.f32 %v2696, 0.70710677
      %v2701 = vmul.f32 %v2697, 0.70710677
      %v2702 = vand.u32 2147483647, %v2700
      %v2703 = vand.u32 2147483647, %v2701
      %v2704 = vmul.f32 %v2702, 0.3275911
      %v2705 = vmul.f32 %v2703, 0.3275911
      %v2706 = vadd.f32 %v2704, 1.0
      %v2707 = vadd.f32 %v2705, 1.0
      %v2708 = vrcp.pop %v2706
      %v2709 = vmul.f32 1.0, %v2708
      %v2710 = vrcp.pop %v2707
      %v2711 = vmul.f32 1.0, %v2710
      %v2712 = vmul.f32 %v2709, 1.0614054
      %v2713 = vmul.f32 %v2711, 1.0614054
      %v2714 = vadd.f32 %v2712, -1.4531521
      %v2715 = vadd.f32 %v2713, -1.4531521
      %v2716 = vmul.f32 %v2714, %v2709
      %v2717 = vmul.f32 %v2715, %v2711
      %v2718 = vadd.f32 %v2716, 1.4214138
      %v2719 = vadd.f32 %v2717, 1.4214138
      %v2720 = vmul.f32 %v2718, %v2709
      %v2721 = vmul.f32 %v2719, %v2711
      %v2722 = vadd.f32 %v2720, -0.28449672
      %v2723 = vadd.f32 %v2721, -0.28449672
      %v2724 = vmul.f32 %v2722, %v2709
      %v2725 = vmul.f32 %v2723, %v2711
      %v2726 = vadd.f32 %v2724, 0.2548296
      %v2727 = vadd.f32 %v2725, 0.2548296
      %v2728 = vmul.f32 %v2726, %v2709
      %v2729 = vmul.f32 %v2727, %v2711
      %v2730 = vsub.f32 0.0, %v2702
      %v2731 = vsub.f32 0.0, %v2703
      %v2732 = vmul.f32 %v2730, %v2702
      %v2733 = vmul.f32 %v2731, %v2703
      %v2734 = vmul.f32 %v2732, 1.442695
      %v2735 = vpow.pop %v2734
      %v2736 = vmul.f32 %v2733, 1.442695
      %v2737 = vpow.pop %v2736
      %v2738 = vmul.f32 %v2728, %v2735
      %v2739 = vmul.f32 %v2729, %v2737
      %v2740 = vsub.f32 1.0, %v2738
      %v2741 = vsub.f32 1.0, %v2739
      %vm2742 = vcmp.ge.f32.partialorder %v2700, 0.0
      %vm2743 = vcmp.ge.f32.partialorder %v2701, 0.0
      %v2744 = vsub.f32 0.0, %v2740
      %v2745 = vsub.f32 0.0, %v2741
      %v2746 = vsel %vm2742, %v2740, %v2744
      %v2747 = vsel %vm2743, %v2741, %v2745
      %v2748 = vadd.f32 %v2746, 1.0
      %v2749 = vadd.f32 %v2747, 1.0
      %v2750 = vmul.f32 %v2698, %v2748
      %v2751 = vmul.f32 %v2699, %v2749
      %2752 = vst [vmem:[#allocation3 + $0xb0] sm:$0xff] %v2750
      %2753 = vst [vmem:[#allocation3 + $0xb8] sm:$0xff] %v2751
      %v2754 = vld [vmem:[%s733] sm:$0xff]
      %v2755 = vld [vmem:[%s733 + $0x8] sm:$0xff]
      %v2756 = vld [vmem:[%s733 + $0x10] sm:$0xff]
      %v2757 = vmul.f32 %v2754, %v251
      %v2758 = vmul.f32 %v2755, %v251
      %v2759 = vadd.f32 %v287, %v2757
      %v2760 = vadd.f32 %v287, %v2758
      %v2761 = vmul.f32 %v2754, %v255
      %v2762 = vmul.f32 %v2755, %v255
      %v2763 = vmul.f32 %v2756, %v255
      %v2767 = vrot.slane %v2761, 1
      %v2768 = vrot.slane %v2762, 1
      %v2769 = vsel %vm761, %v2767, %v2768
      %v2770 = vrot.slane %v2763, 1
      %v2771 = vsel %vm761, %v2768, %v2770
      %v2774 = vadd.f32 %v2759, %v2769
      %v2775 = vadd.f32 %v2760, %v2771
      %v2776 = vmul.f32 %v2754, %v259
      %v2777 = vmul.f32 %v2755, %v259
      %v2778 = vmul.f32 %v2756, %v259
      %v2782 = vrot.slane %v2776, 2
      %v2783 = vrot.slane %v2777, 2
      %v2784 = vsel %vm777, %v2782, %v2783
      %v2785 = vrot.slane %v2778, 2
      %v2786 = vsel %vm777, %v2783, %v2785
      %v2789 = vadd.f32 %v2774, %v2784
      %v2790 = vadd.f32 %v2775, %v2786
      %v2791 = vld [vmem:[%s736] sm:$0xff]
      %v2792 = vld [vmem:[%s736 + $0x8] sm:$0xff]
      %v2793 = vld [vmem:[%s736 + $0x10] sm:$0xff]
      %v2794 = vmul.f32 %v2791, %v263
      %v2795 = vmul.f32 %v2792, %v263
      %v2796 = vadd.f32 %v2789, %v2794
      %v2797 = vadd.f32 %v2790, %v2795
      %v2798 = vmul.f32 %v2791, %v267
      %v2799 = vmul.f32 %v2792, %v267
      %v2800 = vmul.f32 %v2793, %v267
      %v2804 = vrot.slane %v2798, 1
      %v2805 = vrot.slane %v2799, 1
      %v2806 = vsel %vm761, %v2804, %v2805
      %v2807 = vrot.slane %v2800, 1
      %v2808 = vsel %vm761, %v2805, %v2807
      %v2811 = vadd.f32 %v2796, %v2806
      %v2812 = vadd.f32 %v2797, %v2808
      %v2813 = vmul.f32 %v2791, %v271
      %v2814 = vmul.f32 %v2792, %v271
      %v2815 = vmul.f32 %v2793, %v271
      %v2819 = vrot.slane %v2813, 2
      %v2820 = vrot.slane %v2814, 2
      %v2821 = vsel %vm777, %v2819, %v2820
      %v2822 = vrot.slane %v2815, 2
      %v2823 = vsel %vm777, %v2820, %v2822
      %v2826 = vadd.f32 %v2811, %v2821
      %v2827 = vadd.f32 %v2812, %v2823
      %v2828 = vld [vmem:[%s739] sm:$0xff]
      %v2829 = vld [vmem:[%s739 + $0x8] sm:$0xff]
      %v2830 = vld [vmem:[%s739 + $0x10] sm:$0xff]
      %v2831 = vmul.f32 %v2828, %v275
      %v2832 = vmul.f32 %v2829, %v275
      %v2833 = vadd.f32 %v2826, %v2831
      %v2834 = vadd.f32 %v2827, %v2832
      %v2835 = vmul.f32 %v2828, %v279
      %v2836 = vmul.f32 %v2829, %v279
      %v2837 = vmul.f32 %v2830, %v279
      %v2841 = vrot.slane %v2835, 1
      %v2842 = vrot.slane %v2836, 1
      %v2843 = vsel %vm761, %v2841, %v2842
      %v2844 = vrot.slane %v2837, 1
      %v2845 = vsel %vm761, %v2842, %v2844
      %v2848 = vadd.f32 %v2833, %v2843
      %v2849 = vadd.f32 %v2834, %v2845
      %v2850 = vmul.f32 %v2828, %v283
      %v2851 = vmul.f32 %v2829, %v283
      %v2852 = vmul.f32 %v2830, %v283
      %v2856 = vrot.slane %v2850, 2
      %v2857 = vrot.slane %v2851, 2
      %v2858 = vsel %vm777, %v2856, %v2857
      %v2859 = vrot.slane %v2852, 2
      %v2860 = vsel %vm777, %v2857, %v2859
      %v2863 = vadd.f32 %v2848, %v2858
      %v2864 = vadd.f32 %v2849, %v2860
      %v2865 = vmul.f32 %v2863, 0.5
      %v2866 = vmul.f32 %v2864, 0.5
      %v2867 = vmul.f32 %v2863, 0.70710677
      %v2868 = vmul.f32 %v2864, 0.70710677
      %v2869 = vand.u32 2147483647, %v2867
      %v2870 = vand.u32 2147483647, %v2868
      %v2871 = vmul.f32 %v2869, 0.3275911
      %v2872 = vmul.f32 %v2870, 0.3275911
      %v2873 = vadd.f32 %v2871, 1.0
      %v2874 = vadd.f32 %v2872, 1.0
      %v2875 = vrcp.pop %v2873
      %v2876 = vmul.f32 1.0, %v2875
      %v2877 = vrcp.pop %v2874
      %v2878 = vmul.f32 1.0, %v2877
      %v2879 = vmul.f32 %v2876, 1.0614054
      %v2880 = vmul.f32 %v2878, 1.0614054
      %v2881 = vadd.f32 %v2879, -1.4531521
      %v2882 = vadd.f32 %v2880, -1.4531521
      %v2883 = vmul.f32 %v2881, %v2876
      %v2884 = vmul.f32 %v2882, %v2878
      %v2885 = vadd.f32 %v2883, 1.4214138
      %v2886 = vadd.f32 %v2884, 1.4214138
      %v2887 = vmul.f32 %v2885, %v2876
      %v2888 = vmul.f32 %v2886, %v2878
      %v2889 = vadd.f32 %v2887, -0.28449672
      %v2890 = vadd.f32 %v2888, -0.28449672
      %v2891 = vmul.f32 %v2889, %v2876
      %v2892 = vmul.f32 %v2890, %v2878
      %v2893 = vadd.f32 %v2891, 0.2548296
      %v2894 = vadd.f32 %v2892, 0.2548296
      %v2895 = vmul.f32 %v2893, %v2876
      %v2896 = vmul.f32 %v2894, %v2878
      %v2897 = vsub.f32 0.0, %v2869
      %v2898 = vsub.f32 0.0, %v2870
      %v2899 = vmul.f32 %v2897, %v2869
      %v2900 = vmul.f32 %v2898, %v2870
      %v2901 = vmul.f32 %v2899, 1.442695
      %v2902 = vpow.pop %v2901
      %v2903 = vmul.f32 %v2900, 1.442695
      %v2904 = vpow.pop %v2903
      %v2905 = vmul.f32 %v2895, %v2902
      %v2906 = vmul.f32 %v2896, %v2904
      %v2907 = vsub.f32 1.0, %v2905
      %v2908 = vsub.f32 1.0, %v2906
      %vm2909 = vcmp.ge.f32.partialorder %v2867, 0.0
      %vm2910 = vcmp.ge.f32.partialorder %v2868, 0.0
      %v2911 = vsub.f32 0.0, %v2907
      %v2912 = vsub.f32 0.0, %v2908
      %v2913 = vsel %vm2909, %v2907, %v2911
      %v2914 = vsel %vm2910, %v2908, %v2912
      %v2915 = vadd.f32 %v2913, 1.0
      %v2916 = vadd.f32 %v2914, 1.0
      %v2917 = vmul.f32 %v2865, %v2915
      %v2918 = vmul.f32 %v2866, %v2916
      %2919 = vst [vmem:[#allocation3 + $0xc0] sm:$0xff] %v2917
      %2920 = vst [vmem:[#allocation3 + $0xc8] sm:$0xff] %v2918
      %v2921 = vld [vmem:[%s736] sm:$0xff]
      %v2922 = vld [vmem:[%s736 + $0x8] sm:$0xff]
      %v2923 = vld [vmem:[%s736 + $0x10] sm:$0xff]
      %v2924 = vmul.f32 %v2921, %v251
      %v2925 = vmul.f32 %v2922, %v251
      %v2926 = vadd.f32 %v287, %v2924
      %v2927 = vadd.f32 %v287, %v2925
      %v2928 = vmul.f32 %v2921, %v255
      %v2929 = vmul.f32 %v2922, %v255
      %v2930 = vmul.f32 %v2923, %v255
      %v2934 = vrot.slane %v2928, 1
      %v2935 = vrot.slane %v2929, 1
      %v2936 = vsel %vm761, %v2934, %v2935
      %v2937 = vrot.slane %v2930, 1
      %v2938 = vsel %vm761, %v2935, %v2937
      %v2941 = vadd.f32 %v2926, %v2936
      %v2942 = vadd.f32 %v2927, %v2938
      %v2943 = vmul.f32 %v2921, %v259
      %v2944 = vmul.f32 %v2922, %v259
      %v2945 = vmul.f32 %v2923, %v259
      %v2949 = vrot.slane %v2943, 2
      %v2950 = vrot.slane %v2944, 2
      %v2951 = vsel %vm777, %v2949, %v2950
      %v2952 = vrot.slane %v2945, 2
      %v2953 = vsel %vm777, %v2950, %v2952
      %v2956 = vadd.f32 %v2941, %v2951
      %v2957 = vadd.f32 %v2942, %v2953
      %v2958 = vld [vmem:[%s739] sm:$0xff]
      %v2959 = vld [vmem:[%s739 + $0x8] sm:$0xff]
      %v2960 = vld [vmem:[%s739 + $0x10] sm:$0xff]
      %v2961 = vmul.f32 %v2958, %v263
      %v2962 = vmul.f32 %v2959, %v263
      %v2963 = vadd.f32 %v2956, %v2961
      %v2964 = vadd.f32 %v2957, %v2962
      %v2965 = vmul.f32 %v2958, %v267
      %v2966 = vmul.f32 %v2959, %v267
      %v2967 = vmul.f32 %v2960, %v267
      %v2971 = vrot.slane %v2965, 1
      %v2972 = vrot.slane %v2966, 1
      %v2973 = vsel %vm761, %v2971, %v2972
      %v2974 = vrot.slane %v2967, 1
      %v2975 = vsel %vm761, %v2972, %v2974
      %v2978 = vadd.f32 %v2963, %v2973
      %v2979 = vadd.f32 %v2964, %v2975
      %v2980 = vmul.f32 %v2958, %v271
      %v2981 = vmul.f32 %v2959, %v271
      %v2982 = vmul.f32 %v2960, %v271
      %v2986 = vrot.slane %v2980, 2
      %v2987 = vrot.slane %v2981, 2
      %v2988 = vsel %vm777, %v2986, %v2987
      %v2989 = vrot.slane %v2982, 2
      %v2990 = vsel %vm777, %v2987, %v2989
      %v2993 = vadd.f32 %v2978, %v2988
      %v2994 = vadd.f32 %v2979, %v2990
      %v2995 = vld [vmem:[%s742] sm:$0xff]
      %v2996 = vld [vmem:[%s742 + $0x8] sm:$0xff]
      %v2997 = vld [vmem:[%s742 + $0x10] sm:$0xff]
      %v2998 = vmul.f32 %v2995, %v275
      %v2999 = vmul.f32 %v2996, %v275
      %v3000 = vadd.f32 %v2993, %v2998
      %v3001 = vadd.f32 %v2994, %v2999
      %v3002 = vmul.f32 %v2995, %v279
      %v3003 = vmul.f32 %v2996, %v279
      %v3004 = vmul.f32 %v2997, %v279
      %v3008 = vrot.slane %v3002, 1
      %v3009 = vrot.slane %v3003, 1
      %v3010 = vsel %vm761, %v3008, %v3009
      %v3011 = vrot.slane %v3004, 1
      %v3012 = vsel %vm761, %v3009, %v3011
      %v3015 = vadd.f32 %v3000, %v3010
      %v3016 = vadd.f32 %v3001, %v3012
      %v3017 = vmul.f32 %v2995, %v283
      %v3018 = vmul.f32 %v2996, %v283
      %v3019 = vmul.f32 %v2997, %v283
      %v3023 = vrot.slane %v3017, 2
      %v3024 = vrot.slane %v3018, 2
      %v3025 = vsel %vm777, %v3023, %v3024
      %v3026 = vrot.slane %v3019, 2
      %v3027 = vsel %vm777, %v3024, %v3026
      %v3030 = vadd.f32 %v3015, %v3025
      %v3031 = vadd.f32 %v3016, %v3027
      %v3032 = vmul.f32 %v3030, 0.5
      %v3033 = vmul.f32 %v3031, 0.5
      %v3034 = vmul.f32 %v3030, 0.70710677
      %v3035 = vmul.f32 %v3031, 0.70710677
      %v3036 = vand.u32 2147483647, %v3034
      %v3037 = vand.u32 2147483647, %v3035
      %v3038 = vmul.f32 %v3036, 0.3275911
      %v3039 = vmul.f32 %v3037, 0.3275911
      %v3040 = vadd.f32 %v3038, 1.0
      %v3041 = vadd.f32 %v3039, 1.0
      %v3042 = vrcp.pop %v3040
      %v3043 = vmul.f32 1.0, %v3042
      %v3044 = vrcp.pop %v3041
      %v3045 = vmul.f32 1.0, %v3044
      %v3046 = vmul.f32 %v3043, 1.0614054
      %v3047 = vmul.f32 %v3045, 1.0614054
      %v3048 = vadd.f32 %v3046, -1.4531521
      %v3049 = vadd.f32 %v3047, -1.4531521
      %v3050 = vmul.f32 %v3048, %v3043
      %v3051 = vmul.f32 %v3049, %v3045
      %v3052 = vadd.f32 %v3050, 1.4214138
      %v3053 = vadd.f32 %v3051, 1.4214138
      %v3054 = vmul.f32 %v3052, %v3043
      %v3055 = vmul.f32 %v3053, %v3045
      %v3056 = vadd.f32 %v3054, -0.28449672
      %v3057 = vadd.f32 %v3055, -0.28449672
      %v3058 = vmul.f32 %v3056, %v3043
      %v3059 = vmul.f32 %v3057, %v3045
      %v3060 = vadd.f32 %v3058, 0.2548296
      %v3061 = vadd.f32 %v3059, 0.2548296
      %v3062 = vmul.f32 %v3060, %v3043
      %v3063 = vmul.f32 %v3061, %v3045
      %v3064 = vsub.f32 0.0, %v3036
      %v3065 = vsub.f32 0.0, %v3037
      %v3066 = vmul.f32 %v3064, %v3036
      %v3067 = vmul.f32 %v3065, %v3037
      %v3068 = vmul.f32 %v3066, 1.442695
      %v3069 = vpow.pop %v3068
      %v3070 = vmul.f32 %v3067, 1.442695
      %v3071 = vpow.pop %v3070
      %v3072 = vmul.f32 %v3062, %v3069
      %v3073 = vmul.f32 %v3063, %v3071
      %v3074 = vsub.f32 1.0, %v3072
      %v3075 = vsub.f32 1.0, %v3073
      %vm3076 = vcmp.ge.f32.partialorder %v3034, 0.0
      %vm3077 = vcmp.ge.f32.partialorder %v3035, 0.0
      %v3078 = vsub.f32 0.0, %v3074
      %v3079 = vsub.f32 0.0, %v3075
      %v3080 = vsel %vm3076, %v3074, %v3078
      %v3081 = vsel %vm3077, %v3075, %v3079
      %v3082 = vadd.f32 %v3080, 1.0
      %v3083 = vadd.f32 %v3081, 1.0
      %v3084 = vmul.f32 %v3032, %v3082
      %v3085 = vmul.f32 %v3033, %v3083
      %3086 = vst [vmem:[#allocation3 + $0xd0] sm:$0xff] %v3084
      %3087 = vst [vmem:[#allocation3 + $0xd8] sm:$0xff] %v3085
      %v3088 = vld [vmem:[%s739] sm:$0xff]
      %v3089 = vld [vmem:[%s739 + $0x8] sm:$0xff]
      %v3090 = vld [vmem:[%s739 + $0x10] sm:$0xff]
      %v3091 = vmul.f32 %v3088, %v251
      %v3092 = vmul.f32 %v3089, %v251
      %v3093 = vadd.f32 %v287, %v3091
      %v3094 = vadd.f32 %v287, %v3092
      %v3095 = vmul.f32 %v3088, %v255
      %v3096 = vmul.f32 %v3089, %v255
      %v3097 = vmul.f32 %v3090, %v255
      %v3101 = vrot.slane %v3095, 1
      %v3102 = vrot.slane %v3096, 1
      %v3103 = vsel %vm761, %v3101, %v3102
      %v3104 = vrot.slane %v3097, 1
      %v3105 = vsel %vm761, %v3102, %v3104
      %v3108 = vadd.f32 %v3093, %v3103
      %v3109 = vadd.f32 %v3094, %v3105
      %v3110 = vmul.f32 %v3088, %v259
      %v3111 = vmul.f32 %v3089, %v259
      %v3112 = vmul.f32 %v3090, %v259
      %v3116 = vrot.slane %v3110, 2
      %v3117 = vrot.slane %v3111, 2
      %v3118 = vsel %vm777, %v3116, %v3117
      %v3119 = vrot.slane %v3112, 2
      %v3120 = vsel %vm777, %v3117, %v3119
      %v3123 = vadd.f32 %v3108, %v3118
      %v3124 = vadd.f32 %v3109, %v3120
      %v3125 = vld [vmem:[%s742] sm:$0xff]
      %v3126 = vld [vmem:[%s742 + $0x8] sm:$0xff]
      %v3127 = vld [vmem:[%s742 + $0x10] sm:$0xff]
      %v3128 = vmul.f32 %v3125, %v263
      %v3129 = vmul.f32 %v3126, %v263
      %v3130 = vadd.f32 %v3123, %v3128
      %v3131 = vadd.f32 %v3124, %v3129
      %v3132 = vmul.f32 %v3125, %v267
      %v3133 = vmul.f32 %v3126, %v267
      %v3134 = vmul.f32 %v3127, %v267
      %v3138 = vrot.slane %v3132, 1
      %v3139 = vrot.slane %v3133, 1
      %v3140 = vsel %vm761, %v3138, %v3139
      %v3141 = vrot.slane %v3134, 1
      %v3142 = vsel %vm761, %v3139, %v3141
      %v3145 = vadd.f32 %v3130, %v3140
      %v3146 = vadd.f32 %v3131, %v3142
      %v3147 = vmul.f32 %v3125, %v271
      %v3148 = vmul.f32 %v3126, %v271
      %v3149 = vmul.f32 %v3127, %v271
      %v3153 = vrot.slane %v3147, 2
      %v3154 = vrot.slane %v3148, 2
      %v3155 = vsel %vm777, %v3153, %v3154
      %v3156 = vrot.slane %v3149, 2
      %v3157 = vsel %vm777, %v3154, %v3156
      %v3160 = vadd.f32 %v3145, %v3155
      %v3161 = vadd.f32 %v3146, %v3157
      %v3162 = vld [vmem:[%s745] sm:$0xff]
      %v3163 = vld [vmem:[%s745 + $0x8] sm:$0xff]
      %v3164 = vld [vmem:[%s745 + $0x10] sm:$0xff]
      %v3165 = vmul.f32 %v3162, %v275
      %v3166 = vmul.f32 %v3163, %v275
      %v3167 = vadd.f32 %v3160, %v3165
      %v3168 = vadd.f32 %v3161, %v3166
      %v3169 = vmul.f32 %v3162, %v279
      %v3170 = vmul.f32 %v3163, %v279
      %v3171 = vmul.f32 %v3164, %v279
      %v3175 = vrot.slane %v3169, 1
      %v3176 = vrot.slane %v3170, 1
      %v3177 = vsel %vm761, %v3175, %v3176
      %v3178 = vrot.slane %v3171, 1
      %v3179 = vsel %vm761, %v3176, %v3178
      %v3182 = vadd.f32 %v3167, %v3177
      %v3183 = vadd.f32 %v3168, %v3179
      %v3184 = vmul.f32 %v3162, %v283
      %v3185 = vmul.f32 %v3163, %v283
      %v3186 = vmul.f32 %v3164, %v283
      %v3190 = vrot.slane %v3184, 2
      %v3191 = vrot.slane %v3185, 2
      %v3192 = vsel %vm777, %v3190, %v3191
      %v3193 = vrot.slane %v3186, 2
      %v3194 = vsel %vm777, %v3191, %v3193
      %v3197 = vadd.f32 %v3182, %v3192
      %v3198 = vadd.f32 %v3183, %v3194
      %v3199 = vmul.f32 %v3197, 0.5
      %v3200 = vmul.f32 %v3198, 0.5
      %v3201 = vmul.f32 %v3197, 0.70710677
      %v3202 = vmul.f32 %v3198, 0.70710677
      %v3203 = vand.u32 2147483647, %v3201
      %v3204 = vand.u32 2147483647, %v3202
      %v3205 = vmul.f32 %v3203, 0.3275911
      %v3206 = vmul.f32 %v3204, 0.3275911
      %v3207 = vadd.f32 %v3205, 1.0
      %v3208 = vadd.f32 %v3206, 1.0
      %v3209 = vrcp.pop %v3207
      %v3210 = vmul.f32 1.0, %v3209
      %v3211 = vrcp.pop %v3208
      %v3212 = vmul.f32 1.0, %v3211
      %v3213 = vmul.f32 %v3210, 1.0614054
      %v3214 = vmul.f32 %v3212, 1.0614054
      %v3215 = vadd.f32 %v3213, -1.4531521
      %v3216 = vadd.f32 %v3214, -1.4531521
      %v3217 = vmul.f32 %v3215, %v3210
      %v3218 = vmul.f32 %v3216, %v3212
      %v3219 = vadd.f32 %v3217, 1.4214138
      %v3220 = vadd.f32 %v3218, 1.4214138
      %v3221 = vmul.f32 %v3219, %v3210
      %v3222 = vmul.f32 %v3220, %v3212
      %v3223 = vadd.f32 %v3221, -0.28449672
      %v3224 = vadd.f32 %v3222, -0.28449672
      %v3225 = vmul.f32 %v3223, %v3210
      %v3226 = vmul.f32 %v3224, %v3212
      %v3227 = vadd.f32 %v3225, 0.2548296
      %v3228 = vadd.f32 %v3226, 0.2548296
      %v3229 = vmul.f32 %v3227, %v3210
      %v3230 = vmul.f32 %v3228, %v3212
      %v3231 = vsub.f32 0.0, %v3203
      %v3232 = vsub.f32 0.0, %v3204
      %v3233 = vmul.f32 %v3231, %v3203
      %v3234 = vmul.f32 %v3232, %v3204
      %v3235 = vmul.f32 %v3233, 1.442695
      %v3236 = vpow.pop %v3235
      %v3237 = vmul.f32 %v3234, 1.442695
      %v3238 = vpow.pop %v3237
      %v3239 = vmul.f32 %v3229, %v3236
      %v3240 = vmul.f32 %v3230, %v3238
      %v3241 = vsub.f32 1.0, %v3239
      %v3242 = vsub.f32 1.0, %v3240
      %vm3243 = vcmp.ge.f32.partialorder %v3201, 0.0
      %vm3244 = vcmp.ge.f32.partialorder %v3202, 0.0
      %v3245 = vsub.f32 0.0, %v3241
      %v3246 = vsub.f32 0.0, %v3242
      %v3247 = vsel %vm3243, %v3241, %v3245
      %v3248 = vsel %vm3244, %v3242, %v3246
      %v3249 = vadd.f32 %v3247, 1.0
      %v3250 = vadd.f32 %v3248, 1.0
      %v3251 = vmul.f32 %v3199, %v3249
      %v3252 = vmul.f32 %v3200, %v3250
      %3253 = vst [vmem:[#allocation3 + $0xe0] sm:$0xff] %v3251
      %3254 = vst [vmem:[#allocation3 + $0xe8] sm:$0xff] %v3252
      %v3255 = vld [vmem:[%s742] sm:$0xff]
      %v3256 = vld [vmem:[%s742 + $0x8] sm:$0xff]
      %v3257 = vld [vmem:[%s742 + $0x10] sm:$0xff]
      %v3258 = vmul.f32 %v3255, %v251
      %v3259 = vmul.f32 %v3256, %v251
      %v3260 = vadd.f32 %v287, %v3258
      %v3261 = vadd.f32 %v287, %v3259
      %v3262 = vmul.f32 %v3255, %v255
      %v3263 = vmul.f32 %v3256, %v255
      %v3264 = vmul.f32 %v3257, %v255
      %v3268 = vrot.slane %v3262, 1
      %v3269 = vrot.slane %v3263, 1
      %v3270 = vsel %vm761, %v3268, %v3269
      %v3271 = vrot.slane %v3264, 1
      %v3272 = vsel %vm761, %v3269, %v3271
      %v3275 = vadd.f32 %v3260, %v3270
      %v3276 = vadd.f32 %v3261, %v3272
      %v3277 = vmul.f32 %v3255, %v259
      %v3278 = vmul.f32 %v3256, %v259
      %v3279 = vmul.f32 %v3257, %v259
      %v3283 = vrot.slane %v3277, 2
      %v3284 = vrot.slane %v3278, 2
      %v3285 = vsel %vm777, %v3283, %v3284
      %v3286 = vrot.slane %v3279, 2
      %v3287 = vsel %vm777, %v3284, %v3286
      %v3290 = vadd.f32 %v3275, %v3285
      %v3291 = vadd.f32 %v3276, %v3287
      %v3292 = vld [vmem:[%s745] sm:$0xff]
      %v3293 = vld [vmem:[%s745 + $0x8] sm:$0xff]
      %v3294 = vld [vmem:[%s745 + $0x10] sm:$0xff]
      %v3295 = vmul.f32 %v3292, %v263
      %v3296 = vmul.f32 %v3293, %v263
      %v3297 = vadd.f32 %v3290, %v3295
      %v3298 = vadd.f32 %v3291, %v3296
      %v3299 = vmul.f32 %v3292, %v267
      %v3300 = vmul.f32 %v3293, %v267
      %v3301 = vmul.f32 %v3294, %v267
      %v3305 = vrot.slane %v3299, 1
      %v3306 = vrot.slane %v3300, 1
      %v3307 = vsel %vm761, %v3305, %v3306
      %v3308 = vrot.slane %v3301, 1
      %v3309 = vsel %vm761, %v3306, %v3308
      %v3312 = vadd.f32 %v3297, %v3307
      %v3313 = vadd.f32 %v3298, %v3309
      %v3314 = vmul.f32 %v3292, %v271
      %v3315 = vmul.f32 %v3293, %v271
      %v3316 = vmul.f32 %v3294, %v271
      %v3320 = vrot.slane %v3314, 2
      %v3321 = vrot.slane %v3315, 2
      %v3322 = vsel %vm777, %v3320, %v3321
      %v3323 = vrot.slane %v3316, 2
      %v3324 = vsel %vm777, %v3321, %v3323
      %v3327 = vadd.f32 %v3312, %v3322
      %v3328 = vadd.f32 %v3313, %v3324
      %s3329 = scalar_lea.vmem [#allocation2], 408
      %v3330 = vld [vmem:[%s3329] sm:$0xff]
      %v3331 = vld [vmem:[%s3329 + $0x8] sm:$0xff]
      %v3332 = vld [vmem:[%s3329 + $0x10] sm:$0xff]
      %v3333 = vmul.f32 %v3330, %v275
      %v3334 = vmul.f32 %v3331, %v275
      %v3335 = vadd.f32 %v3327, %v3333
      %v3336 = vadd.f32 %v3328, %v3334
      %v3337 = vmul.f32 %v3330, %v279
      %v3338 = vmul.f32 %v3331, %v279
      %v3339 = vmul.f32 %v3332, %v279
      %v3343 = vrot.slane %v3337, 1
      %v3344 = vrot.slane %v3338, 1
      %v3345 = vsel %vm761, %v3343, %v3344
      %v3346 = vrot.slane %v3339, 1
      %v3347 = vsel %vm761, %v3344, %v3346
      %v3350 = vadd.f32 %v3335, %v3345
      %v3351 = vadd.f32 %v3336, %v3347
      %v3352 = vmul.f32 %v3330, %v283
      %v3353 = vmul.f32 %v3331, %v283
      %v3354 = vmul.f32 %v3332, %v283
      %v3358 = vrot.slane %v3352, 2
      %v3359 = vrot.slane %v3353, 2
      %v3360 = vsel %vm777, %v3358, %v3359
      %v3361 = vrot.slane %v3354, 2
      %v3362 = vsel %vm777, %v3359, %v3361
      %v3365 = vadd.f32 %v3350, %v3360
      %v3366 = vadd.f32 %v3351, %v3362
      %v3367 = vmul.f32 %v3365, 0.5
      %v3368 = vmul.f32 %v3366, 0.5
      %v3369 = vmul.f32 %v3365, 0.70710677
      %v3370 = vmul.f32 %v3366, 0.70710677
      %v3371 = vand.u32 2147483647, %v3369
      %v3372 = vand.u32 2147483647, %v3370
      %v3373 = vmul.f32 %v3371, 0.3275911
      %v3374 = vmul.f32 %v3372, 0.3275911
      %v3375 = vadd.f32 %v3373, 1.0
      %v3376 = vadd.f32 %v3374, 1.0
      %v3377 = vrcp.pop %v3375
      %v3378 = vmul.f32 1.0, %v3377
      %v3379 = vrcp.pop %v3376
      %v3380 = vmul.f32 1.0, %v3379
      %v3381 = vmul.f32 %v3378, 1.0614054
      %v3382 = vmul.f32 %v3380, 1.0614054
      %v3383 = vadd.f32 %v3381, -1.4531521
      %v3384 = vadd.f32 %v3382, -1.4531521
      %v3385 = vmul.f32 %v3383, %v3378
      %v3386 = vmul.f32 %v3384, %v3380
      %v3387 = vadd.f32 %v3385, 1.4214138
      %v3388 = vadd.f32 %v3386, 1.4214138
      %v3389 = vmul.f32 %v3387, %v3378
      %v3390 = vmul.f32 %v3388, %v3380
      %v3391 = vadd.f32 %v3389, -0.28449672
      %v3392 = vadd.f32 %v3390, -0.28449672
      %v3393 = vmul.f32 %v3391, %v3378
      %v3394 = vmul.f32 %v3392, %v3380
      %v3395 = vadd.f32 %v3393, 0.2548296
      %v3396 = vadd.f32 %v3394, 0.2548296
      %v3397 = vmul.f32 %v3395, %v3378
      %v3398 = vmul.f32 %v3396, %v3380
      %v3399 = vsub.f32 0.0, %v3371
      %v3400 = vsub.f32 0.0, %v3372
      %v3401 = vmul.f32 %v3399, %v3371
      %v3402 = vmul.f32 %v3400, %v3372
      %v3403 = vmul.f32 %v3401, 1.442695
      %v3404 = vpow.pop %v3403
      %v3405 = vmul.f32 %v3402, 1.442695
      %v3406 = vpow.pop %v3405
      %v3407 = vmul.f32 %v3397, %v3404
      %v3408 = vmul.f32 %v3398, %v3406
      %v3409 = vsub.f32 1.0, %v3407
      %v3410 = vsub.f32 1.0, %v3408
      %vm3411 = vcmp.ge.f32.partialorder %v3369, 0.0
      %vm3412 = vcmp.ge.f32.partialorder %v3370, 0.0
      %v3413 = vsub.f32 0.0, %v3409
      %v3414 = vsub.f32 0.0, %v3410
      %v3415 = vsel %vm3411, %v3409, %v3413
      %v3416 = vsel %vm3412, %v3410, %v3414
      %v3417 = vadd.f32 %v3415, 1.0
      %v3418 = vadd.f32 %v3416, 1.0
      %v3419 = vmul.f32 %v3367, %v3417
      %v3420 = vmul.f32 %v3368, %v3418
      %3421 = vst [vmem:[#allocation3 + $0xf0] sm:$0xff] %v3419
      %3422 = vst [vmem:[#allocation3 + $0xf8] sm:$0xff] %v3420
      %v3423 = vld [vmem:[#allocation3] sm:$0xff]
      %v3424 = vld [vmem:[#allocation3 + $0x8] sm:$0xff]
      %v3425 = vld [vmem:[#allocation3 + $0x10] sm:$0xff]
      %v3426 = vld [vmem:[#allocation3 + $0x18] sm:$0xff]
      %v3427 = vld [vmem:[#allocation3 + $0x20] sm:$0xff]
      %v3428 = vld [vmem:[#allocation3 + $0x28] sm:$0xff]
      %v3429 = vld [vmem:[#allocation3 + $0x30] sm:$0xff]
      %v3430 = vld [vmem:[#allocation3 + $0x38] sm:$0xff]
      %v3431 = vld [vmem:[#allocation3 + $0x40] sm:$0xff]
      %v3432 = vld [vmem:[#allocation3 + $0x48] sm:$0xff]
      %v3433 = vld [vmem:[#allocation3 + $0x50] sm:$0xff]
      %v3434 = vld [vmem:[#allocation3 + $0x58] sm:$0xff]
      %v3435 = vld [vmem:[#allocation3 + $0x60] sm:$0xff]
      %v3436 = vld [vmem:[#allocation3 + $0x68] sm:$0xff]
      %v3437 = vld [vmem:[#allocation3 + $0x70] sm:$0xff]
      %v3438 = vld [vmem:[#allocation3 + $0x78] sm:$0xff]
      %v3439 = vld [vmem:[#allocation3 + $0x80] sm:$0xff]
      %v3440 = vld [vmem:[#allocation3 + $0x88] sm:$0xff]
      %v3441 = vld [vmem:[#allocation3 + $0x90] sm:$0xff]
      %v3442 = vld [vmem:[#allocation3 + $0x98] sm:$0xff]
      %v3443 = vld [vmem:[#allocation3 + $0xa0] sm:$0xff]
      %v3444 = vld [vmem:[#allocation3 + $0xa8] sm:$0xff]
      %v3445 = vld [vmem:[#allocation3 + $0xb0] sm:$0xff]
      %v3446 = vld [vmem:[#allocation3 + $0xb8] sm:$0xff]
      %v3447 = vld [vmem:[#allocation3 + $0xc0] sm:$0xff]
      %v3448 = vld [vmem:[#allocation3 + $0xc8] sm:$0xff]
      %v3449 = vld [vmem:[#allocation3 + $0xd0] sm:$0xff]
      %v3450 = vld [vmem:[#allocation3 + $0xd8] sm:$0xff]
      %v3451 = vld [vmem:[#allocation3 + $0xe0] sm:$0xff]
      %v3452 = vld [vmem:[#allocation3 + $0xe8] sm:$0xff]
      %v3453 = vld [vmem:[#allocation3 + $0xf0] sm:$0xff]
      %v3454 = vld [vmem:[#allocation3 + $0xf8] sm:$0xff]
      %v3456 = vlaneseq
      %v3457 = vshrl.u32 %v3456, 7
      %v3458 = vsub.s32 0, %v3457
      %v3459 = vrot.slane %v245, %v3458
      %3461 = vmatprep.subr.mxu0 0.0
      %3462 = vmatpush1.msra.mxu0 %v229
      %3463 = vmatprep.subr.mxu0 0.0
      %3464 = vmatpush1.msra.mxu0 %v230
      %3465 = vmatprep.subr.mxu0 0.0
      %3466 = vmatpush1.msra.mxu0 %v231
      %3467 = vmatprep.subr.mxu0 0.0
      %3468 = vmatpush1.msra.mxu0 %v232
      %3469 = vmatprep.subr.mxu0 0.0
      %3470 = vmatpush1.msra.mxu0 %v233
      %3471 = vmatprep.subr.mxu0 0.0
      %3472 = vmatpush1.msra.mxu0 %v234
      %3473 = vmatprep.subr.mxu0 0.0
      %3474 = vmatpush1.msra.mxu0 %v235
      %3475 = vmatprep.subr.mxu0 0.0
      %3476 = vmatpush1.msra.mxu0 %v236
      %3477 = vmatprep.subr.mxu0 0.0
      %3478 = vmatpush1.msra.mxu0 %v237
      %3479 = vmatprep.subr.mxu0 0.0
      %3480 = vmatpush1.msra.mxu0 %v238
      %3481 = vmatprep.subr.mxu0 0.0
      %3482 = vmatpush1.msra.mxu0 %v239
      %3483 = vmatprep.subr.mxu0 0.0
      %3484 = vmatpush1.msra.mxu0 %v240
      %3485 = vmatprep.subr.mxu0 0.0
      %3486 = vmatpush1.msra.mxu0 %v241
      %3487 = vmatprep.subr.mxu0 0.0
      %3488 = vmatpush1.msra.mxu0 %v242
      %3489 = vmatprep.subr.mxu0 0.0
      %3490 = vmatpush1.msra.mxu0 %v243
      %3491 = vmatprep.subr.mxu0 0.0
      %3492 = vmatpush1.msra.mxu0 %v244
      %3493 = vmatprep.subr.mxu0 0.0
      %3494 = vmatpush1.msra.mxu0 0.0
      %3495 = vmatprep.subr.mxu0 0.0
      %3496 = vmatpush1.msra.mxu0 0.0
      %3497 = vmatprep.subr.mxu0 0.0
      %3498 = vmatpush1.msra.mxu0 0.0
      %3499 = vmatprep.subr.mxu0 0.0
      %3500 = vmatpush1.msra.mxu0 0.0
      %3501 = vmatprep.subr.mxu0 0.0
      %3502 = vmatpush1.msra.mxu0 0.0
      %3503 = vmatprep.subr.mxu0 0.0
      %3504 = vmatpush1.msra.mxu0 0.0
      %3505 = vmatprep.subr.mxu0 0.0
      %3506 = vmatpush1.msra.mxu0 0.0
      %3507 = vmatprep.subr.mxu0 0.0
      %3508 = vmatpush1.msra.mxu0 0.0
      %3509 = vmatprep.subr.mxu0 0.0
      %3510 = vmatpush1.msra.mxu0 0.0
      %3511 = vmatprep.subr.mxu0 0.0
      %3512 = vmatpush1.msra.mxu0 0.0
      %3513 = vmatprep.subr.mxu0 0.0
      %3514 = vmatpush1.msra.mxu0 0.0
      %3515 = vmatprep.subr.mxu0 0.0
      %3516 = vmatpush1.msra.mxu0 0.0
      %3517 = vmatprep.subr.mxu0 0.0
      %3518 = vmatpush1.msra.mxu0 0.0
      %3519 = vmatprep.subr.mxu0 0.0
      %3520 = vmatpush1.msra.mxu0 0.0
      %3521 = vmatprep.subr.mxu0 0.0
      %3522 = vmatpush1.msra.mxu0 0.0
      %3523 = vmatprep.subr.mxu0 0.0
      %3524 = vmatpush1.msra.mxu0 0.0
      %3525 = vmatprep.mubr.f32.mxu0 0.0
      %3526 = vmatmul.mubr.f32.gmra.mrb[0].mxu0 %v3423
      %v3527 = vpop.f32.mrb[0].mxu0
      %v3528 = vadd.f32 %v3459, %v3527
      %v3529 = vpop.f32.mrb[0].mxu0
      %3530 = vmatprep.mubr.f32.mxu0 0.0
      %3531 = vmatmul.mubr.f32.gmra.mrb[0].mxu0 %v3424
      %v3532 = vpop.f32.mrb[0].mxu0
      %v3533 = vadd.f32 %v3459, %v3532
      %v3534 = vpop.f32.mrb[0].mxu0
      %3535 = vmatprep.mubr.f32.mxu0 0.0
      %3536 = vmatmul.mubr.f32.gmra.mrb[0].mxu0 %v3425
      %v3537 = vpop.f32.mrb[0].mxu0
      %v3538 = vadd.f32 %v3459, %v3537
      %v3539 = vpop.f32.mrb[0].mxu0
      %3540 = vmatprep.mubr.f32.mxu0 0.0
      %3541 = vmatmul.mubr.f32.gmra.mrb[0].mxu0 %v3426
      %v3542 = vpop.f32.mrb[0].mxu0
      %v3543 = vadd.f32 %v3459, %v3542
      %v3544 = vpop.f32.mrb[0].mxu0
      %3545 = vmatprep.mubr.f32.mxu0 0.0
      %3546 = vmatmul.mubr.f32.gmra.mrb[0].mxu0 %v3427
      %v3547 = vpop.f32.mrb[0].mxu0
      %v3548 = vadd.f32 %v3459, %v3547
      %v3549 = vpop.f32.mrb[0].mxu0
      %3550 = vmatprep.mubr.f32.mxu0 0.0
      %3551 = vmatmul.mubr.f32.gmra.mrb[0].mxu0 %v3428
      %v3552 = vpop.f32.mrb[0].mxu0
      %v3553 = vadd.f32 %v3459, %v3552
      %v3554 = vpop.f32.mrb[0].mxu0
      %3555 = vmatprep.mubr.f32.mxu0 0.0
      %3556 = vmatmul.mubr.f32.gmra.mrb[0].mxu0 %v3429
      %v3557 = vpop.f32.mrb[0].mxu0
      %v3558 = vadd.f32 %v3459, %v3557
      %v3559 = vpop.f32.mrb[0].mxu0
      %3560 = vmatprep.mubr.f32.mxu0 0.0
      %3561 = vmatmul.mubr.f32.gmra.mrb[0].mxu0 %v3430
      %v3562 = vpop.f32.mrb[0].mxu0
      %v3563 = vadd.f32 %v3459, %v3562
      %v3564 = vpop.f32.mrb[0].mxu0
      %3565 = vmatprep.mubr.f32.mxu0 0.0
      %3566 = vmatmul.mubr.f32.gmra.mrb[0].mxu0 %v3431
      %v3567 = vpop.f32.mrb[0].mxu0
      %v3568 = vadd.f32 %v3459, %v3567
      %v3569 = vpop.f32.mrb[0].mxu0
      %3570 = vmatprep.mubr.f32.mxu0 0.0
      %3571 = vmatmul.mubr.f32.gmra.mrb[0].mxu0 %v3432
      %v3572 = vpop.f32.mrb[0].mxu0
      %v3573 = vadd.f32 %v3459, %v3572
      %v3574 = vpop.f32.mrb[0].mxu0
      %3575 = vmatprep.mubr.f32.mxu0 0.0
      %3576 = vmatmul.mubr.f32.gmra.mrb[0].mxu0 %v3433
      %v3577 = vpop.f32.mrb[0].mxu0
      %v3578 = vadd.f32 %v3459, %v3577
      %v3579 = vpop.f32.mrb[0].mxu0
      %3580 = vmatprep.mubr.f32.mxu0 0.0
      %3581 = vmatmul.mubr.f32.gmra.mrb[0].mxu0 %v3434
      %v3582 = vpop.f32.mrb[0].mxu0
      %v3583 = vadd.f32 %v3459, %v3582
      %v3584 = vpop.f32.mrb[0].mxu0
      %3585 = vmatprep.mubr.f32.mxu0 0.0
      %3586 = vmatmul.mubr.f32.gmra.mrb[0].mxu0 %v3435
      %v3587 = vpop.f32.mrb[0].mxu0
      %v3588 = vadd.f32 %v3459, %v3587
      %v3589 = vpop.f32.mrb[0].mxu0
      %3590 = vmatprep.mubr.f32.mxu0 0.0
      %3591 = vmatmul.mubr.f32.gmra.mrb[0].mxu0 %v3436
      %v3592 = vpop.f32.mrb[0].mxu0
      %v3593 = vadd.f32 %v3459, %v3592
      %v3594 = vpop.f32.mrb[0].mxu0
      %3595 = vmatprep.mubr.f32.mxu0 0.0
      %3596 = vmatmul.mubr.f32.gmra.mrb[0].mxu0 %v3437
      %v3597 = vpop.f32.mrb[0].mxu0
      %v3598 = vadd.f32 %v3459, %v3597
      %v3599 = vpop.f32.mrb[0].mxu0
      %3600 = vmatprep.mubr.f32.mxu0 0.0
      %3601 = vmatmul.mubr.f32.gmra.mrb[0].mxu0 %v3438
      %v3602 = vpop.f32.mrb[0].mxu0
      %v3603 = vadd.f32 %v3459, %v3602
      %v3604 = vpop.f32.mrb[0].mxu0
      %3605 = vmatprep.mubr.f32.mxu0 0.0
      %3606 = vmatmul.mubr.f32.gmra.mrb[0].mxu0 %v3439
      %v3607 = vpop.f32.mrb[0].mxu0
      %v3608 = vadd.f32 %v3459, %v3607
      %v3609 = vpop.f32.mrb[0].mxu0
      %3610 = vmatprep.mubr.f32.mxu0 0.0
      %3611 = vmatmul.mubr.f32.gmra.mrb[0].mxu0 %v3440
      %v3612 = vpop.f32.mrb[0].mxu0
      %v3613 = vadd.f32 %v3459, %v3612
      %v3614 = vpop.f32.mrb[0].mxu0
      %3615 = vmatprep.mubr.f32.mxu0 0.0
      %3616 = vmatmul.mubr.f32.gmra.mrb[0].mxu0 %v3441
      %v3617 = vpop.f32.mrb[0].mxu0
      %v3618 = vadd.f32 %v3459, %v3617
      %v3619 = vpop.f32.mrb[0].mxu0
      %3620 = vmatprep.mubr.f32.mxu0 0.0
      %3621 = vmatmul.mubr.f32.gmra.mrb[0].mxu0 %v3442
      %v3622 = vpop.f32.mrb[0].mxu0
      %v3623 = vadd.f32 %v3459, %v3622
      %v3624 = vpop.f32.mrb[0].mxu0
      %3625 = vmatprep.mubr.f32.mxu0 0.0
      %3626 = vmatmul.mubr.f32.gmra.mrb[0].mxu0 %v3443
      %v3627 = vpop.f32.mrb[0].mxu0
      %v3628 = vadd.f32 %v3459, %v3627
      %v3629 = vpop.f32.mrb[0].mxu0
      %3630 = vmatprep.mubr.f32.mxu0 0.0
      %3631 = vmatmul.mubr.f32.gmra.mrb[0].mxu0 %v3444
      %v3632 = vpop.f32.mrb[0].mxu0
      %v3633 = vadd.f32 %v3459, %v3632
      %v3634 = vpop.f32.mrb[0].mxu0
      %3635 = vmatprep.mubr.f32.mxu0 0.0
      %3636 = vmatmul.mubr.f32.gmra.mrb[0].mxu0 %v3445
      %v3637 = vpop.f32.mrb[0].mxu0
      %v3638 = vadd.f32 %v3459, %v3637
      %v3639 = vpop.f32.mrb[0].mxu0
      %3640 = vmatprep.mubr.f32.mxu0 0.0
      %3641 = vmatmul.mubr.f32.gmra.mrb[0].mxu0 %v3446
      %v3642 = vpop.f32.mrb[0].mxu0
      %v3643 = vadd.f32 %v3459, %v3642
      %v3644 = vpop.f32.mrb[0].mxu0
      %3645 = vmatprep.mubr.f32.mxu0 0.0
      %3646 = vmatmul.mubr.f32.gmra.mrb[0].mxu0 %v3447
      %v3647 = vpop.f32.mrb[0].mxu0
      %v3648 = vadd.f32 %v3459, %v3647
      %v3649 = vpop.f32.mrb[0].mxu0
      %3650 = vmatprep.mubr.f32.mxu0 0.0
      %3651 = vmatmul.mubr.f32.gmra.mrb[0].mxu0 %v3448
      %v3652 = vpop.f32.mrb[0].mxu0
      %v3653 = vadd.f32 %v3459, %v3652
      %v3654 = vpop.f32.mrb[0].mxu0
      %3655 = vmatprep.mubr.f32.mxu0 0.0
      %3656 = vmatmul.mubr.f32.gmra.mrb[0].mxu0 %v3449
      %v3657 = vpop.f32.mrb[0].mxu0
      %v3658 = vadd.f32 %v3459, %v3657
      %v3659 = vpop.f32.mrb[0].mxu0
      %3660 = vmatprep.mubr.f32.mxu0 0.0
      %3661 = vmatmul.mubr.f32.gmra.mrb[0].mxu0 %v3450
      %v3662 = vpop.f32.mrb[0].mxu0
      %v3663 = vadd.f32 %v3459, %v3662
      %v3664 = vpop.f32.mrb[0].mxu0
      %3665 = vmatprep.mubr.f32.mxu0 0.0
      %3666 = vmatmul.mubr.f32.gmra.mrb[0].mxu0 %v3451
      %v3667 = vpop.f32.mrb[0].mxu0
      %v3668 = vadd.f32 %v3459, %v3667
      %v3669 = vpop.f32.mrb[0].mxu0
      %3670 = vmatprep.mubr.f32.mxu0 0.0
      %3671 = vmatmul.mubr.f32.gmra.mrb[0].mxu0 %v3452
      %v3672 = vpop.f32.mrb[0].mxu0
      %v3673 = vadd.f32 %v3459, %v3672
      %v3674 = vpop.f32.mrb[0].mxu0
      %3675 = vmatprep.mubr.f32.mxu0 0.0
      %3676 = vmatmul.mubr.f32.gmra.mrb[0].mxu0 %v3453
      %v3677 = vpop.f32.mrb[0].mxu0
      %v3678 = vadd.f32 %v3459, %v3677
      %v3679 = vpop.f32.mrb[0].mxu0
      %3680 = vmatprep.mubr.f32.mxu0 0.0
      %3681 = vmatmul.mubr.f32.gmra.mrb[0].mxu0 %v3454
      %v3682 = vpop.f32.mrb[0].mxu0
      %v3683 = vadd.f32 %v3459, %v3682
      %v3684 = vpop.f32.mrb[0].mxu0
      %3685 = vdwg.mxu0
      %3686 = vst.msk [vmem:[%s224] sm:$0xff] %vm378, %v3528
      %3687 = vst.msk [vmem:[%s224 + $0x8] sm:$0xff] %vm378, %v3533
      %3688 = vst.msk [vmem:[%s224 + $0x10] sm:$0xff] %vm378, %v3538
      %3689 = vst.msk [vmem:[%s224 + $0x18] sm:$0xff] %vm378, %v3543
      %3690 = vst.msk [vmem:[%s224 + $0x20] sm:$0xff] %vm378, %v3548
      %3691 = vst.msk [vmem:[%s224 + $0x28] sm:$0xff] %vm378, %v3553
      %3692 = vst.msk [vmem:[%s224 + $0x30] sm:$0xff] %vm378, %v3558
      %3693 = vst.msk [vmem:[%s224 + $0x38] sm:$0xff] %vm378, %v3563
      %3694 = vst.msk [vmem:[%s224 + $0x40] sm:$0xff] %vm378, %v3568
      %3695 = vst.msk [vmem:[%s224 + $0x48] sm:$0xff] %vm378, %v3573
      %3696 = vst.msk [vmem:[%s224 + $0x50] sm:$0xff] %vm378, %v3578
      %3697 = vst.msk [vmem:[%s224 + $0x58] sm:$0xff] %vm378, %v3583
      %3698 = vst.msk [vmem:[%s224 + $0x60] sm:$0xff] %vm378, %v3588
      %3699 = vst.msk [vmem:[%s224 + $0x68] sm:$0xff] %vm378, %v3593
      %3700 = vst.msk [vmem:[%s224 + $0x70] sm:$0xff] %vm378, %v3598
      %3701 = vst.msk [vmem:[%s224 + $0x78] sm:$0xff] %vm378, %v3603
      %3702 = vst.msk [vmem:[%s224 + $0x80] sm:$0xff] %vm378, %v3608
      %3703 = vst.msk [vmem:[%s224 + $0x88] sm:$0xff] %vm378, %v3613
      %3704 = vst.msk [vmem:[%s224 + $0x90] sm:$0xff] %vm378, %v3618
      %3705 = vst.msk [vmem:[%s224 + $0x98] sm:$0xff] %vm378, %v3623
      %3706 = vst.msk [vmem:[%s224 + $0xa0] sm:$0xff] %vm378, %v3628
      %3707 = vst.msk [vmem:[%s224 + $0xa8] sm:$0xff] %vm378, %v3633
      %3708 = vst.msk [vmem:[%s224 + $0xb0] sm:$0xff] %vm378, %v3638
      %3709 = vst.msk [vmem:[%s224 + $0xb8] sm:$0xff] %vm378, %v3643
      %3710 = vst.msk [vmem:[%s224 + $0xc0] sm:$0xff] %vm378, %v3648
      %3711 = vst.msk [vmem:[%s224 + $0xc8] sm:$0xff] %vm378, %v3653
      %3712 = vst.msk [vmem:[%s224 + $0xd0] sm:$0xff] %vm378, %v3658
      %3713 = vst.msk [vmem:[%s224 + $0xd8] sm:$0xff] %vm378, %v3663
      %3714 = vst.msk [vmem:[%s224 + $0xe0] sm:$0xff] %vm378, %v3668
      %3715 = vst.msk [vmem:[%s224 + $0xe8] sm:$0xff] %vm378, %v3673
      %3716 = vst.msk [vmem:[%s224 + $0xf0] sm:$0xff] %vm378, %v3678
      %3717 = vst.msk [vmem:[%s224 + $0xf8] sm:$0xff] %vm378, %v3683
      %p3718 = scmp.lt.s32.totalorder %s16, 1
      %s3719 = scalar_select %p3718, %s16, 1
      %s3720 = smul.addr %s3719, 32
      %s3721 = smul.addr %s3720, 8
      %s3722 = scalar_lea.vmem %s5, %s3721
      // Predicated region
      $region41: #{tpu_custom_call.1} parent=39 // pred_check
        %p3723 = pneg %p144
      $region42: #{tpu_custom_call.1} parent=39 // pred_check_branch
        %3725 = sbr.rel (%p3723) target = $region44
      $region43: #{tpu_custom_call.1} parent=39 // pred_region
        _
      $region44: #{tpu_custom_call.1} parent=39 // pred_fallthru
        _
    $region40: #{tpu_custom_call.1} parent=5 // pred_fallthru
      _
    %p3726 = scmp.le.s32.totalorder 2, %s11
    // Predicated region
    $region45: #{tpu_custom_call.1} parent=5 // pred_check
      %p3727 = pneg %p3726
    $region46: #{tpu_custom_call.1} parent=5 // pred_check_branch
      %3729 = sbr.rel (%p3727) target = $region48
    $region47: #{tpu_custom_call.1} parent=5 // pred_region
      %s3730 = ssub.s32 %s11, 2
      // Predicated region
      $region49: #{tpu_custom_call.1} parent=47 // pred_check
        %p3731 = pneg %p150
      $region50: #{tpu_custom_call.1} parent=47 // pred_check_branch
        %3733 = sbr.rel (%p3731) target = $region52
      $region51: #{tpu_custom_call.1} parent=47 // pred_region
        %p3734 = scmp.lt.s32.totalorder %s17, 1
        %s3735 = scalar_select %p3734, %s17, 1
        %s3736 = smul.addr %s3735, 32
        %s3737 = smul.addr %s3736, 8
        %s3738 = scalar_lea.vmem %s5, %s3737
      $region52: #{tpu_custom_call.1} parent=47 // pred_fallthru
        _
    $region48: #{tpu_custom_call.1} parent=5 // pred_fallthru
      _
  $region6: #{tpu_custom_call.1} parent=0 // loop_footer
    %s15 = sadd.s32 1, %s11
  $region7: #{tpu_custom_call.1} parent=0 // loop_footer_branch
    %10 = sbr.rel target = $region3
  $region8: #{tpu_custom_call.1} parent=0 // loop_exit
    _

</llo_original>
